<compile_context>
chip_gen: v5e
topology: v5e:2x2
jax: 0.10.0
libtpu: 0.0.40
codegen_flags: <defaults>
</compile_context>

<pallas_src>
import functools

import jax
import jax.numpy as jnp
from jax.experimental import pallas as pl
from jax.experimental.pallas import tpu as pltpu

C1 = 64      # width of the first VGG block
_PADW = 8    # sublane-aligned zero padding (left) of the h1 scratch window


# ---------------------------------------------------------------------------
# Fused Pallas kernel: conv1(+ReLU) -> conv2(+ReLU) -> MSE accumulation
# ---------------------------------------------------------------------------
def _fused_loss_kernel(p1y_ref, p1q_ref, w1_ref, b1_ref, w2_ref, b2_ref,
                       o_ref, h1y_scr, h1q_scr, *,
                       tile_h, W, use0, use1, use2, use3, inv_count):
    # p1*_ref : (1, H+2, W, 27) bf16  conv1 im2col patches, H padded by 1 halo row
    # w1_ref  : (27, 64)  bf16        w2_ref : (576, 64) bf16
    # b*_ref  : (1, 64)   f32
    # o_ref   : (1, 1, 1) f32         per-batch partial loss (accumulated over tiles)
    # h1*_scr : (tile_h+2, W+16, 64) f32  relu(conv1) row window, zero W padding
    T = tile_h
    rt = pl.program_id(1)
    nt = pl.num_programs(1)

    @pl.when(rt == 0)
    def _init():
        o_ref[...] = jnp.zeros_like(o_ref)

    row0 = pl.multiple_of(rt * T, T)

    # ---- conv1 (+bias) on a (T+2)-row window: one K=27 bf16 matmul per input ----
    def conv1_window(p_ref):
        patch = p_ref[0, pl.ds(row0, T + 2), :, :].reshape((T + 2) * W, 9 * 3)
        out = jnp.dot(patch, w1_ref[...], preferred_element_type=jnp.float32)
        return out + b1_ref[...]                          # ((T+2)*W, C1) f32

    c1y = conv1_window(p1y_ref)
    c1q = conv1_window(p1q_ref)

    lo, hi = W, (T + 1) * W        # this tile's own rows (exclude the halo rows)
    loss = jnp.float32(0.0)
    if use0:                        # vgg[0:1] = conv1
        d = c1y[lo:hi] - c1q[lo:hi]
        loss = loss + jnp.sum(d * d) * inv_count
    h1y = jnp.maximum(c1y, 0.0)
    h1q = jnp.maximum(c1q, 0.0)
    if use1:                        # vgg[0:2] = conv1 + ReLU
        d = h1y[lo:hi] - h1q[lo:hi]
        loss = loss + jnp.sum(d * d) * inv_count

    if use2 or use3:
        # Stash relu(conv1) windows into VMEM scratch; interior columns live at a
        # sublane-aligned offset so the partial store stays tile-aligned.
        zero_win = jnp.zeros(h1y_scr.shape, jnp.float32)
        h1y_scr[...] = zero_win
        h1q_scr[...] = zero_win
        h1y_scr[:, _PADW:_PADW + W, :] = h1y.reshape(T + 2, W, C1)
        h1q_scr[:, _PADW:_PADW + W, :] = h1q.reshape(T + 2, W, C1)

        # Halo rows outside the image are conv2's zero padding, not conv1 output.
        @pl.when(rt == 0)
        def _zero_top():
            z = jnp.zeros((1,) + h1y_scr.shape[1:], jnp.float32)
            h1y_scr[0:1, :, :] = z
            h1q_scr[0:1, :, :] = z

        @pl.when(rt == nt - 1)
        def _zero_bottom():
            z = jnp.zeros((1,) + h1y_scr.shape[1:], jnp.float32)
            h1y_scr[T + 1:T + 2, :, :] = z
            h1q_scr[T + 1:T + 2, :, :] = z

        # ---- conv2 (+bias): single K=576 bf16 im2col matmul per input ----------
        def conv2_window(scr):
            slabs = [
                scr[dh:dh + T, _PADW - 1 + dw:_PADW - 1 + dw + W, :]
                .astype(jnp.bfloat16)
                for dh in range(3) for dw in range(3)
            ]
            patch = jnp.concatenate(slabs, axis=-1).reshape(T * W, 9 * C1)
            out = jnp.dot(patch, w2_ref[...], preferred_element_type=jnp.float32)
            return out + b2_ref[...]                      # (T*W, C1) f32

        c2y = conv2_window(h1y_scr)
        c2q = conv2_window(h1q_scr)
        if use2:                    # vgg[0:3] = ... + conv2
            d = c2y - c2q
            loss = loss + jnp.sum(d * d) * inv_count
        if use3:                    # vgg[0:4] = ... + conv2 + ReLU
            d = jnp.maximum(c2y, 0.0) - jnp.maximum(c2q, 0.0)
            loss = loss + jnp.sum(d * d) * inv_count

    o_ref[...] = o_ref[...] + loss


# ---------------------------------------------------------------------------
# Wrapper: layout glue + pallas_call
# ---------------------------------------------------------------------------
def _im2col3x3(x):
    """(N, H, W, C) -> (N, H, W, 9C) 3x3 neighborhoods (zero padded), tap-major."""
    N, H, W, C = x.shape
    xp = jnp.pad(x, ((0, 0), (1, 1), (1, 1), (0, 0)))
    slabs = [xp[:, dh:dh + H, dw:dw + W, :] for dh in range(3) for dw in range(3)]
    return jnp.concatenate(slabs, axis=-1)


def _pick_tile_h(H, max_tile=32):
    for t in range(min(H, max_tile), 0, -1):
        if H % t == 0:
            return t
    return H


def fused_perceptual_loss(y_nhwc, yq_nhwc, w1, b1, w2, b2, layer_indexs, tile_h=None):
    N, H, W, Cin = y_nhwc.shape
    assert Cin == 3, "VGG16 expects 3-channel input"
    use = set(int(i) for i in layer_indexs)
    if any(i < 0 or i > 3 for i in use):
        # TODO(synk): deeper VGG blocks (maxpool + conv2_x ...) not implemented.
        raise NotImplementedError("only vgg16.features indices 0..3 supported")
    use0, use1, use2, use3 = (0 in use), (1 in use), (2 in use), (3 in use)

    T = tile_h or _pick_tile_h(H)
    assert H % T == 0

    # conv1 im2col patches for both inputs (bf16), +1 zero halo row top/bottom.
    def prep(x):
        p = _im2col3x3(x.astype(jnp.bfloat16))                    # (N, H, W, 27)
        return jnp.pad(p, ((0, 0), (1, 1), (0, 0), (0, 0)))        # (N, H+2, W, 27)

    p1y = prep(y_nhwc)
    p1q = prep(yq_nhwc)

    w1f = w1.reshape(9 * 3, C1).astype(jnp.bfloat16)
    w2f = w2.reshape(9 * C1, C1).astype(jnp.bfloat16)
    b1f = b1.reshape(1, C1).astype(jnp.float32)
    b2f = b2.reshape(1, C1).astype(jnp.float32)

    inv_count = 1.0 / float(N * H * W * C1)   # MSE mean over the whole batch tensor

    kern = functools.partial(
        _fused_loss_kernel, tile_h=T, W=W,
        use0=use0, use1=use1, use2=use2, use3=use3, inv_count=inv_count)

    partial = pl.pallas_call(
        kern,
        out_shape=jax.ShapeDtypeStruct((N, 1, 1), jnp.float32),
        grid=(N, H // T),
        in_specs=[
            pl.BlockSpec((1, H + 2, W, 9 * 3), lambda n, t: (n, 0, 0, 0)),
            pl.BlockSpec((1, H + 2, W, 9 * 3), lambda n, t: (n, 0, 0, 0)),
            pl.BlockSpec((9 * 3, C1), lambda n, t: (0, 0)),
            pl.BlockSpec((1, C1), lambda n, t: (0, 0)),
            pl.BlockSpec((9 * C1, C1), lambda n, t: (0, 0)),
            pl.BlockSpec((1, C1), lambda n, t: (0, 0)),
        ],
        out_specs=pl.BlockSpec((1, 1, 1), lambda n, t: (n, 0, 0)),
        scratch_shapes=[
            pltpu.VMEM((T + 2, W + 2 * _PADW, C1), jnp.float32),
            pltpu.VMEM((T + 2, W + 2 * _PADW, C1), jnp.float32),
        ],
        compiler_params=pltpu.CompilerParams(
            dimension_semantics=("parallel", "arbitrary"),
            vmem_limit_bytes=32 * 1024 * 1024,
        ),
    )(p1y, p1q, w1f, b1f, w2f, b2f)

    return jnp.sum(partial)


# ---------------------------------------------------------------------------
# PerceptualLoss wrapper (mirrors the PyTorch module's forward semantics)
# ---------------------------------------------------------------------------
class PerceptualLossPallas:
    """loss = sum_{index in layer_indexs} MSE(vgg[0:index+1](y), vgg[0:index+1](y_))

    loss_func is fixed to MSE (mean reduction) and fused into the kernel.
    Weights are deterministic synthetic tensors in HWIO layout (no checkpoint load).
    """

    def __init__(self, layer_indexs=(1, 3), seed=0, tile_h=None):
        self.layer_indexs = tuple(int(i) for i in layer_indexs)
        if any(i < 0 or i > 3 for i in self.layer_indexs):
            # TODO(synk): deeper VGG blocks (maxpool + conv2_x ...) not implemented.
            raise NotImplementedError("only vgg16.features indices 0..3 supported")
        self.tile_h = tile_h
        key = jax.random.PRNGKey(seed)
        k1, k2, k3, k4 = jax.random.split(key, 4)
        self.w1 = 0.05 * jax.random.normal(k1, (3, 3, 3, C1), jnp.float32)
        self.b1 = 0.01 * jax.random.normal(k2, (C1,), jnp.float32)
        self.w2 = 0.05 * jax.random.normal(k3, (3, 3, C1, C1), jnp.float32)
        self.b2 = 0.01 * jax.random.normal(k4, (C1,), jnp.float32)

    def __call__(self, y_nchw, y_hat_nchw):
        # Accepts NCHW (PyTorch convention); kernels run channels-last.
        y = jnp.transpose(y_nchw, (0, 2, 3, 1))
        y_ = jnp.transpose(y_hat_nchw, (0, 2, 3, 1))
        return fused_perceptual_loss(y, y_, self.w1, self.b1, self.w2, self.b2,
                                     self.layer_indexs, tile_h=self.tile_h)


if __name__ == "__main__":
    key = jax.random.PRNGKey(0)
    ky, ky_ = jax.random.split(key)
    # Small shapes consistent with the module: NCHW, 3-channel "images".
    y = jax.random.normal(ky, (2, 3, 16, 16), jnp.float32)
    y_ = jax.random.normal(ky_, (2, 3, 16, 16), jnp.float32)

    model = PerceptualLossPallas(layer_indexs=(1, 3))
    loss = model(y, y_)
    jax.block_until_ready(loss)
    print("KERNEL_OK")
</pallas_src>

<mosaic_0001>
module attributes {stable_mosaic.version = 11 : i64} {
  func.func @_fused_loss_kernel(%arg0: i32, %arg1: i32, %arg2: memref<1x18x16x27xbf16, #tpu.memory_space<vmem>>, %arg3: memref<1x18x16x27xbf16, #tpu.memory_space<vmem>>, %arg4: memref<27x64xbf16, #tpu.memory_space<vmem>>, %arg5: memref<1x64xf32, #tpu.memory_space<vmem>>, %arg6: memref<576x64xbf16, #tpu.memory_space<vmem>>, %arg7: memref<1x64xf32, #tpu.memory_space<vmem>>, %arg8: memref<1x1x1xf32, #tpu.memory_space<vmem>>, %arg9: memref<18x32x64xf32, #tpu.memory_space<vmem>>, %arg10: memref<18x32x64xf32, #tpu.memory_space<vmem>>) attributes {dimension_semantics = [#tpu.dimension_semantics<parallel>, #tpu.dimension_semantics<arbitrary>], iteration_bounds = array<i64: 2, 1>, scalar_prefetch = 0 : i64, scratch_operands = 2 : i64, tpu.core_type = #tpu.core_type<tc>, window_params = [{transform_indices = @transform_0, window_bounds = array<i64: 1, 18, 16, 27>}, {transform_indices = @transform_1, window_bounds = array<i64: 1, 18, 16, 27>}, {pipeline_mode = #tpu.pipeline_mode<synchronous>, transform_indices = @transform_2, window_bounds = array<i64: 27, 64>}, {pipeline_mode = #tpu.pipeline_mode<synchronous>, transform_indices = @transform_3, window_bounds = array<i64: 1, 64>}, {pipeline_mode = #tpu.pipeline_mode<synchronous>, transform_indices = @transform_4, window_bounds = array<i64: 576, 64>}, {pipeline_mode = #tpu.pipeline_mode<synchronous>, transform_indices = @transform_5, window_bounds = array<i64: 1, 64>}, {transform_indices = @transform_6, window_bounds = array<i64: 1, 1, 1>}]} {
    %c0_i32 = arith.constant 0 : i32
    %0 = arith.cmpi eq, %arg1, %c0_i32 : i32
    %1 = arith.extui %0 : i1 to i32
    %c0_i32_0 = arith.constant 0 : i32
    %2 = arith.cmpi ne, %1, %c0_i32_0 : i32
    scf.if %2 {
      %cst_106 = arith.constant 0.000000e+00 : f32
      %116 = vector.broadcast %cst_106 : f32 to vector<1x1x1xf32>
      %c0_107 = arith.constant 0 : index
      %c0_108 = arith.constant 0 : index
      %c0_109 = arith.constant 0 : index
      %117 = vector.load %arg8[%c0_107, %c0_108, %c0_109] : memref<1x1x1xf32, #tpu.memory_space<vmem>>, vector<1x1x1xf32>
      tpu.vector_store %arg8[%c0_107, %c0_108, %c0_109], %116 {strides = array<i32>} : memref<1x1x1xf32, #tpu.memory_space<vmem>>, vector<1x1x1xf32>,
    } else {
    }
    %c16_i32 = arith.constant 16 : i32
    %3 = arith.muli %arg1, %c16_i32 : i32
    %4 = tpu.assume_multiple %3, 16 : i32
    %c0 = arith.constant 0 : index
    %5 = arith.index_cast %4 : i32 to index
    %c0_1 = arith.constant 0 : index
    %c0_2 = arith.constant 0 : index
    %6 = vector.load %arg2[%c0, %5, %c0_1, %c0_2] : memref<1x18x16x27xbf16, #tpu.memory_space<vmem>>, vector<1x18x16x27xbf16>
    %7 = vector.shape_cast %6 : vector<1x18x16x27xbf16> to vector<18x16x27xbf16>
    %8 = vector.shape_cast %7 : vector<18x16x27xbf16> to vector<288x27xbf16>
    %c0_3 = arith.constant 0 : index
    %c0_4 = arith.constant 0 : index
    %9 = vector.load %arg4[%c0_3, %c0_4] : memref<27x64xbf16, #tpu.memory_space<vmem>>, vector<27x64xbf16>
    %cst = arith.constant dense<0.000000e+00> : vector<288x64xf32>
    %10 = tpu.matmul %8, %9, %cst {dimension_numbers = #tpu.dot_dimension_numbers<[1], [0], [0], [1], [0, 0, 1, 1], [], []>} : vector<288x27xbf16>, vector<27x64xbf16>, vector<288x64xf32> -> vector<288x64xf32>
    %c0_5 = arith.constant 0 : index
    %c0_6 = arith.constant 0 : index
    %11 = vector.load %arg5[%c0_5, %c0_6] : memref<1x64xf32, #tpu.memory_space<vmem>>, vector<1x64xf32>
    %12 = vector.broadcast %11 : vector<1x64xf32> to vector<288x64xf32>
    %13 = arith.addf %10, %12 : vector<288x64xf32>
    %c0_7 = arith.constant 0 : index
    %14 = arith.index_cast %4 : i32 to index
    %c0_8 = arith.constant 0 : index
    %c0_9 = arith.constant 0 : index
    %15 = vector.load %arg3[%c0_7, %14, %c0_8, %c0_9] : memref<1x18x16x27xbf16, #tpu.memory_space<vmem>>, vector<1x18x16x27xbf16>
    %16 = vector.shape_cast %15 : vector<1x18x16x27xbf16> to vector<18x16x27xbf16>
    %17 = vector.shape_cast %16 : vector<18x16x27xbf16> to vector<288x27xbf16>
    %c0_10 = arith.constant 0 : index
    %c0_11 = arith.constant 0 : index
    %18 = vector.load %arg4[%c0_10, %c0_11] : memref<27x64xbf16, #tpu.memory_space<vmem>>, vector<27x64xbf16>
    %cst_12 = arith.constant dense<0.000000e+00> : vector<288x64xf32>
    %19 = tpu.matmul %17, %18, %cst_12 {dimension_numbers = #tpu.dot_dimension_numbers<[1], [0], [0], [1], [0, 0, 1, 1], [], []>} : vector<288x27xbf16>, vector<27x64xbf16>, vector<288x64xf32> -> vector<288x64xf32>
    %c0_13 = arith.constant 0 : index
    %c0_14 = arith.constant 0 : index
    %20 = vector.load %arg5[%c0_13, %c0_14] : memref<1x64xf32, #tpu.memory_space<vmem>>, vector<1x64xf32>
    %21 = vector.broadcast %20 : vector<1x64xf32> to vector<288x64xf32>
    %22 = arith.addf %19, %21 : vector<288x64xf32>
    %cst_15 = arith.constant 0.000000e+00 : f32
    %23 = vector.broadcast %cst_15 : f32 to vector<288x64xf32>
    %24 = arith.maximumf %13, %23 : vector<288x64xf32>
    %cst_16 = arith.constant 0.000000e+00 : f32
    %25 = vector.broadcast %cst_16 : f32 to vector<288x64xf32>
    %26 = arith.maximumf %22, %25 : vector<288x64xf32>
    %27 = vector.extract_strided_slice %24 {offsets = [16, 0], sizes = [256, 64], strides = [1, 1]} : vector<288x64xf32> to vector<256x64xf32>
    %28 = vector.extract_strided_slice %26 {offsets = [16, 0], sizes = [256, 64], strides = [1, 1]} : vector<288x64xf32> to vector<256x64xf32>
    %29 = arith.subf %27, %28 : vector<256x64xf32>
    %30 = arith.mulf %29, %29 : vector<256x64xf32>
    %31 = vector.shape_cast %30 : vector<256x64xf32> to vector<1x256x64xf32>
    %cst_17 = arith.constant dense<0.000000e+00> : vector<1xf32>
    %32 = vector.multi_reduction <add>, %31, %cst_17 [1, 2] : vector<1x256x64xf32> to vector<1xf32>
    %33 = vector.shape_cast %32 : vector<1xf32> to vector<1x1x1xf32>
    %34 = vector.extract %33[0, 0, 0] : f32 from vector<1x1x1xf32>
    %cst_18 = arith.constant 3.05175781E-5 : f32
    %35 = arith.mulf %34, %cst_18 : f32
    %cst_19 = arith.constant 0.000000e+00 : f32
    %36 = arith.addf %cst_19, %35 : f32
    %cst_20 = arith.constant 0.000000e+00 : f32
    %37 = vector.broadcast %cst_20 : f32 to vector<18x32x64xf32>
    %c0_21 = arith.constant 0 : index
    %c0_22 = arith.constant 0 : index
    %c0_23 = arith.constant 0 : index
    %38 = vector.load %arg9[%c0_21, %c0_22, %c0_23] : memref<18x32x64xf32, #tpu.memory_space<vmem>>, vector<18x32x64xf32>
    tpu.vector_store %arg9[%c0_21, %c0_22, %c0_23], %37 {strides = array<i32>} : memref<18x32x64xf32, #tpu.memory_space<vmem>>, vector<18x32x64xf32>,
    %c0_24 = arith.constant 0 : index
    %c0_25 = arith.constant 0 : index
    %c0_26 = arith.constant 0 : index
    %39 = vector.load %arg10[%c0_24, %c0_25, %c0_26] : memref<18x32x64xf32, #tpu.memory_space<vmem>>, vector<18x32x64xf32>
    tpu.vector_store %arg10[%c0_24, %c0_25, %c0_26], %37 {strides = array<i32>} : memref<18x32x64xf32, #tpu.memory_space<vmem>>, vector<18x32x64xf32>,
    %40 = vector.shape_cast %24 : vector<288x64xf32> to vector<18x16x64xf32>
    %c0_27 = arith.constant 0 : index
    %c8 = arith.constant 8 : index
    %c0_28 = arith.constant 0 : index
    %41 = vector.load %arg9[%c0_27, %c8, %c0_28] : memref<18x32x64xf32, #tpu.memory_space<vmem>>, vector<18x16x64xf32>
    tpu.vector_store %arg9[%c0_27, %c8, %c0_28], %40 {strides = array<i32>} : memref<18x32x64xf32, #tpu.memory_space<vmem>>, vector<18x16x64xf32>,
    %42 = vector.shape_cast %26 : vector<288x64xf32> to vector<18x16x64xf32>
    %c0_29 = arith.constant 0 : index
    %c8_30 = arith.constant 8 : index
    %c0_31 = arith.constant 0 : index
    %43 = vector.load %arg10[%c0_29, %c8_30, %c0_31] : memref<18x32x64xf32, #tpu.memory_space<vmem>>, vector<18x16x64xf32>
    tpu.vector_store %arg10[%c0_29, %c8_30, %c0_31], %42 {strides = array<i32>} : memref<18x32x64xf32, #tpu.memory_space<vmem>>, vector<18x16x64xf32>,
    %c0_i32_32 = arith.constant 0 : i32
    %44 = arith.cmpi eq, %arg1, %c0_i32_32 : i32
    %45 = arith.extui %44 : i1 to i32
    %c0_i32_33 = arith.constant 0 : i32
    %46 = arith.cmpi ne, %45, %c0_i32_33 : i32
    scf.if %46 {
      %cst_106 = arith.constant 0.000000e+00 : f32
      %116 = vector.broadcast %cst_106 : f32 to vector<1x32x64xf32>
      %c0_107 = arith.constant 0 : index
      %c0_108 = arith.constant 0 : index
      %c0_109 = arith.constant 0 : index
      %117 = vector.load %arg9[%c0_107, %c0_108, %c0_109] : memref<18x32x64xf32, #tpu.memory_space<vmem>>, vector<1x32x64xf32>
      tpu.vector_store %arg9[%c0_107, %c0_108, %c0_109], %116 {strides = array<i32>} : memref<18x32x64xf32, #tpu.memory_space<vmem>>, vector<1x32x64xf32>,
      %c0_110 = arith.constant 0 : index
      %c0_111 = arith.constant 0 : index
      %c0_112 = arith.constant 0 : index
      %118 = vector.load %arg10[%c0_110, %c0_111, %c0_112] : memref<18x32x64xf32, #tpu.memory_space<vmem>>, vector<1x32x64xf32>
      tpu.vector_store %arg10[%c0_110, %c0_111, %c0_112], %116 {strides = array<i32>} : memref<18x32x64xf32, #tpu.memory_space<vmem>>, vector<1x32x64xf32>,
    } else {
    }
    %c0_i32_34 = arith.constant 0 : i32
    %47 = arith.cmpi eq, %arg1, %c0_i32_34 : i32
    %48 = arith.extui %47 : i1 to i32
    %c0_i32_35 = arith.constant 0 : i32
    %49 = arith.cmpi ne, %48, %c0_i32_35 : i32
    scf.if %49 {
      %cst_106 = arith.constant 0.000000e+00 : f32
      %116 = vector.broadcast %cst_106 : f32 to vector<1x32x64xf32>
      %c17 = arith.constant 17 : index
      %c0_107 = arith.constant 0 : index
      %c0_108 = arith.constant 0 : index
      %117 = vector.load %arg9[%c17, %c0_107, %c0_108] : memref<18x32x64xf32, #tpu.memory_space<vmem>>, vector<1x32x64xf32>
      tpu.vector_store %arg9[%c17, %c0_107, %c0_108], %116 {strides = array<i32>} : memref<18x32x64xf32, #tpu.memory_space<vmem>>, vector<1x32x64xf32>,
      %c17_109 = arith.constant 17 : index
      %c0_110 = arith.constant 0 : index
      %c0_111 = arith.constant 0 : index
      %118 = vector.load %arg10[%c17_109, %c0_110, %c0_111] : memref<18x32x64xf32, #tpu.memory_space<vmem>>, vector<1x32x64xf32>
      tpu.vector_store %arg10[%c17_109, %c0_110, %c0_111], %116 {strides = array<i32>} : memref<18x32x64xf32, #tpu.memory_space<vmem>>, vector<1x32x64xf32>,
    } else {
    }
    %c0_36 = arith.constant 0 : index
    %c7 = arith.constant 7 : index
    %c0_37 = arith.constant 0 : index
    %50 = vector.load %arg9[%c0_36, %c7, %c0_37] : memref<18x32x64xf32, #tpu.memory_space<vmem>>, vector<16x16x64xf32>
    %51 = arith.truncf %50 : vector<16x16x64xf32> to vector<16x16x64xbf16>
    %c0_38 = arith.constant 0 : index
    %c8_39 = arith.constant 8 : index
    %c0_40 = arith.constant 0 : index
    %52 = vector.load %arg9[%c0_38, %c8_39, %c0_40] : memref<18x32x64xf32, #tpu.memory_space<vmem>>, vector<16x16x64xf32>
    %53 = arith.truncf %52 : vector<16x16x64xf32> to vector<16x16x64xbf16>
    %c0_41 = arith.constant 0 : index
    %c9 = arith.constant 9 : index
    %c0_42 = arith.constant 0 : index
    %54 = vector.load %arg9[%c0_41, %c9, %c0_42] : memref<18x32x64xf32, #tpu.memory_space<vmem>>, vector<16x16x64xf32>
    %55 = arith.truncf %54 : vector<16x16x64xf32> to vector<16x16x64xbf16>
    %c1 = arith.constant 1 : index
    %c7_43 = arith.constant 7 : index
    %c0_44 = arith.constant 0 : index
    %56 = vector.load %arg9[%c1, %c7_43, %c0_44] : memref<18x32x64xf32, #tpu.memory_space<vmem>>, vector<16x16x64xf32>
    %57 = arith.truncf %56 : vector<16x16x64xf32> to vector<16x16x64xbf16>
    %c1_45 = arith.constant 1 : index
    %c8_46 = arith.constant 8 : index
    %c0_47 = arith.constant 0 : index
    %58 = vector.load %arg9[%c1_45, %c8_46, %c0_47] : memref<18x32x64xf32, #tpu.memory_space<vmem>>, vector<16x16x64xf32>
    %59 = arith.truncf %58 : vector<16x16x64xf32> to vector<16x16x64xbf16>
    %c1_48 = arith.constant 1 : index
    %c9_49 = arith.constant 9 : index
    %c0_50 = arith.constant 0 : index
    %60 = vector.load %arg9[%c1_48, %c9_49, %c0_50] : memref<18x32x64xf32, #tpu.memory_space<vmem>>, vector<16x16x64xf32>
    %61 = arith.truncf %60 : vector<16x16x64xf32> to vector<16x16x64xbf16>
    %c2 = arith.constant 2 : index
    %c7_51 = arith.constant 7 : index
    %c0_52 = arith.constant 0 : index
    %62 = vector.load %arg9[%c2, %c7_51, %c0_52] : memref<18x32x64xf32, #tpu.memory_space<vmem>>, vector<16x16x64xf32>
    %63 = arith.truncf %62 : vector<16x16x64xf32> to vector<16x16x64xbf16>
    %c2_53 = arith.constant 2 : index
    %c8_54 = arith.constant 8 : index
    %c0_55 = arith.constant 0 : index
    %64 = vector.load %arg9[%c2_53, %c8_54, %c0_55] : memref<18x32x64xf32, #tpu.memory_space<vmem>>, vector<16x16x64xf32>
    %65 = arith.truncf %64 : vector<16x16x64xf32> to vector<16x16x64xbf16>
    %c2_56 = arith.constant 2 : index
    %c9_57 = arith.constant 9 : index
    %c0_58 = arith.constant 0 : index
    %66 = vector.load %arg9[%c2_56, %c9_57, %c0_58] : memref<18x32x64xf32, #tpu.memory_space<vmem>>, vector<16x16x64xf32>
    %67 = arith.truncf %66 : vector<16x16x64xf32> to vector<16x16x64xbf16>
    %68 = tpu.concatenate %51, %53, %55, %57, %59, %61, %63, %65, %67 in 2 : vector<16x16x64xbf16>, vector<16x16x64xbf16>, vector<16x16x64xbf16>, vector<16x16x64xbf16>, vector<16x16x64xbf16>, vector<16x16x64xbf16>, vector<16x16x64xbf16>, vector<16x16x64xbf16>, vector<16x16x64xbf16> -> vector<16x16x576xbf16>
    %69 = vector.shape_cast %68 : vector<16x16x576xbf16> to vector<256x576xbf16>
    %c0_59 = arith.constant 0 : index
    %c0_60 = arith.constant 0 : index
    %70 = vector.load %arg6[%c0_59, %c0_60] : memref<576x64xbf16, #tpu.memory_space<vmem>>, vector<576x64xbf16>
    %cst_61 = arith.constant dense<0.000000e+00> : vector<256x64xf32>
    %71 = tpu.matmul %69, %70, %cst_61 {dimension_numbers = #tpu.dot_dimension_numbers<[1], [0], [0], [1], [0, 0, 1, 1], [], []>} : vector<256x576xbf16>, vector<576x64xbf16>, vector<256x64xf32> -> vector<256x64xf32>
    %c0_62 = arith.constant 0 : index
    %c0_63 = arith.constant 0 : index
    %72 = vector.load %arg7[%c0_62, %c0_63] : memref<1x64xf32, #tpu.memory_space<vmem>>, vector<1x64xf32>
    %73 = vector.broadcast %72 : vector<1x64xf32> to vector<256x64xf32>
    %74 = arith.addf %71, %73 : vector<256x64xf32>
    %c0_64 = arith.constant 0 : index
    %c7_65 = arith.constant 7 : index
    %c0_66 = arith.constant 0 : index
    %75 = vector.load %arg10[%c0_64, %c7_65, %c0_66] : memref<18x32x64xf32, #tpu.memory_space<vmem>>, vector<16x16x64xf32>
    %76 = arith.truncf %75 : vector<16x16x64xf32> to vector<16x16x64xbf16>
    %c0_67 = arith.constant 0 : index
    %c8_68 = arith.constant 8 : index
    %c0_69 = arith.constant 0 : index
    %77 = vector.load %arg10[%c0_67, %c8_68, %c0_69] : memref<18x32x64xf32, #tpu.memory_space<vmem>>, vector<16x16x64xf32>
    %78 = arith.truncf %77 : vector<16x16x64xf32> to vector<16x16x64xbf16>
    %c0_70 = arith.constant 0 : index
    %c9_71 = arith.constant 9 : index
    %c0_72 = arith.constant 0 : index
    %79 = vector.load %arg10[%c0_70, %c9_71, %c0_72] : memref<18x32x64xf32, #tpu.memory_space<vmem>>, vector<16x16x64xf32>
    %80 = arith.truncf %79 : vector<16x16x64xf32> to vector<16x16x64xbf16>
    %c1_73 = arith.constant 1 : index
    %c7_74 = arith.constant 7 : index
    %c0_75 = arith.constant 0 : index
    %81 = vector.load %arg10[%c1_73, %c7_74, %c0_75] : memref<18x32x64xf32, #tpu.memory_space<vmem>>, vector<16x16x64xf32>
    %82 = arith.truncf %81 : vector<16x16x64xf32> to vector<16x16x64xbf16>
    %c1_76 = arith.constant 1 : index
    %c8_77 = arith.constant 8 : index
    %c0_78 = arith.constant 0 : index
    %83 = vector.load %arg10[%c1_76, %c8_77, %c0_78] : memref<18x32x64xf32, #tpu.memory_space<vmem>>, vector<16x16x64xf32>
    %84 = arith.truncf %83 : vector<16x16x64xf32> to vector<16x16x64xbf16>
    %c1_79 = arith.constant 1 : index
    %c9_80 = arith.constant 9 : index
    %c0_81 = arith.constant 0 : index
    %85 = vector.load %arg10[%c1_79, %c9_80, %c0_81] : memref<18x32x64xf32, #tpu.memory_space<vmem>>, vector<16x16x64xf32>
    %86 = arith.truncf %85 : vector<16x16x64xf32> to vector<16x16x64xbf16>
    %c2_82 = arith.constant 2 : index
    %c7_83 = arith.constant 7 : index
    %c0_84 = arith.constant 0 : index
    %87 = vector.load %arg10[%c2_82, %c7_83, %c0_84] : memref<18x32x64xf32, #tpu.memory_space<vmem>>, vector<16x16x64xf32>
    %88 = arith.truncf %87 : vector<16x16x64xf32> to vector<16x16x64xbf16>
    %c2_85 = arith.constant 2 : index
    %c8_86 = arith.constant 8 : index
    %c0_87 = arith.constant 0 : index
    %89 = vector.load %arg10[%c2_85, %c8_86, %c0_87] : memref<18x32x64xf32, #tpu.memory_space<vmem>>, vector<16x16x64xf32>
    %90 = arith.truncf %89 : vector<16x16x64xf32> to vector<16x16x64xbf16>
    %c2_88 = arith.constant 2 : index
    %c9_89 = arith.constant 9 : index
    %c0_90 = arith.constant 0 : index
    %91 = vector.load %arg10[%c2_88, %c9_89, %c0_90] : memref<18x32x64xf32, #tpu.memory_space<vmem>>, vector<16x16x64xf32>
    %92 = arith.truncf %91 : vector<16x16x64xf32> to vector<16x16x64xbf16>
    %93 = tpu.concatenate %76, %78, %80, %82, %84, %86, %88, %90, %92 in 2 : vector<16x16x64xbf16>, vector<16x16x64xbf16>, vector<16x16x64xbf16>, vector<16x16x64xbf16>, vector<16x16x64xbf16>, vector<16x16x64xbf16>, vector<16x16x64xbf16>, vector<16x16x64xbf16>, vector<16x16x64xbf16> -> vector<16x16x576xbf16>
    %94 = vector.shape_cast %93 : vector<16x16x576xbf16> to vector<256x576xbf16>
    %c0_91 = arith.constant 0 : index
    %c0_92 = arith.constant 0 : index
    %95 = vector.load %arg6[%c0_91, %c0_92] : memref<576x64xbf16, #tpu.memory_space<vmem>>, vector<576x64xbf16>
    %cst_93 = arith.constant dense<0.000000e+00> : vector<256x64xf32>
    %96 = tpu.matmul %94, %95, %cst_93 {dimension_numbers = #tpu.dot_dimension_numbers<[1], [0], [0], [1], [0, 0, 1, 1], [], []>} : vector<256x576xbf16>, vector<576x64xbf16>, vector<256x64xf32> -> vector<256x64xf32>
    %c0_94 = arith.constant 0 : index
    %c0_95 = arith.constant 0 : index
    %97 = vector.load %arg7[%c0_94, %c0_95] : memref<1x64xf32, #tpu.memory_space<vmem>>, vector<1x64xf32>
    %98 = vector.broadcast %97 : vector<1x64xf32> to vector<256x64xf32>
    %99 = arith.addf %96, %98 : vector<256x64xf32>
    %cst_96 = arith.constant 0.000000e+00 : f32
    %100 = vector.broadcast %cst_96 : f32 to vector<256x64xf32>
    %101 = arith.maximumf %74, %100 : vector<256x64xf32>
    %cst_97 = arith.constant 0.000000e+00 : f32
    %102 = vector.broadcast %cst_97 : f32 to vector<256x64xf32>
    %103 = arith.maximumf %99, %102 : vector<256x64xf32>
    %104 = arith.subf %101, %103 : vector<256x64xf32>
    %105 = arith.mulf %104, %104 : vector<256x64xf32>
    %106 = vector.shape_cast %105 : vector<256x64xf32> to vector<1x256x64xf32>
    %cst_98 = arith.constant dense<0.000000e+00> : vector<1xf32>
    %107 = vector.multi_reduction <add>, %106, %cst_98 [1, 2] : vector<1x256x64xf32> to vector<1xf32>
    %108 = vector.shape_cast %107 : vector<1xf32> to vector<1x1x1xf32>
    %109 = vector.extract %108[0, 0, 0] : f32 from vector<1x1x1xf32>
    %cst_99 = arith.constant 3.05175781E-5 : f32
    %110 = arith.mulf %109, %cst_99 : f32
    %111 = arith.addf %36, %110 : f32
    %c0_100 = arith.constant 0 : index
    %c0_101 = arith.constant 0 : index
    %c0_102 = arith.constant 0 : index
    %112 = vector.load %arg8[%c0_100, %c0_101, %c0_102] : memref<1x1x1xf32, #tpu.memory_space<vmem>>, vector<1x1x1xf32>
    %113 = vector.broadcast %111 : f32 to vector<1x1x1xf32>
    %114 = arith.addf %112, %113 : vector<1x1x1xf32>
    %c0_103 = arith.constant 0 : index
    %c0_104 = arith.constant 0 : index
    %c0_105 = arith.constant 0 : index
    %115 = vector.load %arg8[%c0_103, %c0_104, %c0_105] : memref<1x1x1xf32, #tpu.memory_space<vmem>>, vector<1x1x1xf32>
    tpu.vector_store %arg8[%c0_103, %c0_104, %c0_105], %114 {strides = array<i32>} : memref<1x1x1xf32, #tpu.memory_space<vmem>>, vector<1x1x1xf32>,
    return
  }
  func.func @transform_0(%arg0: i32, %arg1: i32) -> (i32, i32, i32, i32) {
    %c0_i32 = arith.constant 0 : i32
    %c0_i32_0 = arith.constant 0 : i32
    %c0_i32_1 = arith.constant 0 : i32
    %c0_i32_2 = arith.constant 0 : i32
    return %arg0, %c0_i32, %c0_i32_0, %c0_i32_1 : i32, i32, i32, i32
  }
  func.func @transform_1(%arg0: i32, %arg1: i32) -> (i32, i32, i32, i32) {
    %c0_i32 = arith.constant 0 : i32
    %c0_i32_0 = arith.constant 0 : i32
    %c0_i32_1 = arith.constant 0 : i32
    %c0_i32_2 = arith.constant 0 : i32
    return %arg0, %c0_i32, %c0_i32_0, %c0_i32_1 : i32, i32, i32, i32
  }
  func.func @transform_2(%arg0: i32, %arg1: i32) -> (i32, i32) {
    %c0_i32 = arith.constant 0 : i32
    %c0_i32_0 = arith.constant 0 : i32
    %c0_i32_1 = arith.constant 0 : i32
    return %c0_i32, %c0_i32_0 : i32, i32
  }
  func.func @transform_3(%arg0: i32, %arg1: i32) -> (i32, i32) {
    %c0_i32 = arith.constant 0 : i32
    %c0_i32_0 = arith.constant 0 : i32
    %c0_i32_1 = arith.constant 0 : i32
    return %c0_i32, %c0_i32_0 : i32, i32
  }
  func.func @transform_4(%arg0: i32, %arg1: i32) -> (i32, i32) {
    %c0_i32 = arith.constant 0 : i32
    %c0_i32_0 = arith.constant 0 : i32
    %c0_i32_1 = arith.constant 0 : i32
    return %c0_i32, %c0_i32_0 : i32, i32
  }
  func.func @transform_5(%arg0: i32, %arg1: i32) -> (i32, i32) {
    %c0_i32 = arith.constant 0 : i32
    %c0_i32_0 = arith.constant 0 : i32
    %c0_i32_1 = arith.constant 0 : i32
    return %c0_i32, %c0_i32_0 : i32, i32
  }
  func.func @transform_6(%arg0: i32, %arg1: i32) -> (i32, i32, i32) {
    %c0_i32 = arith.constant 0 : i32
    %c0_i32_0 = arith.constant 0 : i32
    %c0_i32_1 = arith.constant 0 : i32
    return %arg0, %c0_i32, %c0_i32_0 : i32, i32, i32
  }
}

</mosaic_0001>

<llo_original>
// kernel: tpu_custom_call.1
$region0: #{tpu_custom_call.1}
  #allocation0 [shape = 'u32[]', space=smem, size = 0x4, offset = 0x4, fixed_abs, tag = 'smem constant byte address 0x4 - core index']
  #allocation1 [shape = 'u32[72,128]{1,0:T(1,128)}', space=vmem, size = 0x9000, scoped, tag = 'internal scratch']
  #allocation2 [shape = 'f32[18,32,64]{2,1,0:T(8,128)}', space=vmem, size = 0x48000, scoped, tag = 'scratch operand']
  #allocation3 [shape = 'f32[18,32,64]{2,1,0:T(8,128)}', space=vmem, size = 0x48000, scoped, tag = 'scratch operand']
  %s0 = inlined_call_operand.vmem [shape: bf16[2,18,16,27], index: 0, kind: input, shape index: {}]
  %s1 = inlined_call_operand.hbm [shape: bf16[2,18,16,27], index: 1, kind: input, shape index: {}]
  %s2 = inlined_call_operand.vmem [shape: bf16[27,64], index: 2, kind: input, shape index: {}]
  %s3 = inlined_call_operand.vmem [shape: f32[1,64], index: 3, kind: input, shape index: {}]
  %s4 = inlined_call_operand.vmem [shape: bf16[576,64], index: 4, kind: input, shape index: {}]
  %s5 = inlined_call_operand.vmem [shape: f32[1,64], index: 5, kind: input, shape index: {}]
  %s6 = inlined_call_operand.vmem [shape: f32[2,1,1], index: 6, kind: output, shape index: {}]
  %s7 = sld [smem:[#allocation0]]
  $region69: #{tpu_custom_call.1} parent=0
    _
  %s9 = ssub.s32 1, %s7
  %s10 = scalar_select 0, %s9, %s7
  $region1: #{tpu_custom_call.1} parent=0
    #allocation4 [shape = 'u8[147456]{0}', space=vmem, size = 0x24000, scoped, tag = 'input window, operand 1']
    #allocation5 [shape = 's32[2]{0}', space=sflag, size = 0x8, scoped, tag = 'scoped memory for tpu_custom_call.1']
    %11 = vsyncpa [#allocation5], 0
    %s12 = scalar_lea.sflag [#allocation5], 1
    %13 = vsyncpa %s12, 0
    loop: start=0, step=1, limit=4
    $region2: #{tpu_custom_call.1} parent=1 // loop_pre_header
      _
    $region3: #{tpu_custom_call.1} parent=1 // loop_header
      %s15 = sphi 0, %s19
      %p16 = scmp.ge.s32.totalorder %s15, 4
      %s22 = sphi 0, %s34
      %s23 = sphi 0, %s30
      %s24 = sphi 0, %s22
      %s25 = sphi 0, %s23
      %s26 = sphi 0, %s24
      %s27 = sphi 0, %s25
      %s37 = sphi 0, %s39
      %s40 = sphi 0, %s37
      %s41 = sphi 0, %s40
      %s57 = sphi 0, %s41
      %s63 = sphi 0, %s65
      %s66 = sphi 0, %s63
      %s67 = sphi 0, %s66
      %s83 = sphi 0, %s67
      %s87 = sphi 0, %s87
      %s89 = sphi 0, %s87
      %s90 = sphi 0, %s89
      %s104 = sphi 0, %s90
      %s108 = sphi 0, %s108
      %s110 = sphi 0, %s108
      %s111 = sphi 0, %s110
      %s125 = sphi 0, %s111
      %s129 = sphi 0, %s129
      %s131 = sphi 0, %s129
      %s132 = sphi 0, %s131
      %s146 = sphi 0, %s132
      %s150 = sphi 0, %s150
      %s152 = sphi 0, %s150
      %s153 = sphi 0, %s152
      %s167 = sphi 0, %s153
      %s173 = sphi 0, %s175
      %s176 = sphi 0, %s173
      %s177 = sphi 0, %s176
      %s193 = sphi 0, %s177
    $region4: #{tpu_custom_call.1} parent=1 // loop_header_branch
      %18 = sbr.rel (%p16) target = $region8
    $region5: #{tpu_custom_call.1} parent=1 // loop_body
      %s20 = ssub.s32 %s15, 1
      %s21 = ssub.s32 %s15, 2
      %s28 = sadd.s32 1, %s23
      %p29 = scmp.ge.s32.totalorder %s28, 1
      %s30 = scalar_select %p29, 0, %s28
      %s31 = sadd.s32 1, %s22
      %s32 = scalar_select %p29, %s31, %s22
      %p33 = scmp.ge.s32.totalorder %s32, 2
      %s34 = scalar_select %p33, 0, %s32
      %s35 = ssub.s32 %s22, %s34
      %p36 = scmp.eq.s32.totalorder %s35, 0
      %s38 = sadd.s32 %s37, 1
      %s39 = scalar_select %p36, %s37, %s38
      %p42 = pneg %p36
      %p43 = scmp.eq.s32.totalorder %s15, 1
      %p44 = por %p42, %p43
      %p45 = scmp.ne.s32.totalorder %s37, %s40
      %p46 = scmp.eq.s32.totalorder %s15, 0
      %p47 = por %p45, %p46
      %p48 = scmp.ne.s32.totalorder %s37, %s40
      %p49 = scmp.eq.s32.totalorder %s20, 1
      %p50 = por %p48, %p49
      %p51 = scmp.ne.s32.totalorder %s40, %s41
      %p52 = scmp.eq.s32.totalorder %s20, 0
      %p53 = por %p51, %p52
      %p54 = scmp.ne.s32.totalorder %s40, %s41
      %p55 = scmp.eq.s32.totalorder %s21, 1
      %p56 = por %p54, %p55
      %p58 = scmp.ne.s32.totalorder %s41, %s57
      %p59 = scmp.eq.s32.totalorder %s21, 0
      %p60 = por %p58, %p59
      %s61 = ssub.s32 %s22, %s34
      %p62 = scmp.eq.s32.totalorder %s61, 0
      %s64 = sadd.s32 %s63, 1
      %s65 = scalar_select %p62, %s63, %s64
      %p68 = pneg %p62
      %p69 = scmp.eq.s32.totalorder %s15, 1
      %p70 = por %p68, %p69
      %p71 = scmp.ne.s32.totalorder %s63, %s66
      %p72 = scmp.eq.s32.totalorder %s15, 0
      %p73 = por %p71, %p72
      %p74 = scmp.ne.s32.totalorder %s63, %s66
      %p75 = scmp.eq.s32.totalorder %s20, 1
      %p76 = por %p74, %p75
      %p77 = scmp.ne.s32.totalorder %s66, %s67
      %p78 = scmp.eq.s32.totalorder %s20, 0
      %p79 = por %p77, %p78
      %p80 = scmp.ne.s32.totalorder %s66, %s67
      %p81 = scmp.eq.s32.totalorder %s21, 1
      %p82 = por %p80, %p81
      %p84 = scmp.ne.s32.totalorder %s67, %s83
      %p85 = scmp.eq.s32.totalorder %s21, 0
      %p86 = por %p84, %p85
      %s88 = sadd.s32 %s87, 1
      %p91 = scmp.eq.s32.totalorder %s15, 1
      %p92 = scmp.ne.s32.totalorder %s87, %s89
      %p93 = scmp.eq.s32.totalorder %s15, 0
      %p94 = por %p92, %p93
      %p95 = scmp.ne.s32.totalorder %s87, %s89
      %p96 = scmp.eq.s32.totalorder %s20, 1
      %p97 = por %p95, %p96
      %p98 = scmp.ne.s32.totalorder %s89, %s90
      %p99 = scmp.eq.s32.totalorder %s20, 0
      %p100 = por %p98, %p99
      %p101 = scmp.ne.s32.totalorder %s89, %s90
      %p102 = scmp.eq.s32.totalorder %s21, 1
      %p103 = por %p101, %p102
      %p105 = scmp.ne.s32.totalorder %s90, %s104
      %p106 = scmp.eq.s32.totalorder %s21, 0
      %p107 = por %p105, %p106
      %s109 = sadd.s32 %s108, 1
      %p112 = scmp.eq.s32.totalorder %s15, 1
      %p113 = scmp.ne.s32.totalorder %s108, %s110
      %p114 = scmp.eq.s32.totalorder %s15, 0
      %p115 = por %p113, %p114
      %p116 = scmp.ne.s32.totalorder %s108, %s110
      %p117 = scmp.eq.s32.totalorder %s20, 1
      %p118 = por %p116, %p117
      %p119 = scmp.ne.s32.totalorder %s110, %s111
      %p120 = scmp.eq.s32.totalorder %s20, 0
      %p121 = por %p119, %p120
      %p122 = scmp.ne.s32.totalorder %s110, %s111
      %p123 = scmp.eq.s32.totalorder %s21, 1
      %p124 = por %p122, %p123
      %p126 = scmp.ne.s32.totalorder %s111, %s125
      %p127 = scmp.eq.s32.totalorder %s21, 0
      %p128 = por %p126, %p127
      %s130 = sadd.s32 %s129, 1
      %p133 = scmp.eq.s32.totalorder %s15, 1
      %p134 = scmp.ne.s32.totalorder %s129, %s131
      %p135 = scmp.eq.s32.totalorder %s15, 0
      %p136 = por %p134, %p135
      %p137 = scmp.ne.s32.totalorder %s129, %s131
      %p138 = scmp.eq.s32.totalorder %s20, 1
      %p139 = por %p137, %p138
      %p140 = scmp.ne.s32.totalorder %s131, %s132
      %p141 = scmp.eq.s32.totalorder %s20, 0
      %p142 = por %p140, %p141
      %p143 = scmp.ne.s32.totalorder %s131, %s132
      %p144 = scmp.eq.s32.totalorder %s21, 1
      %p145 = por %p143, %p144
      %p147 = scmp.ne.s32.totalorder %s132, %s146
      %p148 = scmp.eq.s32.totalorder %s21, 0
      %p149 = por %p147, %p148
      %s151 = sadd.s32 %s150, 1
      %p154 = scmp.eq.s32.totalorder %s15, 1
      %p155 = scmp.ne.s32.totalorder %s150, %s152
      %p156 = scmp.eq.s32.totalorder %s15, 0
      %p157 = por %p155, %p156
      %p158 = scmp.ne.s32.totalorder %s150, %s152
      %p159 = scmp.eq.s32.totalorder %s20, 1
      %p160 = por %p158, %p159
      %p161 = scmp.ne.s32.totalorder %s152, %s153
      %p162 = scmp.eq.s32.totalorder %s20, 0
      %p163 = por %p161, %p162
      %p164 = scmp.ne.s32.totalorder %s152, %s153
      %p165 = scmp.eq.s32.totalorder %s21, 1
      %p166 = por %p164, %p165
      %p168 = scmp.ne.s32.totalorder %s153, %s167
      %p169 = scmp.eq.s32.totalorder %s21, 0
      %p170 = por %p168, %p169
      %s171 = ssub.s32 %s22, %s34
      %p172 = scmp.eq.s32.totalorder %s171, 0
      %s174 = sadd.s32 %s173, 1
      %s175 = scalar_select %p172, %s173, %s174
      %p178 = pneg %p172
      %p179 = scmp.eq.s32.totalorder %s15, 1
      %p180 = por %p178, %p179
      %p181 = scmp.ne.s32.totalorder %s173, %s176
      %p182 = scmp.eq.s32.totalorder %s15, 0
      %p183 = por %p181, %p182
      %p184 = scmp.ne.s32.totalorder %s173, %s176
      %p185 = scmp.eq.s32.totalorder %s20, 1
      %p186 = por %p184, %p185
      %p187 = scmp.ne.s32.totalorder %s176, %s177
      %p188 = scmp.eq.s32.totalorder %s20, 0
      %p189 = por %p187, %p188
      %p190 = scmp.ne.s32.totalorder %s176, %s177
      %p191 = scmp.eq.s32.totalorder %s21, 1
      %p192 = por %p190, %p191
      %p194 = scmp.ne.s32.totalorder %s177, %s193
      %p195 = scmp.eq.s32.totalorder %s21, 0
      %p196 = por %p194, %p195
      %p197 = scmp.le.s32.totalorder 1, %s15
      %p198 = scmp.lt.s32.totalorder %s15, 3
      %p199 = pnand %p197, %p198
      %p200 = pneg %p199
      // Predicated region
      $region9: #{tpu_custom_call.1} parent=5 // pred_check
        _
      $region10: #{tpu_custom_call.1} parent=5 // pred_check_branch
        %202 = sbr.rel (%p199) target = $region12
      $region11: #{tpu_custom_call.1} parent=5 // pred_region
        %s203 = ssub.s32 %s15, 1
        // Predicated region
        $region13: #{tpu_custom_call.1} parent=11 // pred_check
          %p204 = pneg %p100
        $region14: #{tpu_custom_call.1} parent=11 // pred_check_branch
          %206 = sbr.rel (%p204) target = $region16
        $region15: #{tpu_custom_call.1} parent=11 // pred_region
          _
        $region16: #{tpu_custom_call.1} parent=11 // pred_fallthru
          _
        // Predicated region
        $region17: #{tpu_custom_call.1} parent=11 // pred_check
          %p207 = pneg %p121
        $region18: #{tpu_custom_call.1} parent=11 // pred_check_branch
          %209 = sbr.rel (%p207) target = $region20
        $region19: #{tpu_custom_call.1} parent=11 // pred_region
          _
        $region20: #{tpu_custom_call.1} parent=11 // pred_fallthru
          _
        // Predicated region
        $region21: #{tpu_custom_call.1} parent=11 // pred_check
          %p210 = pneg %p142
        $region22: #{tpu_custom_call.1} parent=11 // pred_check_branch
          %212 = sbr.rel (%p210) target = $region24
        $region23: #{tpu_custom_call.1} parent=11 // pred_region
          _
        $region24: #{tpu_custom_call.1} parent=11 // pred_fallthru
          _
        // Predicated region
        $region25: #{tpu_custom_call.1} parent=11 // pred_check
          %p213 = pneg %p163
        $region26: #{tpu_custom_call.1} parent=11 // pred_check_branch
          %215 = sbr.rel (%p213) target = $region28
        $region27: #{tpu_custom_call.1} parent=11 // pred_region
          _
        $region28: #{tpu_custom_call.1} parent=11 // pred_fallthru
          _
      $region12: #{tpu_custom_call.1} parent=5 // pred_fallthru
        _
      %p216 = scmp.lt.s32.totalorder %s15, 2
      // Predicated region
      $region29: #{tpu_custom_call.1} parent=5 // pred_check
        %p217 = pneg %p216
      $region30: #{tpu_custom_call.1} parent=5 // pred_check_branch
        %219 = sbr.rel (%p217) target = $region32
      $region31: #{tpu_custom_call.1} parent=5 // pred_region
        // Predicated region
        $region33: #{tpu_custom_call.1} parent=31 // pred_check
          %p220 = pneg %p47
        $region34: #{tpu_custom_call.1} parent=31 // pred_check_branch
          %222 = sbr.rel (%p220) target = $region36
        $region35: #{tpu_custom_call.1} parent=31 // pred_region
          %p223 = scmp.lt.s32.totalorder %s22, 1
          %s224 = scalar_select %p223, %s22, 1
          %s225 = smul.addr %s224, 36
          %s226 = smul.addr %s225, 4
          %s227 = scalar_lea.vmem %s0, %s226
        $region36: #{tpu_custom_call.1} parent=31 // pred_fallthru
          _
        // Predicated region
        $region37: #{tpu_custom_call.1} parent=31 // pred_check
          %p228 = pneg %p73
        $region38: #{tpu_custom_call.1} parent=31 // pred_check_branch
          %230 = sbr.rel (%p228) target = $region40
        $region39: #{tpu_custom_call.1} parent=31 // pred_region
          %s231 = sand.u32 %s63, 1
          %s232 = scalar_lea.sflag [#allocation5], %s231
          %s233 = sand.u32 %s63, 1
          %s234 = smul.addr %s233, 144
          %s235 = scalar_lea.vmem [#allocation4], %s234
          %237 = vsyncadd %s232, 0
          %s238 = smul.addr %s22, 36
          %s239 = smul.addr %s238, 4
          %s240 = scalar_lea.hbm %s1, %s239
          %s241 = sshll.u32 %s240, 4
          %s242 = int_to_ptr.hbm [resolvable:$true] %s241
          %s243 = sshll.u32 %s235, 4
          %s244 = int_to_ptr.vmem [resolvable:$true] %s243
          %249 = dma.hbm_to_vmem [thread:$0]  %s242, 2304, %s244, %s232, 64, 64, 4
        $region40: #{tpu_custom_call.1} parent=31 // pred_fallthru
          _
      $region32: #{tpu_custom_call.1} parent=5 // pred_fallthru
        _
      %p250 = scmp.le.s32.totalorder 1, %s15
      %p251 = scmp.lt.s32.totalorder %s15, 3
      %p252 = pnand %p250, %p251
      %p253 = pneg %p252
      // Predicated region
      $region41: #{tpu_custom_call.1} parent=5 // pred_check
        _
      $region42: #{tpu_custom_call.1} parent=5 // pred_check_branch
        %255 = sbr.rel (%p252) target = $region44
      $region43: #{tpu_custom_call.1} parent=5 // pred_region
        %s256 = ssub.s32 %s15, 1
        %s257 = sand.u32 %s66, 1
        %s258 = scalar_lea.sflag [#allocation5], %s257
        %s259 = sand.u32 %s66, 1
        %s260 = smul.addr %s259, 144
        %s261 = scalar_lea.vmem [#allocation4], %s260
        // Predicated region
        $region45: #{tpu_custom_call.1} parent=43 // pred_check
          %p262 = pneg %p79
        $region46: #{tpu_custom_call.1} parent=43 // pred_check_branch
          %264 = sbr.rel (%p262) target = $region48
        $region47: #{tpu_custom_call.1} parent=43 // pred_region
          %266 = dma.done %s258, 2304
        $region48: #{tpu_custom_call.1} parent=43 // pred_fallthru
          _
        %p267 = scmp.lt.s32.totalorder %s24, 1
        %s268 = scalar_select %p267, %s24, 1
        %s269 = smul.addr %s268, 36
        %s270 = smul.addr %s269, 4
        %s271 = scalar_lea.vmem %s0, %s270
        %p272 = pneg %p53
        %p273 = pneg %p50
        %s274 = sand.u32 %s66, 1
        %s275 = scalar_lea.sflag [#allocation5], %s274
        %s276 = sand.u32 %s66, 1
        %s277 = smul.addr %s276, 144
        %s278 = scalar_lea.vmem [#allocation4], %s277
        %p279 = pneg %p79
        %p280 = pneg %p76
        %p281 = pneg %p100
        %p282 = pneg %p97
        %p283 = pneg %p121
        %p284 = pneg %p118
        %p285 = pneg %p142
        %p286 = pneg %p139
        %p287 = pneg %p163
        %p288 = pneg %p160
        %p289 = pneg %p189
        %p290 = pneg %p186
        %p291 = scmp.lt.s32.totalorder %s24, 1
        %s292 = scalar_select %p291, %s24, 1
        %s293 = scalar_lea.vmem %s6, %s292
        %p294 = scmp.lt.s32.totalorder %s24, 1
        %s295 = scalar_select %p294, %s24, 1
        %s296 = smul.addr %s295, 36
        %s297 = smul.addr %s296, 4
        %s298 = scalar_lea.vmem %s0, %s297
        %p299 = scmp.lt.s32.totalorder %s24, 1
        %s300 = scalar_select %p299, %s24, 1
        %s301 = scalar_lea.vmem %s6, %s300
        %p303 = scmp.eq.s32.totalorder %s25, 0
        // Predicated region
        $region49: #{tpu_custom_call.1} parent=43 // pred_check
          %p304 = pneg %p303
        $region50: #{tpu_custom_call.1} parent=43 // pred_check_branch
          %306 = sbr.rel (%p304) target = $region52
        $region51: #{tpu_custom_call.1} parent=43 // pred_region
          %vm307 = vcmask 0
          %308 = vst.msk [vmem:[%s301] sm:$0x1] %vm307, 0.0
        $region52: #{tpu_custom_call.1} parent=43 // pred_fallthru
          _
        %s309 = smul.u32 %s25, 16
        %s310 = smul.u32 %s309, 2
        %s311 = smul.addr %s310, 4
        %s312 = scalar_lea.vmem %s298, %s311
        %v313 = vld [vmem:[%s312] sm:$0xf]
        %v314 = vld [vmem:[%s312 + $0x4] sm:$0xf]
        %v315 = vld [vmem:[%s312 + $0x8] sm:$0xf]
        %v316 = vld [vmem:[%s312 + $0xc] sm:$0xf]
        %v317 = vld [vmem:[%s312 + $0x10] sm:$0xf]
        %v318 = vld [vmem:[%s312 + $0x14] sm:$0xf]
        %v319 = vld [vmem:[%s312 + $0x18] sm:$0xf]
        %v320 = vld [vmem:[%s312 + $0x1c] sm:$0xf]
        %v321 = vld [vmem:[%s312 + $0x20] sm:$0xf]
        %v322 = vld [vmem:[%s312 + $0x24] sm:$0xf]
        %v323 = vld [vmem:[%s312 + $0x28] sm:$0xf]
        %v324 = vld [vmem:[%s312 + $0x2c] sm:$0xf]
        %v325 = vld [vmem:[%s312 + $0x30] sm:$0xf]
        %v326 = vld [vmem:[%s312 + $0x34] sm:$0xf]
        %v327 = vld [vmem:[%s312 + $0x38] sm:$0xf]
        %v328 = vld [vmem:[%s312 + $0x3c] sm:$0xf]
        %v329 = vld [vmem:[%s312 + $0x40] sm:$0xf]
        %v330 = vld [vmem:[%s312 + $0x44] sm:$0xf]
        %v331 = vld [vmem:[%s312 + $0x48] sm:$0xf]
        %v332 = vld [vmem:[%s312 + $0x4c] sm:$0xf]
        %v333 = vld [vmem:[%s312 + $0x50] sm:$0xf]
        %v334 = vld [vmem:[%s312 + $0x54] sm:$0xf]
        %v335 = vld [vmem:[%s312 + $0x58] sm:$0xf]
        %v336 = vld [vmem:[%s312 + $0x5c] sm:$0xf]
        %v337 = vld [vmem:[%s312 + $0x60] sm:$0xf]
        %v338 = vld [vmem:[%s312 + $0x64] sm:$0xf]
        %v339 = vld [vmem:[%s312 + $0x68] sm:$0xf]
        %v340 = vld [vmem:[%s312 + $0x6c] sm:$0xf]
        %v341 = vld [vmem:[%s312 + $0x70] sm:$0xf]
        %v342 = vld [vmem:[%s312 + $0x74] sm:$0xf]
        %v343 = vld [vmem:[%s312 + $0x78] sm:$0xf]
        %v344 = vld [vmem:[%s312 + $0x7c] sm:$0xf]
        %v345 = vld [vmem:[%s312 + $0x80] sm:$0xf]
        %v346 = vld [vmem:[%s312 + $0x84] sm:$0xf]
        %v347 = vld [vmem:[%s312 + $0x88] sm:$0xf]
        %v348 = vld [vmem:[%s312 + $0x8c] sm:$0xf]
        %v349 = vld [vmem:[%s2] sm:$0xf]
        %v350 = vld [vmem:[%s2 + $0x4] sm:$0xf]
        %v351 = vld [vmem:[%s2 + $0x8] sm:$0xf]
        %v352 = vld [vmem:[%s2 + $0xc] sm:$0x3]
        %v353 = vld [vmem:[%s3] sm:$0x1]
        %v355 = vperm.slane %v353, 0
        %v393 = vunpack.c.l.b16 %v313
        %v394 = vunpack.c.l.b16 %v314
        %v395 = vunpack.c.l.b16 %v315
        %v396 = vunpack.c.l.b16 %v316
        %v397 = vunpack.c.l.b16 %v317
        %v398 = vunpack.c.l.b16 %v318
        %v399 = vunpack.c.l.b16 %v319
        %v400 = vunpack.c.l.b16 %v320
        %v401 = vunpack.c.l.b16 %v321
        %v402 = vunpack.c.l.b16 %v322
        %v403 = vunpack.c.l.b16 %v323
        %v404 = vunpack.c.l.b16 %v324
        %v405 = vunpack.c.l.b16 %v325
        %v406 = vunpack.c.l.b16 %v326
        %v407 = vunpack.c.l.b16 %v327
        %v408 = vunpack.c.l.b16 %v328
        %v409 = vunpack.c.l.b16 %v329
        %v410 = vunpack.c.l.b16 %v330
        %v411 = vunpack.c.l.b16 %v331
        %v412 = vunpack.c.l.b16 %v332
        %v413 = vunpack.c.l.b16 %v333
        %v414 = vunpack.c.l.b16 %v334
        %v415 = vunpack.c.l.b16 %v335
        %v416 = vunpack.c.l.b16 %v336
        %v417 = vunpack.c.l.b16 %v337
        %v418 = vunpack.c.l.b16 %v338
        %v419 = vunpack.c.l.b16 %v339
        %v420 = vunpack.c.l.b16 %v340
        %v421 = vunpack.c.l.b16 %v341
        %v422 = vunpack.c.l.b16 %v342
        %v423 = vunpack.c.l.b16 %v343
        %v424 = vunpack.c.l.b16 %v344
        %v425 = vunpack.c.l.b16 %v345
        %v426 = vunpack.c.l.b16 %v346
        %v427 = vunpack.c.l.b16 %v347
        %v428 = vunpack.c.l.b16 %v348
        %v429 = vpack.c.b16 %v394, %v393
        %v430 = vpack.c.b16 %v396, %v395
        %v431 = vpack.c.b16 %v398, %v397
        %v432 = vpack.c.b16 %v400, %v399
        %v433 = vpack.c.b16 %v402, %v401
        %v434 = vpack.c.b16 %v404, %v403
        %v435 = vpack.c.b16 %v406, %v405
        %v436 = vpack.c.b16 %v408, %v407
        %v437 = vpack.c.b16 %v410, %v409
        %v438 = vpack.c.b16 %v412, %v411
        %v439 = vpack.c.b16 %v414, %v413
        %v440 = vpack.c.b16 %v416, %v415
        %v441 = vpack.c.b16 %v418, %v417
        %v442 = vpack.c.b16 %v420, %v419
        %v443 = vpack.c.b16 %v422, %v421
        %v444 = vpack.c.b16 %v424, %v423
        %v445 = vpack.c.b16 %v426, %v425
        %v446 = vpack.c.b16 %v428, %v427
        %v451 = vunpack.c.l.b16 %v349
        %v452 = vunpack.c.l.b16 %v350
        %v453 = vunpack.c.l.b16 %v351
        %v454 = vunpack.c.l.b16 %v352
        %v455 = vpack.c.b16 %v452, %v451
        %v456 = vpack.c.b16 %v454, %v453
        %vm458 = vcmask 220160
        %v460 = vsel %vm458, %v429, 0
        %v463 = vsel %vm458, %v430, 0
        %v466 = vsel %vm458, %v431, 0
        %v469 = vsel %vm458, %v432, 0
        %v472 = vsel %vm458, %v433, 0
        %v475 = vsel %vm458, %v434, 0
        %v478 = vsel %vm458, %v435, 0
        %v481 = vsel %vm458, %v436, 0
        %v484 = vsel %vm458, %v437, 0
        %v487 = vsel %vm458, %v438, 0
        %v490 = vsel %vm458, %v439, 0
        %v493 = vsel %vm458, %v440, 0
        %v496 = vsel %vm458, %v441, 0
        %v499 = vsel %vm458, %v442, 0
        %v502 = vsel %vm458, %v443, 0
        %v505 = vsel %vm458, %v444, 0
        %v508 = vsel %vm458, %v445, 0
        %v511 = vsel %vm458, %v446, 0
        %vm513 = vcmask 1044480
        %vm514 = vcmask 1045504
        %v515 = vsel %vm513, 4294967295, 65535
        %v516 = vsel %vm514, %v515, 0
        %v518 = vand.u32 %v456, %v516
        %520 = vmatpush.bf16.msra.mxu0 0
        %521 = vmatpush.bf16.msra.mxu0 0
        %522 = vmatpush.bf16.msra.mxu0 0
        %523 = vmatpush.bf16.msra.mxu0 0
        %524 = vmatpush.bf16.msra.mxu0 0
        %525 = vmatpush.bf16.msra.mxu0 0
        %526 = vmatpush.bf16.msra.mxu0 %v518
        %527 = vmatpush.bf16.msra.mxu0 %v455
        %528 = vmatmul.bf16.gmra.mxu0 %v460
        %v529 = vpop.f32.mrf.mxu0
        %v530 = vadd.f32 %v355, %v529
        %v531 = vpop.f32.mrf.mxu0
        %v532 = vadd.f32 %v355, %v531
        %533 = vmatmul.bf16.gmra.mxu0 %v463
        %v534 = vpop.f32.mrf.mxu0
        %v535 = vadd.f32 %v355, %v534
        %v536 = vpop.f32.mrf.mxu0
        %v537 = vadd.f32 %v355, %v536
        %538 = vmatmul.bf16.gmra.mxu0 %v466
        %v539 = vpop.f32.mrf.mxu0
        %v540 = vadd.f32 %v355, %v539
        %v541 = vpop.f32.mrf.mxu0
        %v542 = vadd.f32 %v355, %v541
        %543 = vmatmul.bf16.gmra.mxu0 %v469
        %v544 = vpop.f32.mrf.mxu0
        %v545 = vadd.f32 %v355, %v544
        %v546 = vpop.f32.mrf.mxu0
        %v547 = vadd.f32 %v355, %v546
        %548 = vmatmul.bf16.gmra.mxu0 %v472
        %v549 = vpop.f32.mrf.mxu0
        %v550 = vadd.f32 %v355, %v549
        %v551 = vpop.f32.mrf.mxu0
        %v552 = vadd.f32 %v355, %v551
        %553 = vmatmul.bf16.gmra.mxu0 %v475
        %v554 = vpop.f32.mrf.mxu0
        %v555 = vadd.f32 %v355, %v554
        %v556 = vpop.f32.mrf.mxu0
        %v557 = vadd.f32 %v355, %v556
        %558 = vmatmul.bf16.gmra.mxu0 %v478
        %v559 = vpop.f32.mrf.mxu0
        %v560 = vadd.f32 %v355, %v559
        %v561 = vpop.f32.mrf.mxu0
        %v562 = vadd.f32 %v355, %v561
        %563 = vmatmul.bf16.gmra.mxu0 %v481
        %v564 = vpop.f32.mrf.mxu0
        %v565 = vadd.f32 %v355, %v564
        %v566 = vpop.f32.mrf.mxu0
        %v567 = vadd.f32 %v355, %v566
        %568 = vmatmul.bf16.gmra.mxu0 %v484
        %v569 = vpop.f32.mrf.mxu0
        %v570 = vadd.f32 %v355, %v569
        %v571 = vpop.f32.mrf.mxu0
        %v572 = vadd.f32 %v355, %v571
        %573 = vmatmul.bf16.gmra.mxu0 %v487
        %v574 = vpop.f32.mrf.mxu0
        %v575 = vadd.f32 %v355, %v574
        %v576 = vpop.f32.mrf.mxu0
        %v577 = vadd.f32 %v355, %v576
        %578 = vmatmul.bf16.gmra.mxu0 %v490
        %v579 = vpop.f32.mrf.mxu0
        %v580 = vadd.f32 %v355, %v579
        %v581 = vpop.f32.mrf.mxu0
        %v582 = vadd.f32 %v355, %v581
        %583 = vmatmul.bf16.gmra.mxu0 %v493
        %v584 = vpop.f32.mrf.mxu0
        %v585 = vadd.f32 %v355, %v584
        %v586 = vpop.f32.mrf.mxu0
        %v587 = vadd.f32 %v355, %v586
        %588 = vmatmul.bf16.gmra.mxu0 %v496
        %v589 = vpop.f32.mrf.mxu0
        %v590 = vadd.f32 %v355, %v589
        %v591 = vpop.f32.mrf.mxu0
        %v592 = vadd.f32 %v355, %v591
        %593 = vmatmul.bf16.gmra.mxu0 %v499
        %v594 = vpop.f32.mrf.mxu0
        %v595 = vadd.f32 %v355, %v594
        %v596 = vpop.f32.mrf.mxu0
        %v597 = vadd.f32 %v355, %v596
        %598 = vmatmul.bf16.gmra.mxu0 %v502
        %v599 = vpop.f32.mrf.mxu0
        %v600 = vadd.f32 %v355, %v599
        %v601 = vpop.f32.mrf.mxu0
        %v602 = vadd.f32 %v355, %v601
        %603 = vmatmul.bf16.gmra.mxu0 %v505
        %v604 = vpop.f32.mrf.mxu0
        %v605 = vadd.f32 %v355, %v604
        %v606 = vpop.f32.mrf.mxu0
        %v607 = vadd.f32 %v355, %v606
        %608 = vmatmul.bf16.gmra.mxu0 %v508
        %v609 = vpop.f32.mrf.mxu0
        %v610 = vadd.f32 %v355, %v609
        %v611 = vpop.f32.mrf.mxu0
        %v612 = vadd.f32 %v355, %v611
        %613 = vmatmul.bf16.gmra.mxu0 %v511
        %v614 = vpop.f32.mrf.mxu0
        %v615 = vadd.f32 %v355, %v614
        %v616 = vpop.f32.mrf.mxu0
        %v617 = vadd.f32 %v355, %v616
        %618 = vdwg.mxu0
        %s619 = smul.addr %s310, 4
        %s620 = scalar_lea.vmem %s261, %s619 [#allocation4]
        %v621 = vld [vmem:[%s620] sm:$0xf]
        %v622 = vld [vmem:[%s620 + $0x4] sm:$0xf]
        %v623 = vld [vmem:[%s620 + $0x8] sm:$0xf]
        %v624 = vld [vmem:[%s620 + $0xc] sm:$0xf]
        %v625 = vld [vmem:[%s620 + $0x10] sm:$0xf]
        %v626 = vld [vmem:[%s620 + $0x14] sm:$0xf]
        %v627 = vld [vmem:[%s620 + $0x18] sm:$0xf]
        %v628 = vld [vmem:[%s620 + $0x1c] sm:$0xf]
        %v629 = vld [vmem:[%s620 + $0x20] sm:$0xf]
        %v630 = vld [vmem:[%s620 + $0x24] sm:$0xf]
        %v631 = vld [vmem:[%s620 + $0x28] sm:$0xf]
        %v632 = vld [vmem:[%s620 + $0x2c] sm:$0xf]
        %v633 = vld [vmem:[%s620 + $0x30] sm:$0xf]
        %v634 = vld [vmem:[%s620 + $0x34] sm:$0xf]
        %v635 = vld [vmem:[%s620 + $0x38] sm:$0xf]
        %v636 = vld [vmem:[%s620 + $0x3c] sm:$0xf]
        %v637 = vld [vmem:[%s620 + $0x40] sm:$0xf]
        %v638 = vld [vmem:[%s620 + $0x44] sm:$0xf]
        %v639 = vld [vmem:[%s620 + $0x48] sm:$0xf]
        %v640 = vld [vmem:[%s620 + $0x4c] sm:$0xf]
        %v641 = vld [vmem:[%s620 + $0x50] sm:$0xf]
        %v642 = vld [vmem:[%s620 + $0x54] sm:$0xf]
        %v643 = vld [vmem:[%s620 + $0x58] sm:$0xf]
        %v644 = vld [vmem:[%s620 + $0x5c] sm:$0xf]
        %v645 = vld [vmem:[%s620 + $0x60] sm:$0xf]
        %v646 = vld [vmem:[%s620 + $0x64] sm:$0xf]
        %v647 = vld [vmem:[%s620 + $0x68] sm:$0xf]
        %v648 = vld [vmem:[%s620 + $0x6c] sm:$0xf]
        %v649 = vld [vmem:[%s620 + $0x70] sm:$0xf]
        %v650 = vld [vmem:[%s620 + $0x74] sm:$0xf]
        %v651 = vld [vmem:[%s620 + $0x78] sm:$0xf]
        %v652 = vld [vmem:[%s620 + $0x7c] sm:$0xf]
        %v653 = vld [vmem:[%s620 + $0x80] sm:$0xf]
        %v654 = vld [vmem:[%s620 + $0x84] sm:$0xf]
        %v655 = vld [vmem:[%s620 + $0x88] sm:$0xf]
        %v656 = vld [vmem:[%s620 + $0x8c] sm:$0xf]
        %v693 = vunpack.c.l.b16 %v621
        %v694 = vunpack.c.l.b16 %v622
        %v695 = vunpack.c.l.b16 %v623
        %v696 = vunpack.c.l.b16 %v624
        %v697 = vunpack.c.l.b16 %v625
        %v698 = vunpack.c.l.b16 %v626
        %v699 = vunpack.c.l.b16 %v627
        %v700 = vunpack.c.l.b16 %v628
        %v701 = vunpack.c.l.b16 %v629
        %v702 = vunpack.c.l.b16 %v630
        %v703 = vunpack.c.l.b16 %v631
        %v704 = vunpack.c.l.b16 %v632
        %v705 = vunpack.c.l.b16 %v633
        %v706 = vunpack.c.l.b16 %v634
        %v707 = vunpack.c.l.b16 %v635
        %v708 = vunpack.c.l.b16 %v636
        %v709 = vunpack.c.l.b16 %v637
        %v710 = vunpack.c.l.b16 %v638
        %v711 = vunpack.c.l.b16 %v639
        %v712 = vunpack.c.l.b16 %v640
        %v713 = vunpack.c.l.b16 %v641
        %v714 = vunpack.c.l.b16 %v642
        %v715 = vunpack.c.l.b16 %v643
        %v716 = vunpack.c.l.b16 %v644
        %v717 = vunpack.c.l.b16 %v645
        %v718 = vunpack.c.l.b16 %v646
        %v719 = vunpack.c.l.b16 %v647
        %v720 = vunpack.c.l.b16 %v648
        %v721 = vunpack.c.l.b16 %v649
        %v722 = vunpack.c.l.b16 %v650
        %v723 = vunpack.c.l.b16 %v651
        %v724 = vunpack.c.l.b16 %v652
        %v725 = vunpack.c.l.b16 %v653
        %v726 = vunpack.c.l.b16 %v654
        %v727 = vunpack.c.l.b16 %v655
        %v728 = vunpack.c.l.b16 %v656
        %v729 = vpack.c.b16 %v694, %v693
        %v730 = vpack.c.b16 %v696, %v695
        %v731 = vpack.c.b16 %v698, %v697
        %v732 = vpack.c.b16 %v700, %v699
        %v733 = vpack.c.b16 %v702, %v701
        %v734 = vpack.c.b16 %v704, %v703
        %v735 = vpack.c.b16 %v706, %v705
        %v736 = vpack.c.b16 %v708, %v707
        %v737 = vpack.c.b16 %v710, %v709
        %v738 = vpack.c.b16 %v712, %v711
        %v739 = vpack.c.b16 %v714, %v713
        %v740 = vpack.c.b16 %v716, %v715
        %v741 = vpack.c.b16 %v718, %v717
        %v742 = vpack.c.b16 %v720, %v719
        %v743 = vpack.c.b16 %v722, %v721
        %v744 = vpack.c.b16 %v724, %v723
        %v745 = vpack.c.b16 %v726, %v725
        %v746 = vpack.c.b16 %v728, %v727
        %v748 = vsel %vm458, %v729, 0
        %v751 = vsel %vm458, %v730, 0
        %v754 = vsel %vm458, %v731, 0
        %v757 = vsel %vm458, %v732, 0
        %v760 = vsel %vm458, %v733, 0
        %v763 = vsel %vm458, %v734, 0
        %v766 = vsel %vm458, %v735, 0
        %v769 = vsel %vm458, %v736, 0
        %v772 = vsel %vm458, %v737, 0
        %v775 = vsel %vm458, %v738, 0
        %v778 = vsel %vm458, %v739, 0
        %v781 = vsel %vm458, %v740, 0
        %v784 = vsel %vm458, %v741, 0
        %v787 = vsel %vm458, %v742, 0
        %v790 = vsel %vm458, %v743, 0
        %v793 = vsel %vm458, %v744, 0
        %v796 = vsel %vm458, %v745, 0
        %v799 = vsel %vm458, %v746, 0
        %801 = vmatpush.bf16.msra.mxu0 0
        %802 = vmatpush.bf16.msra.mxu0 0
        %803 = vmatpush.bf16.msra.mxu0 0
        %804 = vmatpush.bf16.msra.mxu0 0
        %805 = vmatpush.bf16.msra.mxu0 0
        %806 = vmatpush.bf16.msra.mxu0 0
        %807 = vmatpush.bf16.msra.mxu0 %v518
        %808 = vmatpush.bf16.msra.mxu0 %v455
        %809 = vmatmul.bf16.gmra.mxu0 %v748
        %v810 = vpop.f32.mrf.mxu0
        %v811 = vadd.f32 %v355, %v810
        %v812 = vpop.f32.mrf.mxu0
        %v813 = vadd.f32 %v355, %v812
        %814 = vmatmul.bf16.gmra.mxu0 %v751
        %v815 = vpop.f32.mrf.mxu0
        %v816 = vadd.f32 %v355, %v815
        %v817 = vpop.f32.mrf.mxu0
        %v818 = vadd.f32 %v355, %v817
        %819 = vmatmul.bf16.gmra.mxu0 %v754
        %v820 = vpop.f32.mrf.mxu0
        %v821 = vadd.f32 %v355, %v820
        %v822 = vpop.f32.mrf.mxu0
        %v823 = vadd.f32 %v355, %v822
        %824 = vmatmul.bf16.gmra.mxu0 %v757
        %v825 = vpop.f32.mrf.mxu0
        %v826 = vadd.f32 %v355, %v825
        %v827 = vpop.f32.mrf.mxu0
        %v828 = vadd.f32 %v355, %v827
        %829 = vmatmul.bf16.gmra.mxu0 %v760
        %v830 = vpop.f32.mrf.mxu0
        %v831 = vadd.f32 %v355, %v830
        %v832 = vpop.f32.mrf.mxu0
        %v833 = vadd.f32 %v355, %v832
        %834 = vmatmul.bf16.gmra.mxu0 %v763
        %v835 = vpop.f32.mrf.mxu0
        %v836 = vadd.f32 %v355, %v835
        %v837 = vpop.f32.mrf.mxu0
        %v838 = vadd.f32 %v355, %v837
        %839 = vmatmul.bf16.gmra.mxu0 %v766
        %v840 = vpop.f32.mrf.mxu0
        %v841 = vadd.f32 %v355, %v840
        %v842 = vpop.f32.mrf.mxu0
        %v843 = vadd.f32 %v355, %v842
        %844 = vmatmul.bf16.gmra.mxu0 %v769
        %v845 = vpop.f32.mrf.mxu0
        %v846 = vadd.f32 %v355, %v845
        %v847 = vpop.f32.mrf.mxu0
        %v848 = vadd.f32 %v355, %v847
        %849 = vmatmul.bf16.gmra.mxu0 %v772
        %v850 = vpop.f32.mrf.mxu0
        %v851 = vadd.f32 %v355, %v850
        %v852 = vpop.f32.mrf.mxu0
        %v853 = vadd.f32 %v355, %v852
        %854 = vmatmul.bf16.gmra.mxu0 %v775
        %v855 = vpop.f32.mrf.mxu0
        %v856 = vadd.f32 %v355, %v855
        %v857 = vpop.f32.mrf.mxu0
        %v858 = vadd.f32 %v355, %v857
        %859 = vmatmul.bf16.gmra.mxu0 %v778
        %v860 = vpop.f32.mrf.mxu0
        %v861 = vadd.f32 %v355, %v860
        %v862 = vpop.f32.mrf.mxu0
        %v863 = vadd.f32 %v355, %v862
        %864 = vmatmul.bf16.gmra.mxu0 %v781
        %v865 = vpop.f32.mrf.mxu0
        %v866 = vadd.f32 %v355, %v865
        %v867 = vpop.f32.mrf.mxu0
        %v868 = vadd.f32 %v355, %v867
        %869 = vmatmul.bf16.gmra.mxu0 %v784
        %v870 = vpop.f32.mrf.mxu0
        %v871 = vadd.f32 %v355, %v870
        %v872 = vpop.f32.mrf.mxu0
        %v873 = vadd.f32 %v355, %v872
        %874 = vmatmul.bf16.gmra.mxu0 %v787
        %v875 = vpop.f32.mrf.mxu0
        %v876 = vadd.f32 %v355, %v875
        %v877 = vpop.f32.mrf.mxu0
        %v878 = vadd.f32 %v355, %v877
        %879 = vmatmul.bf16.gmra.mxu0 %v790
        %v880 = vpop.f32.mrf.mxu0
        %v881 = vadd.f32 %v355, %v880
        %v882 = vpop.f32.mrf.mxu0
        %v883 = vadd.f32 %v355, %v882
        %884 = vmatmul.bf16.gmra.mxu0 %v793
        %v885 = vpop.f32.mrf.mxu0
        %v886 = vadd.f32 %v355, %v885
        %v887 = vpop.f32.mrf.mxu0
        %v888 = vadd.f32 %v355, %v887
        %889 = vmatmul.bf16.gmra.mxu0 %v796
        %v890 = vpop.f32.mrf.mxu0
        %v891 = vadd.f32 %v355, %v890
        %v892 = vpop.f32.mrf.mxu0
        %v893 = vadd.f32 %v355, %v892
        %894 = vmatmul.bf16.gmra.mxu0 %v799
        %v895 = vpop.f32.mrf.mxu0
        %v896 = vadd.f32 %v355, %v895
        %v897 = vpop.f32.mrf.mxu0
        %v898 = vadd.f32 %v355, %v897
        %899 = vdwg.mxu0
        %v900 = vmax.f32 %v530, 0.0
        %v901 = vmax.f32 %v532, 0.0
        %v902 = vmax.f32 %v535, 0.0
        %v903 = vmax.f32 %v537, 0.0
        %v904 = vmax.f32 %v540, 0.0
        %v905 = vmax.f32 %v542, 0.0
        %v906 = vmax.f32 %v545, 0.0
        %v907 = vmax.f32 %v547, 0.0
        %v908 = vmax.f32 %v550, 0.0
        %v909 = vmax.f32 %v552, 0.0
        %v910 = vmax.f32 %v555, 0.0
        %v911 = vmax.f32 %v557, 0.0
        %v912 = vmax.f32 %v560, 0.0
        %v913 = vmax.f32 %v562, 0.0
        %v914 = vmax.f32 %v565, 0.0
        %v915 = vmax.f32 %v567, 0.0
        %v916 = vmax.f32 %v570, 0.0
        %v917 = vmax.f32 %v572, 0.0
        %v918 = vmax.f32 %v575, 0.0
        %v919 = vmax.f32 %v577, 0.0
        %v920 = vmax.f32 %v580, 0.0
        %v921 = vmax.f32 %v582, 0.0
        %v922 = vmax.f32 %v585, 0.0
        %v923 = vmax.f32 %v587, 0.0
        %v924 = vmax.f32 %v590, 0.0
        %v925 = vmax.f32 %v592, 0.0
        %v926 = vmax.f32 %v595, 0.0
        %v927 = vmax.f32 %v597, 0.0
        %v928 = vmax.f32 %v600, 0.0
        %v929 = vmax.f32 %v602, 0.0
        %v930 = vmax.f32 %v605, 0.0
        %v931 = vmax.f32 %v607, 0.0
        %v932 = vmax.f32 %v610, 0.0
        %v933 = vmax.f32 %v612, 0.0
        %v934 = vmax.f32 %v615, 0.0
        %v935 = vmax.f32 %v617, 0.0
        %v936 = vmax.f32 %v811, 0.0
        %v937 = vmax.f32 %v813, 0.0
        %v938 = vmax.f32 %v816, 0.0
        %v939 = vmax.f32 %v818, 0.0
        %v940 = vmax.f32 %v821, 0.0
        %v941 = vmax.f32 %v823, 0.0
        %v942 = vmax.f32 %v826, 0.0
        %v943 = vmax.f32 %v828, 0.0
        %v944 = vmax.f32 %v831, 0.0
        %v945 = vmax.f32 %v833, 0.0
        %v946 = vmax.f32 %v836, 0.0
        %v947 = vmax.f32 %v838, 0.0
        %v948 = vmax.f32 %v841, 0.0
        %v949 = vmax.f32 %v843, 0.0
        %v950 = vmax.f32 %v846, 0.0
        %v951 = vmax.f32 %v848, 0.0
        %v952 = vmax.f32 %v851, 0.0
        %v953 = vmax.f32 %v853, 0.0
        %v954 = vmax.f32 %v856, 0.0
        %v955 = vmax.f32 %v858, 0.0
        %v956 = vmax.f32 %v861, 0.0
        %v957 = vmax.f32 %v863, 0.0
        %v958 = vmax.f32 %v866, 0.0
        %v959 = vmax.f32 %v868, 0.0
        %v960 = vmax.f32 %v871, 0.0
        %v961 = vmax.f32 %v873, 0.0
        %v962 = vmax.f32 %v876, 0.0
        %v963 = vmax.f32 %v878, 0.0
        %v964 = vmax.f32 %v881, 0.0
        %v965 = vmax.f32 %v883, 0.0
        %v966 = vmax.f32 %v886, 0.0
        %v967 = vmax.f32 %v888, 0.0
        %v968 = vmax.f32 %v891, 0.0
        %v969 = vmax.f32 %v893, 0.0
        %v970 = vmax.f32 %v896, 0.0
        %v971 = vmax.f32 %v898, 0.0
        %v972 = vsub.f32 %v902, %v938
        %v973 = vsub.f32 %v903, %v939
        %v974 = vsub.f32 %v904, %v940
        %v975 = vsub.f32 %v905, %v941
        %v976 = vsub.f32 %v906, %v942
        %v977 = vsub.f32 %v907, %v943
        %v978 = vsub.f32 %v908, %v944
        %v979 = vsub.f32 %v909, %v945
        %v980 = vsub.f32 %v910, %v946
        %v981 = vsub.f32 %v911, %v947
        %v982 = vsub.f32 %v912, %v948
        %v983 = vsub.f32 %v913, %v949
        %v984 = vsub.f32 %v914, %v950
        %v985 = vsub.f32 %v915, %v951
        %v986 = vsub.f32 %v916, %v952
        %v987 = vsub.f32 %v917, %v953
        %v988 = vsub.f32 %v918, %v954
        %v989 = vsub.f32 %v919, %v955
        %v990 = vsub.f32 %v920, %v956
        %v991 = vsub.f32 %v921, %v957
        %v992 = vsub.f32 %v922, %v958
        %v993 = vsub.f32 %v923, %v959
        %v994 = vsub.f32 %v924, %v960
        %v995 = vsub.f32 %v925, %v961
        %v996 = vsub.f32 %v926, %v962
        %v997 = vsub.f32 %v927, %v963
        %v998 = vsub.f32 %v928, %v964
        %v999 = vsub.f32 %v929, %v965
        %v1000 = vsub.f32 %v930, %v966
        %v1001 = vsub.f32 %v931, %v967
        %v1002 = vsub.f32 %v932, %v968
        %v1003 = vsub.f32 %v933, %v969
        %v1004 = vmul.f32 %v972, %v972
        %v1005 = vmul.f32 %v973, %v973
        %v1006 = vmul.f32 %v974, %v974
        %v1007 = vmul.f32 %v975, %v975
        %v1008 = vmul.f32 %v976, %v976
        %v1009 = vmul.f32 %v977, %v977
        %v1010 = vmul.f32 %v978, %v978
        %v1011 = vmul.f32 %v979, %v979
        %v1012 = vmul.f32 %v980, %v980
        %v1013 = vmul.f32 %v981, %v981
        %v1014 = vmul.f32 %v982, %v982
        %v1015 = vmul.f32 %v983, %v983
        %v1016 = vmul.f32 %v984, %v984
        %v1017 = vmul.f32 %v985, %v985
        %v1018 = vmul.f32 %v986, %v986
        %v1019 = vmul.f32 %v987, %v987
        %v1020 = vmul.f32 %v988, %v988
        %v1021 = vmul.f32 %v989, %v989
        %v1022 = vmul.f32 %v990, %v990
        %v1023 = vmul.f32 %v991, %v991
        %v1024 = vmul.f32 %v992, %v992
        %v1025 = vmul.f32 %v993, %v993
        %v1026 = vmul.f32 %v994, %v994
        %v1027 = vmul.f32 %v995, %v995
        %v1028 = vmul.f32 %v996, %v996
        %v1029 = vmul.f32 %v997, %v997
        %v1030 = vmul.f32 %v998, %v998
        %v1031 = vmul.f32 %v999, %v999
        %v1032 = vmul.f32 %v1000, %v1000
        %v1033 = vmul.f32 %v1001, %v1001
        %v1034 = vmul.f32 %v1002, %v1002
        %v1035 = vmul.f32 %v1003, %v1003
        %vm1036 = vcmask 523264
        %v1037 = vsel %vm1036, %v1004, 0.0
        %v1038 = vsel %vm1036, %v1005, 0.0
        %v1039 = vadd.f32 %v1037, %v1038
        %v1040 = vsel %vm1036, %v1006, 0.0
        %v1041 = vadd.f32 %v1039, %v1040
        %v1042 = vsel %vm1036, %v1007, 0.0
        %v1043 = vadd.f32 %v1041, %v1042
        %v1044 = vsel %vm1036, %v1008, 0.0
        %v1045 = vadd.f32 %v1043, %v1044
        %v1046 = vsel %vm1036, %v1009, 0.0
        %v1047 = vadd.f32 %v1045, %v1046
        %v1048 = vsel %vm1036, %v1010, 0.0
        %v1049 = vadd.f32 %v1047, %v1048
        %v1050 = vsel %vm1036, %v1011, 0.0
        %v1051 = vadd.f32 %v1049, %v1050
        %v1052 = vsel %vm1036, %v1012, 0.0
        %v1053 = vadd.f32 %v1051, %v1052
        %v1054 = vsel %vm1036, %v1013, 0.0
        %v1055 = vadd.f32 %v1053, %v1054
        %v1056 = vsel %vm1036, %v1014, 0.0
        %v1057 = vadd.f32 %v1055, %v1056
        %v1058 = vsel %vm1036, %v1015, 0.0
        %v1059 = vadd.f32 %v1057, %v1058
        %v1060 = vsel %vm1036, %v1016, 0.0
        %v1061 = vadd.f32 %v1059, %v1060
        %v1062 = vsel %vm1036, %v1017, 0.0
        %v1063 = vadd.f32 %v1061, %v1062
        %v1064 = vsel %vm1036, %v1018, 0.0
        %v1065 = vadd.f32 %v1063, %v1064
        %v1066 = vsel %vm1036, %v1019, 0.0
        %v1067 = vadd.f32 %v1065, %v1066
        %v1068 = vsel %vm1036, %v1020, 0.0
        %v1069 = vadd.f32 %v1067, %v1068
        %v1070 = vsel %vm1036, %v1021, 0.0
        %v1071 = vadd.f32 %v1069, %v1070
        %v1072 = vsel %vm1036, %v1022, 0.0
        %v1073 = vadd.f32 %v1071, %v1072
        %v1074 = vsel %vm1036, %v1023, 0.0
        %v1075 = vadd.f32 %v1073, %v1074
        %v1076 = vsel %vm1036, %v1024, 0.0
        %v1077 = vadd.f32 %v1075, %v1076
        %v1078 = vsel %vm1036, %v1025, 0.0
        %v1079 = vadd.f32 %v1077, %v1078
        %v1080 = vsel %vm1036, %v1026, 0.0
        %v1081 = vadd.f32 %v1079, %v1080
        %v1082 = vsel %vm1036, %v1027, 0.0
        %v1083 = vadd.f32 %v1081, %v1082
        %v1084 = vsel %vm1036, %v1028, 0.0
        %v1085 = vadd.f32 %v1083, %v1084
        %v1086 = vsel %vm1036, %v1029, 0.0
        %v1087 = vadd.f32 %v1085, %v1086
        %v1088 = vsel %vm1036, %v1030, 0.0
        %v1089 = vadd.f32 %v1087, %v1088
        %v1090 = vsel %vm1036, %v1031, 0.0
        %v1091 = vadd.f32 %v1089, %v1090
        %v1092 = vsel %vm1036, %v1032, 0.0
        %v1093 = vadd.f32 %v1091, %v1092
        %v1094 = vsel %vm1036, %v1033, 0.0
        %v1095 = vadd.f32 %v1093, %v1094
        %v1096 = vsel %vm1036, %v1034, 0.0
        %v1097 = vadd.f32 %v1095, %v1096
        %v1098 = vsel %vm1036, %v1035, 0.0
        %v1099 = vadd.f32 %v1097, %v1098
        %1100 = vadd.xlane.f32.xlu0 %v1099
        %v1101 = vpop.xlane.xlu0 %1100
        %v1102 = vrot.slane %v1101, 4
        %v1103 = vadd.f32 %v1101, %v1102
        %v1104 = vrot.slane %v1103, 2
        %v1105 = vadd.f32 %v1103, %v1104
        %v1106 = vrot.slane %v1105, 1
        %v1107 = vadd.f32 %v1105, %v1106
        %s1108 = vtos %v1107
        %s1109 = smul.f32 %s1108, 3.0517578e-05
        %s1110 = sadd.f32 %s1109, 0.0
        %1111 = vst.msk [vmem:[#allocation2] sm:$0xff] %vm1036, 0.0
        %1112 = vst.msk [vmem:[#allocation2 + $0x8] sm:$0xff] %vm1036, 0.0
        %1113 = vst.msk [vmem:[#allocation2 + $0x10] sm:$0xff] %vm1036, 0.0
        %1114 = vst.msk [vmem:[#allocation2 + $0x18] sm:$0xff] %vm1036, 0.0
        %1115 = vst.msk [vmem:[#allocation2 + $0x20] sm:$0xff] %vm1036, 0.0
        %1116 = vst.msk [vmem:[#allocation2 + $0x28] sm:$0xff] %vm1036, 0.0
        %1117 = vst.msk [vmem:[#allocation2 + $0x30] sm:$0xff] %vm1036, 0.0
        %1118 = vst.msk [vmem:[#allocation2 + $0x38] sm:$0xff] %vm1036, 0.0
        %1119 = vst.msk [vmem:[#allocation2 + $0x40] sm:$0xff] %vm1036, 0.0
        %1120 = vst.msk [vmem:[#allocation2 + $0x48] sm:$0xff] %vm1036, 0.0
        %1121 = vst.msk [vmem:[#allocation2 + $0x50] sm:$0xff] %vm1036, 0.0
        %1122 = vst.msk [vmem:[#allocation2 + $0x58] sm:$0xff] %vm1036, 0.0
        %1123 = vst.msk [vmem:[#allocation2 + $0x60] sm:$0xff] %vm1036, 0.0
        %1124 = vst.msk [vmem:[#allocation2 + $0x68] sm:$0xff] %vm1036, 0.0
        %1125 = vst.msk [vmem:[#allocation2 + $0x70] sm:$0xff] %vm1036, 0.0
        %1126 = vst.msk [vmem:[#allocation2 + $0x78] sm:$0xff] %vm1036, 0.0
        %1127 = vst.msk [vmem:[#allocation2 + $0x80] sm:$0xff] %vm1036, 0.0
        %1128 = vst.msk [vmem:[#allocation2 + $0x88] sm:$0xff] %vm1036, 0.0
        %1129 = vst.msk [vmem:[#allocation2 + $0x90] sm:$0xff] %vm1036, 0.0
        %1130 = vst.msk [vmem:[#allocation2 + $0x98] sm:$0xff] %vm1036, 0.0
        %1131 = vst.msk [vmem:[#allocation2 + $0xa0] sm:$0xff] %vm1036, 0.0
        %1132 = vst.msk [vmem:[#allocation2 + $0xa8] sm:$0xff] %vm1036, 0.0
        %1133 = vst.msk [vmem:[#allocation2 + $0xb0] sm:$0xff] %vm1036, 0.0
        %1134 = vst.msk [vmem:[#allocation2 + $0xb8] sm:$0xff] %vm1036, 0.0
        %1135 = vst.msk [vmem:[#allocation2 + $0xc0] sm:$0xff] %vm1036, 0.0
        %1136 = vst.msk [vmem:[#allocation2 + $0xc8] sm:$0xff] %vm1036, 0.0
        %1137 = vst.msk [vmem:[#allocation2 + $0xd0] sm:$0xff] %vm1036, 0.0
        %1138 = vst.msk [vmem:[#allocation2 + $0xd8] sm:$0xff] %vm1036, 0.0
        %1139 = vst.msk [vmem:[#allocation2 + $0xe0] sm:$0xff] %vm1036, 0.0
        %1140 = vst.msk [vmem:[#allocation2 + $0xe8] sm:$0xff] %vm1036, 0.0
        %1141 = vst.msk [vmem:[#allocation2 + $0xf0] sm:$0xff] %vm1036, 0.0
        %1142 = vst.msk [vmem:[#allocation2 + $0xf8] sm:$0xff] %vm1036, 0.0
        %1143 = vst.msk [vmem:[#allocation2 + $0x100] sm:$0xff] %vm1036, 0.0
        %1144 = vst.msk [vmem:[#allocation2 + $0x108] sm:$0xff] %vm1036, 0.0
        %1145 = vst.msk [vmem:[#allocation2 + $0x110] sm:$0xff] %vm1036, 0.0
        %1146 = vst.msk [vmem:[#allocation2 + $0x118] sm:$0xff] %vm1036, 0.0
        %1147 = vst.msk [vmem:[#allocation2 + $0x120] sm:$0xff] %vm1036, 0.0
        %1148 = vst.msk [vmem:[#allocation2 + $0x128] sm:$0xff] %vm1036, 0.0
        %1149 = vst.msk [vmem:[#allocation2 + $0x130] sm:$0xff] %vm1036, 0.0
        %1150 = vst.msk [vmem:[#allocation2 + $0x138] sm:$0xff] %vm1036, 0.0
        %1151 = vst.msk [vmem:[#allocation2 + $0x140] sm:$0xff] %vm1036, 0.0
        %1152 = vst.msk [vmem:[#allocation2 + $0x148] sm:$0xff] %vm1036, 0.0
        %1153 = vst.msk [vmem:[#allocation2 + $0x150] sm:$0xff] %vm1036, 0.0
        %1154 = vst.msk [vmem:[#allocation2 + $0x158] sm:$0xff] %vm1036, 0.0
        %1155 = vst.msk [vmem:[#allocation2 + $0x160] sm:$0xff] %vm1036, 0.0
        %1156 = vst.msk [vmem:[#allocation2 + $0x168] sm:$0xff] %vm1036, 0.0
        %1157 = vst.msk [vmem:[#allocation2 + $0x170] sm:$0xff] %vm1036, 0.0
        %1158 = vst.msk [vmem:[#allocation2 + $0x178] sm:$0xff] %vm1036, 0.0
        %1159 = vst.msk [vmem:[#allocation2 + $0x180] sm:$0xff] %vm1036, 0.0
        %1160 = vst.msk [vmem:[#allocation2 + $0x188] sm:$0xff] %vm1036, 0.0
        %1161 = vst.msk [vmem:[#allocation2 + $0x190] sm:$0xff] %vm1036, 0.0
        %1162 = vst.msk [vmem:[#allocation2 + $0x198] sm:$0xff] %vm1036, 0.0
        %1163 = vst.msk [vmem:[#allocation2 + $0x1a0] sm:$0xff] %vm1036, 0.0
        %1164 = vst.msk [vmem:[#allocation2 + $0x1a8] sm:$0xff] %vm1036, 0.0
        %1165 = vst.msk [vmem:[#allocation2 + $0x1b0] sm:$0xff] %vm1036, 0.0
        %1166 = vst.msk [vmem:[#allocation2 + $0x1b8] sm:$0xff] %vm1036, 0.0
        %1167 = vst.msk [vmem:[#allocation2 + $0x1c0] sm:$0xff] %vm1036, 0.0
        %1168 = vst.msk [vmem:[#allocation2 + $0x1c8] sm:$0xff] %vm1036, 0.0
        %1169 = vst.msk [vmem:[#allocation2 + $0x1d0] sm:$0xff] %vm1036, 0.0
        %1170 = vst.msk [vmem:[#allocation2 + $0x1d8] sm:$0xff] %vm1036, 0.0
        %1171 = vst.msk [vmem:[#allocation2 + $0x1e0] sm:$0xff] %vm1036, 0.0
        %1172 = vst.msk [vmem:[#allocation2 + $0x1e8] sm:$0xff] %vm1036, 0.0
        %1173 = vst.msk [vmem:[#allocation2 + $0x1f0] sm:$0xff] %vm1036, 0.0
        %1174 = vst.msk [vmem:[#allocation2 + $0x1f8] sm:$0xff] %vm1036, 0.0
        %1175 = vst.msk [vmem:[#allocation2 + $0x200] sm:$0xff] %vm1036, 0.0
        %1176 = vst.msk [vmem:[#allocation2 + $0x208] sm:$0xff] %vm1036, 0.0
        %1177 = vst.msk [vmem:[#allocation2 + $0x210] sm:$0xff] %vm1036, 0.0
        %1178 = vst.msk [vmem:[#allocation2 + $0x218] sm:$0xff] %vm1036, 0.0
        %1179 = vst.msk [vmem:[#allocation2 + $0x220] sm:$0xff] %vm1036, 0.0
        %1180 = vst.msk [vmem:[#allocation2 + $0x228] sm:$0xff] %vm1036, 0.0
        %1181 = vst.msk [vmem:[#allocation2 + $0x230] sm:$0xff] %vm1036, 0.0
        %1182 = vst.msk [vmem:[#allocation2 + $0x238] sm:$0xff] %vm1036, 0.0
        %1183 = vst.msk [vmem:[#allocation3] sm:$0xff] %vm1036, 0.0
        %1184 = vst.msk [vmem:[#allocation3 + $0x8] sm:$0xff] %vm1036, 0.0
        %1185 = vst.msk [vmem:[#allocation3 + $0x10] sm:$0xff] %vm1036, 0.0
        %1186 = vst.msk [vmem:[#allocation3 + $0x18] sm:$0xff] %vm1036, 0.0
        %1187 = vst.msk [vmem:[#allocation3 + $0x20] sm:$0xff] %vm1036, 0.0
        %1188 = vst.msk [vmem:[#allocation3 + $0x28] sm:$0xff] %vm1036, 0.0
        %1189 = vst.msk [vmem:[#allocation3 + $0x30] sm:$0xff] %vm1036, 0.0
        %1190 = vst.msk [vmem:[#allocation3 + $0x38] sm:$0xff] %vm1036, 0.0
        %1191 = vst.msk [vmem:[#allocation3 + $0x40] sm:$0xff] %vm1036, 0.0
        %1192 = vst.msk [vmem:[#allocation3 + $0x48] sm:$0xff] %vm1036, 0.0
        %1193 = vst.msk [vmem:[#allocation3 + $0x50] sm:$0xff] %vm1036, 0.0
        %1194 = vst.msk [vmem:[#allocation3 + $0x58] sm:$0xff] %vm1036, 0.0
        %1195 = vst.msk [vmem:[#allocation3 + $0x60] sm:$0xff] %vm1036, 0.0
        %1196 = vst.msk [vmem:[#allocation3 + $0x68] sm:$0xff] %vm1036, 0.0
        %1197 = vst.msk [vmem:[#allocation3 + $0x70] sm:$0xff] %vm1036, 0.0
        %1198 = vst.msk [vmem:[#allocation3 + $0x78] sm:$0xff] %vm1036, 0.0
        %1199 = vst.msk [vmem:[#allocation3 + $0x80] sm:$0xff] %vm1036, 0.0
        %1200 = vst.msk [vmem:[#allocation3 + $0x88] sm:$0xff] %vm1036, 0.0
        %1201 = vst.msk [vmem:[#allocation3 + $0x90] sm:$0xff] %vm1036, 0.0
        %1202 = vst.msk [vmem:[#allocation3 + $0x98] sm:$0xff] %vm1036, 0.0
        %1203 = vst.msk [vmem:[#allocation3 + $0xa0] sm:$0xff] %vm1036, 0.0
        %1204 = vst.msk [vmem:[#allocation3 + $0xa8] sm:$0xff] %vm1036, 0.0
        %1205 = vst.msk [vmem:[#allocation3 + $0xb0] sm:$0xff] %vm1036, 0.0
        %1206 = vst.msk [vmem:[#allocation3 + $0xb8] sm:$0xff] %vm1036, 0.0
        %1207 = vst.msk [vmem:[#allocation3 + $0xc0] sm:$0xff] %vm1036, 0.0
        %1208 = vst.msk [vmem:[#allocation3 + $0xc8] sm:$0xff] %vm1036, 0.0
        %1209 = vst.msk [vmem:[#allocation3 + $0xd0] sm:$0xff] %vm1036, 0.0
        %1210 = vst.msk [vmem:[#allocation3 + $0xd8] sm:$0xff] %vm1036, 0.0
        %1211 = vst.msk [vmem:[#allocation3 + $0xe0] sm:$0xff] %vm1036, 0.0
        %1212 = vst.msk [vmem:[#allocation3 + $0xe8] sm:$0xff] %vm1036, 0.0
        %1213 = vst.msk [vmem:[#allocation3 + $0xf0] sm:$0xff] %vm1036, 0.0
        %1214 = vst.msk [vmem:[#allocation3 + $0xf8] sm:$0xff] %vm1036, 0.0
        %1215 = vst.msk [vmem:[#allocation3 + $0x100] sm:$0xff] %vm1036, 0.0
        %1216 = vst.msk [vmem:[#allocation3 + $0x108] sm:$0xff] %vm1036, 0.0
        %1217 = vst.msk [vmem:[#allocation3 + $0x110] sm:$0xff] %vm1036, 0.0
        %1218 = vst.msk [vmem:[#allocation3 + $0x118] sm:$0xff] %vm1036, 0.0
        %1219 = vst.msk [vmem:[#allocation3 + $0x120] sm:$0xff] %vm1036, 0.0
        %1220 = vst.msk [vmem:[#allocation3 + $0x128] sm:$0xff] %vm1036, 0.0
        %1221 = vst.msk [vmem:[#allocation3 + $0x130] sm:$0xff] %vm1036, 0.0
        %1222 = vst.msk [vmem:[#allocation3 + $0x138] sm:$0xff] %vm1036, 0.0
        %1223 = vst.msk [vmem:[#allocation3 + $0x140] sm:$0xff] %vm1036, 0.0
        %1224 = vst.msk [vmem:[#allocation3 + $0x148] sm:$0xff] %vm1036, 0.0
        %1225 = vst.msk [vmem:[#allocation3 + $0x150] sm:$0xff] %vm1036, 0.0
        %1226 = vst.msk [vmem:[#allocation3 + $0x158] sm:$0xff] %vm1036, 0.0
        %1227 = vst.msk [vmem:[#allocation3 + $0x160] sm:$0xff] %vm1036, 0.0
        %1228 = vst.msk [vmem:[#allocation3 + $0x168] sm:$0xff] %vm1036, 0.0
        %1229 = vst.msk [vmem:[#allocation3 + $0x170] sm:$0xff] %vm1036, 0.0
        %1230 = vst.msk [vmem:[#allocation3 + $0x178] sm:$0xff] %vm1036, 0.0
        %1231 = vst.msk [vmem:[#allocation3 + $0x180] sm:$0xff] %vm1036, 0.0
        %1232 = vst.msk [vmem:[#allocation3 + $0x188] sm:$0xff] %vm1036, 0.0
        %1233 = vst.msk [vmem:[#allocation3 + $0x190] sm:$0xff] %vm1036, 0.0
        %1234 = vst.msk [vmem:[#allocation3 + $0x198] sm:$0xff] %vm1036, 0.0
        %1235 = vst.msk [vmem:[#allocation3 + $0x1a0] sm:$0xff] %vm1036, 0.0
        %1236 = vst.msk [vmem:[#allocation3 + $0x1a8] sm:$0xff] %vm1036, 0.0
        %1237 = vst.msk [vmem:[#allocation3 + $0x1b0] sm:$0xff] %vm1036, 0.0
        %1238 = vst.msk [vmem:[#allocation3 + $0x1b8] sm:$0xff] %vm1036, 0.0
        %1239 = vst.msk [vmem:[#allocation3 + $0x1c0] sm:$0xff] %vm1036, 0.0
        %1240 = vst.msk [vmem:[#allocation3 + $0x1c8] sm:$0xff] %vm1036, 0.0
        %1241 = vst.msk [vmem:[#allocation3 + $0x1d0] sm:$0xff] %vm1036, 0.0
        %1242 = vst.msk [vmem:[#allocation3 + $0x1d8] sm:$0xff] %vm1036, 0.0
        %1243 = vst.msk [vmem:[#allocation3 + $0x1e0] sm:$0xff] %vm1036, 0.0
        %1244 = vst.msk [vmem:[#allocation3 + $0x1e8] sm:$0xff] %vm1036, 0.0
        %1245 = vst.msk [vmem:[#allocation3 + $0x1f0] sm:$0xff] %vm1036, 0.0
        %1246 = vst.msk [vmem:[#allocation3 + $0x1f8] sm:$0xff] %vm1036, 0.0
        %1247 = vst.msk [vmem:[#allocation3 + $0x200] sm:$0xff] %vm1036, 0.0
        %1248 = vst.msk [vmem:[#allocation3 + $0x208] sm:$0xff] %vm1036, 0.0
        %1249 = vst.msk [vmem:[#allocation3 + $0x210] sm:$0xff] %vm1036, 0.0
        %1250 = vst.msk [vmem:[#allocation3 + $0x218] sm:$0xff] %vm1036, 0.0
        %1251 = vst.msk [vmem:[#allocation3 + $0x220] sm:$0xff] %vm1036, 0.0
        %1252 = vst.msk [vmem:[#allocation3 + $0x228] sm:$0xff] %vm1036, 0.0
        %1253 = vst.msk [vmem:[#allocation3 + $0x230] sm:$0xff] %vm1036, 0.0
        %1254 = vst.msk [vmem:[#allocation3 + $0x238] sm:$0xff] %vm1036, 0.0
        %1255 = vst.msk [vmem:[#allocation2 + $0x8] sm:$0xff] %vm1036, %v900
        %1256 = vst.msk [vmem:[#allocation2 + $0x10] sm:$0xff] %vm1036, %v901
        %1257 = vst.msk [vmem:[#allocation2 + $0x28] sm:$0xff] %vm1036, %v902
        %1258 = vst.msk [vmem:[#allocation2 + $0x30] sm:$0xff] %vm1036, %v903
        %1259 = vst.msk [vmem:[#allocation2 + $0x48] sm:$0xff] %vm1036, %v904
        %1260 = vst.msk [vmem:[#allocation2 + $0x50] sm:$0xff] %vm1036, %v905
        %1261 = vst.msk [vmem:[#allocation2 + $0x68] sm:$0xff] %vm1036, %v906
        %1262 = vst.msk [vmem:[#allocation2 + $0x70] sm:$0xff] %vm1036, %v907
        %1263 = vst.msk [vmem:[#allocation2 + $0x88] sm:$0xff] %vm1036, %v908
        %1264 = vst.msk [vmem:[#allocation2 + $0x90] sm:$0xff] %vm1036, %v909
        %1265 = vst.msk [vmem:[#allocation2 + $0xa8] sm:$0xff] %vm1036, %v910
        %1266 = vst.msk [vmem:[#allocation2 + $0xb0] sm:$0xff] %vm1036, %v911
        %1267 = vst.msk [vmem:[#allocation2 + $0xc8] sm:$0xff] %vm1036, %v912
        %1268 = vst.msk [vmem:[#allocation2 + $0xd0] sm:$0xff] %vm1036, %v913
        %1269 = vst.msk [vmem:[#allocation2 + $0xe8] sm:$0xff] %vm1036, %v914
        %1270 = vst.msk [vmem:[#allocation2 + $0xf0] sm:$0xff] %vm1036, %v915
        %1271 = vst.msk [vmem:[#allocation2 + $0x108] sm:$0xff] %vm1036, %v916
        %1272 = vst.msk [vmem:[#allocation2 + $0x110] sm:$0xff] %vm1036, %v917
        %1273 = vst.msk [vmem:[#allocation2 + $0x128] sm:$0xff] %vm1036, %v918
        %1274 = vst.msk [vmem:[#allocation2 + $0x130] sm:$0xff] %vm1036, %v919
        %1275 = vst.msk [vmem:[#allocation2 + $0x148] sm:$0xff] %vm1036, %v920
        %1276 = vst.msk [vmem:[#allocation2 + $0x150] sm:$0xff] %vm1036, %v921
        %1277 = vst.msk [vmem:[#allocation2 + $0x168] sm:$0xff] %vm1036, %v922
        %1278 = vst.msk [vmem:[#allocation2 + $0x170] sm:$0xff] %vm1036, %v923
        %1279 = vst.msk [vmem:[#allocation2 + $0x188] sm:$0xff] %vm1036, %v924
        %1280 = vst.msk [vmem:[#allocation2 + $0x190] sm:$0xff] %vm1036, %v925
        %1281 = vst.msk [vmem:[#allocation2 + $0x1a8] sm:$0xff] %vm1036, %v926
        %1282 = vst.msk [vmem:[#allocation2 + $0x1b0] sm:$0xff] %vm1036, %v927
        %1283 = vst.msk [vmem:[#allocation2 + $0x1c8] sm:$0xff] %vm1036, %v928
        %1284 = vst.msk [vmem:[#allocation2 + $0x1d0] sm:$0xff] %vm1036, %v929
        %1285 = vst.msk [vmem:[#allocation2 + $0x1e8] sm:$0xff] %vm1036, %v930
        %1286 = vst.msk [vmem:[#allocation2 + $0x1f0] sm:$0xff] %vm1036, %v931
        %1287 = vst.msk [vmem:[#allocation2 + $0x208] sm:$0xff] %vm1036, %v932
        %1288 = vst.msk [vmem:[#allocation2 + $0x210] sm:$0xff] %vm1036, %v933
        %1289 = vst.msk [vmem:[#allocation2 + $0x228] sm:$0xff] %vm1036, %v934
        %1290 = vst.msk [vmem:[#allocation2 + $0x230] sm:$0xff] %vm1036, %v935
        %1291 = vst.msk [vmem:[#allocation3 + $0x8] sm:$0xff] %vm1036, %v936
        %1292 = vst.msk [vmem:[#allocation3 + $0x10] sm:$0xff] %vm1036, %v937
        %1293 = vst.msk [vmem:[#allocation3 + $0x28] sm:$0xff] %vm1036, %v938
        %1294 = vst.msk [vmem:[#allocation3 + $0x30] sm:$0xff] %vm1036, %v939
        %1295 = vst.msk [vmem:[#allocation3 + $0x48] sm:$0xff] %vm1036, %v940
        %1296 = vst.msk [vmem:[#allocation3 + $0x50] sm:$0xff] %vm1036, %v941
        %1297 = vst.msk [vmem:[#allocation3 + $0x68] sm:$0xff] %vm1036, %v942
        %1298 = vst.msk [vmem:[#allocation3 + $0x70] sm:$0xff] %vm1036, %v943
        %1299 = vst.msk [vmem:[#allocation3 + $0x88] sm:$0xff] %vm1036, %v944
        %1300 = vst.msk [vmem:[#allocation3 + $0x90] sm:$0xff] %vm1036, %v945
        %1301 = vst.msk [vmem:[#allocation3 + $0xa8] sm:$0xff] %vm1036, %v946
        %1302 = vst.msk [vmem:[#allocation3 + $0xb0] sm:$0xff] %vm1036, %v947
        %1303 = vst.msk [vmem:[#allocation3 + $0xc8] sm:$0xff] %vm1036, %v948
        %1304 = vst.msk [vmem:[#allocation3 + $0xd0] sm:$0xff] %vm1036, %v949
        %1305 = vst.msk [vmem:[#allocation3 + $0xe8] sm:$0xff] %vm1036, %v950
        %1306 = vst.msk [vmem:[#allocation3 + $0xf0] sm:$0xff] %vm1036, %v951
        %1307 = vst.msk [vmem:[#allocation3 + $0x108] sm:$0xff] %vm1036, %v952
        %1308 = vst.msk [vmem:[#allocation3 + $0x110] sm:$0xff] %vm1036, %v953
        %1309 = vst.msk [vmem:[#allocation3 + $0x128] sm:$0xff] %vm1036, %v954
        %1310 = vst.msk [vmem:[#allocation3 + $0x130] sm:$0xff] %vm1036, %v955
        %1311 = vst.msk [vmem:[#allocation3 + $0x148] sm:$0xff] %vm1036, %v956
        %1312 = vst.msk [vmem:[#allocation3 + $0x150] sm:$0xff] %vm1036, %v957
        %1313 = vst.msk [vmem:[#allocation3 + $0x168] sm:$0xff] %vm1036, %v958
        %1314 = vst.msk [vmem:[#allocation3 + $0x170] sm:$0xff] %vm1036, %v959
        %1315 = vst.msk [vmem:[#allocation3 + $0x188] sm:$0xff] %vm1036, %v960
        %1316 = vst.msk [vmem:[#allocation3 + $0x190] sm:$0xff] %vm1036, %v961
        %1317 = vst.msk [vmem:[#allocation3 + $0x1a8] sm:$0xff] %vm1036, %v962
        %1318 = vst.msk [vmem:[#allocation3 + $0x1b0] sm:$0xff] %vm1036, %v963
        %1319 = vst.msk [vmem:[#allocation3 + $0x1c8] sm:$0xff] %vm1036, %v964
        %1320 = vst.msk [vmem:[#allocation3 + $0x1d0] sm:$0xff] %vm1036, %v965
        %1321 = vst.msk [vmem:[#allocation3 + $0x1e8] sm:$0xff] %vm1036, %v966
        %1322 = vst.msk [vmem:[#allocation3 + $0x1f0] sm:$0xff] %vm1036, %v967
        %1323 = vst.msk [vmem:[#allocation3 + $0x208] sm:$0xff] %vm1036, %v968
        %1324 = vst.msk [vmem:[#allocation3 + $0x210] sm:$0xff] %vm1036, %v969
        %1325 = vst.msk [vmem:[#allocation3 + $0x228] sm:$0xff] %vm1036, %v970
        %1326 = vst.msk [vmem:[#allocation3 + $0x230] sm:$0xff] %vm1036, %v971
        // Predicated region
        $region53: #{tpu_custom_call.1} parent=43 // pred_check
          %p1327 = pneg %p303
        $region54: #{tpu_custom_call.1} parent=43 // pred_check_branch
          %1329 = sbr.rel (%p1327) target = $region56
        $region55: #{tpu_custom_call.1} parent=43 // pred_region
          %1330 = vst.msk [vmem:[#allocation2] sm:$0xff] %vm1036, 0.0
          %1331 = vst.msk [vmem:[#allocation2 + $0x8] sm:$0xff] %vm1036, 0.0
          %1332 = vst.msk [vmem:[#allocation2 + $0x10] sm:$0xff] %vm1036, 0.0
          %1333 = vst.msk [vmem:[#allocation2 + $0x18] sm:$0xff] %vm1036, 0.0
          %1334 = vst.msk [vmem:[#allocation3] sm:$0xff] %vm1036, 0.0
          %1335 = vst.msk [vmem:[#allocation3 + $0x8] sm:$0xff] %vm1036, 0.0
          %1336 = vst.msk [vmem:[#allocation3 + $0x10] sm:$0xff] %vm1036, 0.0
          %1337 = vst.msk [vmem:[#allocation3 + $0x18] sm:$0xff] %vm1036, 0.0
          %s1338 = scalar_lea.vmem [#allocation2], 544
          %1339 = vst.msk [vmem:[%s1338] sm:$0xff] %vm1036, 0.0
          %1340 = vst.msk [vmem:[%s1338 + $0x8] sm:$0xff] %vm1036, 0.0
          %1341 = vst.msk [vmem:[%s1338 + $0x10] sm:$0xff] %vm1036, 0.0
          %1342 = vst.msk [vmem:[%s1338 + $0x18] sm:$0xff] %vm1036, 0.0
          %s1343 = scalar_lea.vmem [#allocation3], 544
          %1344 = vst.msk [vmem:[%s1343] sm:$0xff] %vm1036, 0.0
          %1345 = vst.msk [vmem:[%s1343 + $0x8] sm:$0xff] %vm1036, 0.0
          %1346 = vst.msk [vmem:[%s1343 + $0x10] sm:$0xff] %vm1036, 0.0
          %1347 = vst.msk [vmem:[%s1343 + $0x18] sm:$0xff] %vm1036, 0.0
        $region56: #{tpu_custom_call.1} parent=43 // pred_fallthru
          _
        %v1348 = vld [vmem:[#allocation2 + $0x7] sm:$0xff]
        %v1349 = vld [vmem:[#allocation2 + $0xf] sm:$0xff]
        %v1350 = vld [vmem:[#allocation2 + $0x27] sm:$0xff]
        %v1351 = vld [vmem:[#allocation2 + $0x2f] sm:$0xff]
        %v1352 = vld [vmem:[#allocation2 + $0x47] sm:$0xff]
        %v1353 = vld [vmem:[#allocation2 + $0x4f] sm:$0xff]
        %v1354 = vld [vmem:[#allocation2 + $0x67] sm:$0xff]
        %v1355 = vld [vmem:[#allocation2 + $0x6f] sm:$0xff]
        %v1356 = vld [vmem:[#allocation2 + $0x87] sm:$0xff]
        %v1357 = vld [vmem:[#allocation2 + $0x8f] sm:$0xff]
        %v1358 = vld [vmem:[#allocation2 + $0xa7] sm:$0xff]
        %v1359 = vld [vmem:[#allocation2 + $0xaf] sm:$0xff]
        %v1360 = vld [vmem:[#allocation2 + $0xc7] sm:$0xff]
        %v1361 = vld [vmem:[#allocation2 + $0xcf] sm:$0xff]
        %v1362 = vld [vmem:[#allocation2 + $0xe7] sm:$0xff]
        %v1363 = vld [vmem:[#allocation2 + $0xef] sm:$0xff]
        %v1364 = vld [vmem:[#allocation2 + $0x107] sm:$0xff]
        %v1365 = vld [vmem:[#allocation2 + $0x10f] sm:$0xff]
        %v1366 = vld [vmem:[#allocation2 + $0x127] sm:$0xff]
        %v1367 = vld [vmem:[#allocation2 + $0x12f] sm:$0xff]
        %v1368 = vld [vmem:[#allocation2 + $0x147] sm:$0xff]
        %v1369 = vld [vmem:[#allocation2 + $0x14f] sm:$0xff]
        %v1370 = vld [vmem:[#allocation2 + $0x167] sm:$0xff]
        %v1371 = vld [vmem:[#allocation2 + $0x16f] sm:$0xff]
        %v1372 = vld [vmem:[#allocation2 + $0x187] sm:$0xff]
        %v1373 = vld [vmem:[#allocation2 + $0x18f] sm:$0xff]
        %v1374 = vld [vmem:[#allocation2 + $0x1a7] sm:$0xff]
        %v1375 = vld [vmem:[#allocation2 + $0x1af] sm:$0xff]
        %v1376 = vld [vmem:[#allocation2 + $0x1c7] sm:$0xff]
        %v1377 = vld [vmem:[#allocation2 + $0x1cf] sm:$0xff]
        %v1378 = vld [vmem:[#allocation2 + $0x1e7] sm:$0xff]
        %v1379 = vld [vmem:[#allocation2 + $0x1ef] sm:$0xff]
        %v1380 = vpack.c.bf16 %v1348, %v1348
        %v1381 = vpack.c.bf16 %v1349, %v1349
        %v1382 = vpack.c.bf16 %v1350, %v1350
        %v1383 = vpack.c.bf16 %v1351, %v1351
        %v1384 = vpack.c.bf16 %v1352, %v1352
        %v1385 = vpack.c.bf16 %v1353, %v1353
        %v1386 = vpack.c.bf16 %v1354, %v1354
        %v1387 = vpack.c.bf16 %v1355, %v1355
        %v1388 = vpack.c.bf16 %v1356, %v1356
        %v1389 = vpack.c.bf16 %v1357, %v1357
        %v1390 = vpack.c.bf16 %v1358, %v1358
        %v1391 = vpack.c.bf16 %v1359, %v1359
        %v1392 = vpack.c.bf16 %v1360, %v1360
        %v1393 = vpack.c.bf16 %v1361, %v1361
        %v1394 = vpack.c.bf16 %v1362, %v1362
        %v1395 = vpack.c.bf16 %v1363, %v1363
        %v1396 = vpack.c.bf16 %v1364, %v1364
        %v1397 = vpack.c.bf16 %v1365, %v1365
        %v1398 = vpack.c.bf16 %v1366, %v1366
        %v1399 = vpack.c.bf16 %v1367, %v1367
        %v1400 = vpack.c.bf16 %v1368, %v1368
        %v1401 = vpack.c.bf16 %v1369, %v1369
        %v1402 = vpack.c.bf16 %v1370, %v1370
        %v1403 = vpack.c.bf16 %v1371, %v1371
        %v1404 = vpack.c.bf16 %v1372, %v1372
        %v1405 = vpack.c.bf16 %v1373, %v1373
        %v1406 = vpack.c.bf16 %v1374, %v1374
        %v1407 = vpack.c.bf16 %v1375, %v1375
        %v1408 = vpack.c.bf16 %v1376, %v1376
        %v1409 = vpack.c.bf16 %v1377, %v1377
        %v1410 = vpack.c.bf16 %v1378, %v1378
        %v1411 = vpack.c.bf16 %v1379, %v1379
        %v1412 = vld [vmem:[#allocation2 + $0x8] sm:$0xff]
        %v1413 = vld [vmem:[#allocation2 + $0x10] sm:$0xff]
        %v1414 = vld [vmem:[#allocation2 + $0x28] sm:$0xff]
        %v1415 = vld [vmem:[#allocation2 + $0x30] sm:$0xff]
        %v1416 = vld [vmem:[#allocation2 + $0x48] sm:$0xff]
        %v1417 = vld [vmem:[#allocation2 + $0x50] sm:$0xff]
        %v1418 = vld [vmem:[#allocation2 + $0x68] sm:$0xff]
        %v1419 = vld [vmem:[#allocation2 + $0x70] sm:$0xff]
        %v1420 = vld [vmem:[#allocation2 + $0x88] sm:$0xff]
        %v1421 = vld [vmem:[#allocation2 + $0x90] sm:$0xff]
        %v1422 = vld [vmem:[#allocation2 + $0xa8] sm:$0xff]
        %v1423 = vld [vmem:[#allocation2 + $0xb0] sm:$0xff]
        %v1424 = vld [vmem:[#allocation2 + $0xc8] sm:$0xff]
        %v1425 = vld [vmem:[#allocation2 + $0xd0] sm:$0xff]
        %v1426 = vld [vmem:[#allocation2 + $0xe8] sm:$0xff]
        %v1427 = vld [vmem:[#allocation2 + $0xf0] sm:$0xff]
        %v1428 = vld [vmem:[#allocation2 + $0x108] sm:$0xff]
        %v1429 = vld [vmem:[#allocation2 + $0x110] sm:$0xff]
        %v1430 = vld [vmem:[#allocation2 + $0x128] sm:$0xff]
        %v1431 = vld [vmem:[#allocation2 + $0x130] sm:$0xff]
        %v1432 = vld [vmem:[#allocation2 + $0x148] sm:$0xff]
        %v1433 = vld [vmem:[#allocation2 + $0x150] sm:$0xff]
        %v1434 = vld [vmem:[#allocation2 + $0x168] sm:$0xff]
        %v1435 = vld [vmem:[#allocation2 + $0x170] sm:$0xff]
        %v1436 = vld [vmem:[#allocation2 + $0x188] sm:$0xff]
        %v1437 = vld [vmem:[#allocation2 + $0x190] sm:$0xff]
        %v1438 = vld [vmem:[#allocation2 + $0x1a8] sm:$0xff]
        %v1439 = vld [vmem:[#allocation2 + $0x1b0] sm:$0xff]
        %v1440 = vld [vmem:[#allocation2 + $0x1c8] sm:$0xff]
        %v1441 = vld [vmem:[#allocation2 + $0x1d0] sm:$0xff]
        %v1442 = vld [vmem:[#allocation2 + $0x1e8] sm:$0xff]
        %v1443 = vld [vmem:[#allocation2 + $0x1f0] sm:$0xff]
        %v1444 = vpack.c.bf16 %v1412, %v1412
        %v1445 = vpack.c.bf16 %v1413, %v1413
        %v1446 = vpack.c.bf16 %v1414, %v1414
        %v1447 = vpack.c.bf16 %v1415, %v1415
        %v1448 = vpack.c.bf16 %v1416, %v1416
        %v1449 = vpack.c.bf16 %v1417, %v1417
        %v1450 = vpack.c.bf16 %v1418, %v1418
        %v1451 = vpack.c.bf16 %v1419, %v1419
        %v1452 = vpack.c.bf16 %v1420, %v1420
        %v1453 = vpack.c.bf16 %v1421, %v1421
        %v1454 = vpack.c.bf16 %v1422, %v1422
        %v1455 = vpack.c.bf16 %v1423, %v1423
        %v1456 = vpack.c.bf16 %v1424, %v1424
        %v1457 = vpack.c.bf16 %v1425, %v1425
        %v1458 = vpack.c.bf16 %v1426, %v1426
        %v1459 = vpack.c.bf16 %v1427, %v1427
        %v1460 = vpack.c.bf16 %v1428, %v1428
        %v1461 = vpack.c.bf16 %v1429, %v1429
        %v1462 = vpack.c.bf16 %v1430, %v1430
        %v1463 = vpack.c.bf16 %v1431, %v1431
        %v1464 = vpack.c.bf16 %v1432, %v1432
        %v1465 = vpack.c.bf16 %v1433, %v1433
        %v1466 = vpack.c.bf16 %v1434, %v1434
        %v1467 = vpack.c.bf16 %v1435, %v1435
        %v1468 = vpack.c.bf16 %v1436, %v1436
        %v1469 = vpack.c.bf16 %v1437, %v1437
        %v1470 = vpack.c.bf16 %v1438, %v1438
        %v1471 = vpack.c.bf16 %v1439, %v1439
        %v1472 = vpack.c.bf16 %v1440, %v1440
        %v1473 = vpack.c.bf16 %v1441, %v1441
        %v1474 = vpack.c.bf16 %v1442, %v1442
        %v1475 = vpack.c.bf16 %v1443, %v1443
        %v1476 = vld [vmem:[#allocation2 + $0x9] sm:$0xff]
        %v1477 = vld [vmem:[#allocation2 + $0x11] sm:$0xff]
        %v1478 = vld [vmem:[#allocation2 + $0x29] sm:$0xff]
        %v1479 = vld [vmem:[#allocation2 + $0x31] sm:$0xff]
        %v1480 = vld [vmem:[#allocation2 + $0x49] sm:$0xff]
        %v1481 = vld [vmem:[#allocation2 + $0x51] sm:$0xff]
        %v1482 = vld [vmem:[#allocation2 + $0x69] sm:$0xff]
        %v1483 = vld [vmem:[#allocation2 + $0x71] sm:$0xff]
        %v1484 = vld [vmem:[#allocation2 + $0x89] sm:$0xff]
        %v1485 = vld [vmem:[#allocation2 + $0x91] sm:$0xff]
        %v1486 = vld [vmem:[#allocation2 + $0xa9] sm:$0xff]
        %v1487 = vld [vmem:[#allocation2 + $0xb1] sm:$0xff]
        %v1488 = vld [vmem:[#allocation2 + $0xc9] sm:$0xff]
        %v1489 = vld [vmem:[#allocation2 + $0xd1] sm:$0xff]
        %v1490 = vld [vmem:[#allocation2 + $0xe9] sm:$0xff]
        %v1491 = vld [vmem:[#allocation2 + $0xf1] sm:$0xff]
        %v1492 = vld [vmem:[#allocation2 + $0x109] sm:$0xff]
        %v1493 = vld [vmem:[#allocation2 + $0x111] sm:$0xff]
        %v1494 = vld [vmem:[#allocation2 + $0x129] sm:$0xff]
        %v1495 = vld [vmem:[#allocation2 + $0x131] sm:$0xff]
        %v1496 = vld [vmem:[#allocation2 + $0x149] sm:$0xff]
        %v1497 = vld [vmem:[#allocation2 + $0x151] sm:$0xff]
        %v1498 = vld [vmem:[#allocation2 + $0x169] sm:$0xff]
        %v1499 = vld [vmem:[#allocation2 + $0x171] sm:$0xff]
        %v1500 = vld [vmem:[#allocation2 + $0x189] sm:$0xff]
        %v1501 = vld [vmem:[#allocation2 + $0x191] sm:$0xff]
        %v1502 = vld [vmem:[#allocation2 + $0x1a9] sm:$0xff]
        %v1503 = vld [vmem:[#allocation2 + $0x1b1] sm:$0xff]
        %v1504 = vld [vmem:[#allocation2 + $0x1c9] sm:$0xff]
        %v1505 = vld [vmem:[#allocation2 + $0x1d1] sm:$0xff]
        %v1506 = vld [vmem:[#allocation2 + $0x1e9] sm:$0xff]
        %v1507 = vld [vmem:[#allocation2 + $0x1f1] sm:$0xff]
        %v1508 = vpack.c.bf16 %v1476, %v1476
        %v1509 = vpack.c.bf16 %v1477, %v1477
        %v1510 = vpack.c.bf16 %v1478, %v1478
        %v1511 = vpack.c.bf16 %v1479, %v1479
        %v1512 = vpack.c.bf16 %v1480, %v1480
        %v1513 = vpack.c.bf16 %v1481, %v1481
        %v1514 = vpack.c.bf16 %v1482, %v1482
        %v1515 = vpack.c.bf16 %v1483, %v1483
        %v1516 = vpack.c.bf16 %v1484, %v1484
        %v1517 = vpack.c.bf16 %v1485, %v1485
        %v1518 = vpack.c.bf16 %v1486, %v1486
        %v1519 = vpack.c.bf16 %v1487, %v1487
        %v1520 = vpack.c.bf16 %v1488, %v1488
        %v1521 = vpack.c.bf16 %v1489, %v1489
        %v1522 = vpack.c.bf16 %v1490, %v1490
        %v1523 = vpack.c.bf16 %v1491, %v1491
        %v1524 = vpack.c.bf16 %v1492, %v1492
        %v1525 = vpack.c.bf16 %v1493, %v1493
        %v1526 = vpack.c.bf16 %v1494, %v1494
        %v1527 = vpack.c.bf16 %v1495, %v1495
        %v1528 = vpack.c.bf16 %v1496, %v1496
        %v1529 = vpack.c.bf16 %v1497, %v1497
        %v1530 = vpack.c.bf16 %v1498, %v1498
        %v1531 = vpack.c.bf16 %v1499, %v1499
        %v1532 = vpack.c.bf16 %v1500, %v1500
        %v1533 = vpack.c.bf16 %v1501, %v1501
        %v1534 = vpack.c.bf16 %v1502, %v1502
        %v1535 = vpack.c.bf16 %v1503, %v1503
        %v1536 = vpack.c.bf16 %v1504, %v1504
        %v1537 = vpack.c.bf16 %v1505, %v1505
        %v1538 = vpack.c.bf16 %v1506, %v1506
        %v1539 = vpack.c.bf16 %v1507, %v1507
        %s1540 = scalar_lea.vmem [#allocation2], 32
        %v1541 = vld [vmem:[%s1540 + $0x7] sm:$0xff]
        %v1542 = vld [vmem:[%s1540 + $0xf] sm:$0xff]
        %v1543 = vld [vmem:[%s1540 + $0x27] sm:$0xff]
        %v1544 = vld [vmem:[%s1540 + $0x2f] sm:$0xff]
        %v1545 = vld [vmem:[%s1540 + $0x47] sm:$0xff]
        %v1546 = vld [vmem:[%s1540 + $0x4f] sm:$0xff]
        %v1547 = vld [vmem:[%s1540 + $0x67] sm:$0xff]
        %v1548 = vld [vmem:[%s1540 + $0x6f] sm:$0xff]
        %v1549 = vld [vmem:[%s1540 + $0x87] sm:$0xff]
        %v1550 = vld [vmem:[%s1540 + $0x8f] sm:$0xff]
        %v1551 = vld [vmem:[%s1540 + $0xa7] sm:$0xff]
        %v1552 = vld [vmem:[%s1540 + $0xaf] sm:$0xff]
        %v1553 = vld [vmem:[%s1540 + $0xc7] sm:$0xff]
        %v1554 = vld [vmem:[%s1540 + $0xcf] sm:$0xff]
        %v1555 = vld [vmem:[%s1540 + $0xe7] sm:$0xff]
        %v1556 = vld [vmem:[%s1540 + $0xef] sm:$0xff]
        %v1557 = vld [vmem:[%s1540 + $0x107] sm:$0xff]
        %v1558 = vld [vmem:[%s1540 + $0x10f] sm:$0xff]
        %v1559 = vld [vmem:[%s1540 + $0x127] sm:$0xff]
        %v1560 = vld [vmem:[%s1540 + $0x12f] sm:$0xff]
        %v1561 = vld [vmem:[%s1540 + $0x147] sm:$0xff]
        %v1562 = vld [vmem:[%s1540 + $0x14f] sm:$0xff]
        %v1563 = vld [vmem:[%s1540 + $0x167] sm:$0xff]
        %v1564 = vld [vmem:[%s1540 + $0x16f] sm:$0xff]
        %v1565 = vld [vmem:[%s1540 + $0x187] sm:$0xff]
        %v1566 = vld [vmem:[%s1540 + $0x18f] sm:$0xff]
        %v1567 = vld [vmem:[%s1540 + $0x1a7] sm:$0xff]
        %v1568 = vld [vmem:[%s1540 + $0x1af] sm:$0xff]
        %v1569 = vld [vmem:[%s1540 + $0x1c7] sm:$0xff]
        %v1570 = vld [vmem:[%s1540 + $0x1cf] sm:$0xff]
        %v1571 = vld [vmem:[%s1540 + $0x1e7] sm:$0xff]
        %v1572 = vld [vmem:[%s1540 + $0x1ef] sm:$0xff]
        %v1573 = vpack.c.bf16 %v1541, %v1541
        %v1574 = vpack.c.bf16 %v1542, %v1542
        %v1575 = vpack.c.bf16 %v1543, %v1543
        %v1576 = vpack.c.bf16 %v1544, %v1544
        %v1577 = vpack.c.bf16 %v1545, %v1545
        %v1578 = vpack.c.bf16 %v1546, %v1546
        %v1579 = vpack.c.bf16 %v1547, %v1547
        %v1580 = vpack.c.bf16 %v1548, %v1548
        %v1581 = vpack.c.bf16 %v1549, %v1549
        %v1582 = vpack.c.bf16 %v1550, %v1550
        %v1583 = vpack.c.bf16 %v1551, %v1551
        %v1584 = vpack.c.bf16 %v1552, %v1552
        %v1585 = vpack.c.bf16 %v1553, %v1553
        %v1586 = vpack.c.bf16 %v1554, %v1554
        %v1587 = vpack.c.bf16 %v1555, %v1555
        %v1588 = vpack.c.bf16 %v1556, %v1556
        %v1589 = vpack.c.bf16 %v1557, %v1557
        %v1590 = vpack.c.bf16 %v1558, %v1558
        %v1591 = vpack.c.bf16 %v1559, %v1559
        %v1592 = vpack.c.bf16 %v1560, %v1560
        %v1593 = vpack.c.bf16 %v1561, %v1561
        %v1594 = vpack.c.bf16 %v1562, %v1562
        %v1595 = vpack.c.bf16 %v1563, %v1563
        %v1596 = vpack.c.bf16 %v1564, %v1564
        %v1597 = vpack.c.bf16 %v1565, %v1565
        %v1598 = vpack.c.bf16 %v1566, %v1566
        %v1599 = vpack.c.bf16 %v1567, %v1567
        %v1600 = vpack.c.bf16 %v1568, %v1568
        %v1601 = vpack.c.bf16 %v1569, %v1569
        %v1602 = vpack.c.bf16 %v1570, %v1570
        %v1603 = vpack.c.bf16 %v1571, %v1571
        %v1604 = vpack.c.bf16 %v1572, %v1572
        %v1605 = vld [vmem:[%s1540 + $0x8] sm:$0xff]
        %v1606 = vld [vmem:[%s1540 + $0x10] sm:$0xff]
        %v1607 = vld [vmem:[%s1540 + $0x28] sm:$0xff]
        %v1608 = vld [vmem:[%s1540 + $0x30] sm:$0xff]
        %v1609 = vld [vmem:[%s1540 + $0x48] sm:$0xff]
        %v1610 = vld [vmem:[%s1540 + $0x50] sm:$0xff]
        %v1611 = vld [vmem:[%s1540 + $0x68] sm:$0xff]
        %v1612 = vld [vmem:[%s1540 + $0x70] sm:$0xff]
        %v1613 = vld [vmem:[%s1540 + $0x88] sm:$0xff]
        %v1614 = vld [vmem:[%s1540 + $0x90] sm:$0xff]
        %v1615 = vld [vmem:[%s1540 + $0xa8] sm:$0xff]
        %v1616 = vld [vmem:[%s1540 + $0xb0] sm:$0xff]
        %v1617 = vld [vmem:[%s1540 + $0xc8] sm:$0xff]
        %v1618 = vld [vmem:[%s1540 + $0xd0] sm:$0xff]
        %v1619 = vld [vmem:[%s1540 + $0xe8] sm:$0xff]
        %v1620 = vld [vmem:[%s1540 + $0xf0] sm:$0xff]
        %v1621 = vld [vmem:[%s1540 + $0x108] sm:$0xff]
        %v1622 = vld [vmem:[%s1540 + $0x110] sm:$0xff]
        %v1623 = vld [vmem:[%s1540 + $0x128] sm:$0xff]
        %v1624 = vld [vmem:[%s1540 + $0x130] sm:$0xff]
        %v1625 = vld [vmem:[%s1540 + $0x148] sm:$0xff]
        %v1626 = vld [vmem:[%s1540 + $0x150] sm:$0xff]
        %v1627 = vld [vmem:[%s1540 + $0x168] sm:$0xff]
        %v1628 = vld [vmem:[%s1540 + $0x170] sm:$0xff]
        %v1629 = vld [vmem:[%s1540 + $0x188] sm:$0xff]
        %v1630 = vld [vmem:[%s1540 + $0x190] sm:$0xff]
        %v1631 = vld [vmem:[%s1540 + $0x1a8] sm:$0xff]
        %v1632 = vld [vmem:[%s1540 + $0x1b0] sm:$0xff]
        %v1633 = vld [vmem:[%s1540 + $0x1c8] sm:$0xff]
        %v1634 = vld [vmem:[%s1540 + $0x1d0] sm:$0xff]
        %v1635 = vld [vmem:[%s1540 + $0x1e8] sm:$0xff]
        %v1636 = vld [vmem:[%s1540 + $0x1f0] sm:$0xff]
        %v1637 = vpack.c.bf16 %v1605, %v1605
        %v1638 = vpack.c.bf16 %v1606, %v1606
        %v1639 = vpack.c.bf16 %v1607, %v1607
        %v1640 = vpack.c.bf16 %v1608, %v1608
        %v1641 = vpack.c.bf16 %v1609, %v1609
        %v1642 = vpack.c.bf16 %v1610, %v1610
        %v1643 = vpack.c.bf16 %v1611, %v1611
        %v1644 = vpack.c.bf16 %v1612, %v1612
        %v1645 = vpack.c.bf16 %v1613, %v1613
        %v1646 = vpack.c.bf16 %v1614, %v1614
        %v1647 = vpack.c.bf16 %v1615, %v1615
        %v1648 = vpack.c.bf16 %v1616, %v1616
        %v1649 = vpack.c.bf16 %v1617, %v1617
        %v1650 = vpack.c.bf16 %v1618, %v1618
        %v1651 = vpack.c.bf16 %v1619, %v1619
        %v1652 = vpack.c.bf16 %v1620, %v1620
        %v1653 = vpack.c.bf16 %v1621, %v1621
        %v1654 = vpack.c.bf16 %v1622, %v1622
        %v1655 = vpack.c.bf16 %v1623, %v1623
        %v1656 = vpack.c.bf16 %v1624, %v1624
        %v1657 = vpack.c.bf16 %v1625, %v1625
        %v1658 = vpack.c.bf16 %v1626, %v1626
        %v1659 = vpack.c.bf16 %v1627, %v1627
        %v1660 = vpack.c.bf16 %v1628, %v1628
        %v1661 = vpack.c.bf16 %v1629, %v1629
        %v1662 = vpack.c.bf16 %v1630, %v1630
        %v1663 = vpack.c.bf16 %v1631, %v1631
        %v1664 = vpack.c.bf16 %v1632, %v1632
        %v1665 = vpack.c.bf16 %v1633, %v1633
        %v1666 = vpack.c.bf16 %v1634, %v1634
        %v1667 = vpack.c.bf16 %v1635, %v1635
        %v1668 = vpack.c.bf16 %v1636, %v1636
        %v1669 = vld [vmem:[%s1540 + $0x9] sm:$0xff]
        %v1670 = vld [vmem:[%s1540 + $0x11] sm:$0xff]
        %v1671 = vld [vmem:[%s1540 + $0x29] sm:$0xff]
        %v1672 = vld [vmem:[%s1540 + $0x31] sm:$0xff]
        %v1673 = vld [vmem:[%s1540 + $0x49] sm:$0xff]
        %v1674 = vld [vmem:[%s1540 + $0x51] sm:$0xff]
        %v1675 = vld [vmem:[%s1540 + $0x69] sm:$0xff]
        %v1676 = vld [vmem:[%s1540 + $0x71] sm:$0xff]
        %v1677 = vld [vmem:[%s1540 + $0x89] sm:$0xff]
        %v1678 = vld [vmem:[%s1540 + $0x91] sm:$0xff]
        %v1679 = vld [vmem:[%s1540 + $0xa9] sm:$0xff]
        %v1680 = vld [vmem:[%s1540 + $0xb1] sm:$0xff]
        %v1681 = vld [vmem:[%s1540 + $0xc9] sm:$0xff]
        %v1682 = vld [vmem:[%s1540 + $0xd1] sm:$0xff]
        %v1683 = vld [vmem:[%s1540 + $0xe9] sm:$0xff]
        %v1684 = vld [vmem:[%s1540 + $0xf1] sm:$0xff]
        %v1685 = vld [vmem:[%s1540 + $0x109] sm:$0xff]
        %v1686 = vld [vmem:[%s1540 + $0x111] sm:$0xff]
        %v1687 = vld [vmem:[%s1540 + $0x129] sm:$0xff]
        %v1688 = vld [vmem:[%s1540 + $0x131] sm:$0xff]
        %v1689 = vld [vmem:[%s1540 + $0x149] sm:$0xff]
        %v1690 = vld [vmem:[%s1540 + $0x151] sm:$0xff]
        %v1691 = vld [vmem:[%s1540 + $0x169] sm:$0xff]
        %v1692 = vld [vmem:[%s1540 + $0x171] sm:$0xff]
        %v1693 = vld [vmem:[%s1540 + $0x189] sm:$0xff]
        %v1694 = vld [vmem:[%s1540 + $0x191] sm:$0xff]
        %v1695 = vld [vmem:[%s1540 + $0x1a9] sm:$0xff]
        %v1696 = vld [vmem:[%s1540 + $0x1b1] sm:$0xff]
        %v1697 = vld [vmem:[%s1540 + $0x1c9] sm:$0xff]
        %v1698 = vld [vmem:[%s1540 + $0x1d1] sm:$0xff]
        %v1699 = vld [vmem:[%s1540 + $0x1e9] sm:$0xff]
        %v1700 = vld [vmem:[%s1540 + $0x1f1] sm:$0xff]
        %v1701 = vpack.c.bf16 %v1669, %v1669
        %v1702 = vpack.c.bf16 %v1670, %v1670
        %v1703 = vpack.c.bf16 %v1671, %v1671
        %v1704 = vpack.c.bf16 %v1672, %v1672
        %v1705 = vpack.c.bf16 %v1673, %v1673
        %v1706 = vpack.c.bf16 %v1674, %v1674
        %v1707 = vpack.c.bf16 %v1675, %v1675
        %v1708 = vpack.c.bf16 %v1676, %v1676
        %v1709 = vpack.c.bf16 %v1677, %v1677
        %v1710 = vpack.c.bf16 %v1678, %v1678
        %v1711 = vpack.c.bf16 %v1679, %v1679
        %v1712 = vpack.c.bf16 %v1680, %v1680
        %v1713 = vpack.c.bf16 %v1681, %v1681
        %v1714 = vpack.c.bf16 %v1682, %v1682
        %v1715 = vpack.c.bf16 %v1683, %v1683
        %v1716 = vpack.c.bf16 %v1684, %v1684
        %v1717 = vpack.c.bf16 %v1685, %v1685
        %v1718 = vpack.c.bf16 %v1686, %v1686
        %v1719 = vpack.c.bf16 %v1687, %v1687
        %v1720 = vpack.c.bf16 %v1688, %v1688
        %v1721 = vpack.c.bf16 %v1689, %v1689
        %v1722 = vpack.c.bf16 %v1690, %v1690
        %v1723 = vpack.c.bf16 %v1691, %v1691
        %v1724 = vpack.c.bf16 %v1692, %v1692
        %v1725 = vpack.c.bf16 %v1693, %v1693
        %v1726 = vpack.c.bf16 %v1694, %v1694
        %v1727 = vpack.c.bf16 %v1695, %v1695
        %v1728 = vpack.c.bf16 %v1696, %v1696
        %v1729 = vpack.c.bf16 %v1697, %v1697
        %v1730 = vpack.c.bf16 %v1698, %v1698
        %v1731 = vpack.c.bf16 %v1699, %v1699
        %v1732 = vpack.c.bf16 %v1700, %v1700
        %s1733 = scalar_lea.vmem [#allocation2], 64
        %v1734 = vld [vmem:[%s1733 + $0x7] sm:$0xff]
        %v1735 = vld [vmem:[%s1733 + $0xf] sm:$0xff]
        %v1736 = vld [vmem:[%s1733 + $0x27] sm:$0xff]
        %v1737 = vld [vmem:[%s1733 + $0x2f] sm:$0xff]
        %v1738 = vld [vmem:[%s1733 + $0x47] sm:$0xff]
        %v1739 = vld [vmem:[%s1733 + $0x4f] sm:$0xff]
        %v1740 = vld [vmem:[%s1733 + $0x67] sm:$0xff]
        %v1741 = vld [vmem:[%s1733 + $0x6f] sm:$0xff]
        %v1742 = vld [vmem:[%s1733 + $0x87] sm:$0xff]
        %v1743 = vld [vmem:[%s1733 + $0x8f] sm:$0xff]
        %v1744 = vld [vmem:[%s1733 + $0xa7] sm:$0xff]
        %v1745 = vld [vmem:[%s1733 + $0xaf] sm:$0xff]
        %v1746 = vld [vmem:[%s1733 + $0xc7] sm:$0xff]
        %v1747 = vld [vmem:[%s1733 + $0xcf] sm:$0xff]
        %v1748 = vld [vmem:[%s1733 + $0xe7] sm:$0xff]
        %v1749 = vld [vmem:[%s1733 + $0xef] sm:$0xff]
        %v1750 = vld [vmem:[%s1733 + $0x107] sm:$0xff]
        %v1751 = vld [vmem:[%s1733 + $0x10f] sm:$0xff]
        %v1752 = vld [vmem:[%s1733 + $0x127] sm:$0xff]
        %v1753 = vld [vmem:[%s1733 + $0x12f] sm:$0xff]
        %v1754 = vld [vmem:[%s1733 + $0x147] sm:$0xff]
        %v1755 = vld [vmem:[%s1733 + $0x14f] sm:$0xff]
        %v1756 = vld [vmem:[%s1733 + $0x167] sm:$0xff]
        %v1757 = vld [vmem:[%s1733 + $0x16f] sm:$0xff]
        %v1758 = vld [vmem:[%s1733 + $0x187] sm:$0xff]
        %v1759 = vld [vmem:[%s1733 + $0x18f] sm:$0xff]
        %v1760 = vld [vmem:[%s1733 + $0x1a7] sm:$0xff]
        %v1761 = vld [vmem:[%s1733 + $0x1af] sm:$0xff]
        %v1762 = vld [vmem:[%s1733 + $0x1c7] sm:$0xff]
        %v1763 = vld [vmem:[%s1733 + $0x1cf] sm:$0xff]
        %v1764 = vld [vmem:[%s1733 + $0x1e7] sm:$0xff]
        %v1765 = vld [vmem:[%s1733 + $0x1ef] sm:$0xff]
        %v1766 = vpack.c.bf16 %v1734, %v1734
        %v1767 = vpack.c.bf16 %v1735, %v1735
        %v1768 = vpack.c.bf16 %v1736, %v1736
        %v1769 = vpack.c.bf16 %v1737, %v1737
        %v1770 = vpack.c.bf16 %v1738, %v1738
        %v1771 = vpack.c.bf16 %v1739, %v1739
        %v1772 = vpack.c.bf16 %v1740, %v1740
        %v1773 = vpack.c.bf16 %v1741, %v1741
        %v1774 = vpack.c.bf16 %v1742, %v1742
        %v1775 = vpack.c.bf16 %v1743, %v1743
        %v1776 = vpack.c.bf16 %v1744, %v1744
        %v1777 = vpack.c.bf16 %v1745, %v1745
        %v1778 = vpack.c.bf16 %v1746, %v1746
        %v1779 = vpack.c.bf16 %v1747, %v1747
        %v1780 = vpack.c.bf16 %v1748, %v1748
        %v1781 = vpack.c.bf16 %v1749, %v1749
        %v1782 = vpack.c.bf16 %v1750, %v1750
        %v1783 = vpack.c.bf16 %v1751, %v1751
        %v1784 = vpack.c.bf16 %v1752, %v1752
        %v1785 = vpack.c.bf16 %v1753, %v1753
        %v1786 = vpack.c.bf16 %v1754, %v1754
        %v1787 = vpack.c.bf16 %v1755, %v1755
        %v1788 = vpack.c.bf16 %v1756, %v1756
        %v1789 = vpack.c.bf16 %v1757, %v1757
        %v1790 = vpack.c.bf16 %v1758, %v1758
        %v1791 = vpack.c.bf16 %v1759, %v1759
        %v1792 = vpack.c.bf16 %v1760, %v1760
        %v1793 = vpack.c.bf16 %v1761, %v1761
        %v1794 = vpack.c.bf16 %v1762, %v1762
        %v1795 = vpack.c.bf16 %v1763, %v1763
        %v1796 = vpack.c.bf16 %v1764, %v1764
        %v1797 = vpack.c.bf16 %v1765, %v1765
        %v1798 = vld [vmem:[%s1733 + $0x8] sm:$0xff]
        %v1799 = vld [vmem:[%s1733 + $0x10] sm:$0xff]
        %v1800 = vld [vmem:[%s1733 + $0x28] sm:$0xff]
        %v1801 = vld [vmem:[%s1733 + $0x30] sm:$0xff]
        %v1802 = vld [vmem:[%s1733 + $0x48] sm:$0xff]
        %v1803 = vld [vmem:[%s1733 + $0x50] sm:$0xff]
        %v1804 = vld [vmem:[%s1733 + $0x68] sm:$0xff]
        %v1805 = vld [vmem:[%s1733 + $0x70] sm:$0xff]
        %v1806 = vld [vmem:[%s1733 + $0x88] sm:$0xff]
        %v1807 = vld [vmem:[%s1733 + $0x90] sm:$0xff]
        %v1808 = vld [vmem:[%s1733 + $0xa8] sm:$0xff]
        %v1809 = vld [vmem:[%s1733 + $0xb0] sm:$0xff]
        %v1810 = vld [vmem:[%s1733 + $0xc8] sm:$0xff]
        %v1811 = vld [vmem:[%s1733 + $0xd0] sm:$0xff]
        %v1812 = vld [vmem:[%s1733 + $0xe8] sm:$0xff]
        %v1813 = vld [vmem:[%s1733 + $0xf0] sm:$0xff]
        %v1814 = vld [vmem:[%s1733 + $0x108] sm:$0xff]
        %v1815 = vld [vmem:[%s1733 + $0x110] sm:$0xff]
        %v1816 = vld [vmem:[%s1733 + $0x128] sm:$0xff]
        %v1817 = vld [vmem:[%s1733 + $0x130] sm:$0xff]
        %v1818 = vld [vmem:[%s1733 + $0x148] sm:$0xff]
        %v1819 = vld [vmem:[%s1733 + $0x150] sm:$0xff]
        %v1820 = vld [vmem:[%s1733 + $0x168] sm:$0xff]
        %v1821 = vld [vmem:[%s1733 + $0x170] sm:$0xff]
        %v1822 = vld [vmem:[%s1733 + $0x188] sm:$0xff]
        %v1823 = vld [vmem:[%s1733 + $0x190] sm:$0xff]
        %v1824 = vld [vmem:[%s1733 + $0x1a8] sm:$0xff]
        %v1825 = vld [vmem:[%s1733 + $0x1b0] sm:$0xff]
        %v1826 = vld [vmem:[%s1733 + $0x1c8] sm:$0xff]
        %v1827 = vld [vmem:[%s1733 + $0x1d0] sm:$0xff]
        %v1828 = vld [vmem:[%s1733 + $0x1e8] sm:$0xff]
        %v1829 = vld [vmem:[%s1733 + $0x1f0] sm:$0xff]
        %v1830 = vpack.c.bf16 %v1798, %v1798
        %v1831 = vpack.c.bf16 %v1799, %v1799
        %v1832 = vpack.c.bf16 %v1800, %v1800
        %v1833 = vpack.c.bf16 %v1801, %v1801
        %v1834 = vpack.c.bf16 %v1802, %v1802
        %v1835 = vpack.c.bf16 %v1803, %v1803
        %v1836 = vpack.c.bf16 %v1804, %v1804
        %v1837 = vpack.c.bf16 %v1805, %v1805
        %v1838 = vpack.c.bf16 %v1806, %v1806
        %v1839 = vpack.c.bf16 %v1807, %v1807
        %v1840 = vpack.c.bf16 %v1808, %v1808
        %v1841 = vpack.c.bf16 %v1809, %v1809
        %v1842 = vpack.c.bf16 %v1810, %v1810
        %v1843 = vpack.c.bf16 %v1811, %v1811
        %v1844 = vpack.c.bf16 %v1812, %v1812
        %v1845 = vpack.c.bf16 %v1813, %v1813
        %v1846 = vpack.c.bf16 %v1814, %v1814
        %v1847 = vpack.c.bf16 %v1815, %v1815
        %v1848 = vpack.c.bf16 %v1816, %v1816
        %v1849 = vpack.c.bf16 %v1817, %v1817
        %v1850 = vpack.c.bf16 %v1818, %v1818
        %v1851 = vpack.c.bf16 %v1819, %v1819
        %v1852 = vpack.c.bf16 %v1820, %v1820
        %v1853 = vpack.c.bf16 %v1821, %v1821
        %v1854 = vpack.c.bf16 %v1822, %v1822
        %v1855 = vpack.c.bf16 %v1823, %v1823
        %v1856 = vpack.c.bf16 %v1824, %v1824
        %v1857 = vpack.c.bf16 %v1825, %v1825
        %v1858 = vpack.c.bf16 %v1826, %v1826
        %v1859 = vpack.c.bf16 %v1827, %v1827
        %v1860 = vpack.c.bf16 %v1828, %v1828
        %v1861 = vpack.c.bf16 %v1829, %v1829
        %v1862 = vld [vmem:[%s1733 + $0x9] sm:$0xff]
        %v1863 = vld [vmem:[%s1733 + $0x11] sm:$0xff]
        %v1864 = vld [vmem:[%s1733 + $0x29] sm:$0xff]
        %v1865 = vld [vmem:[%s1733 + $0x31] sm:$0xff]
        %v1866 = vld [vmem:[%s1733 + $0x49] sm:$0xff]
        %v1867 = vld [vmem:[%s1733 + $0x51] sm:$0xff]
        %v1868 = vld [vmem:[%s1733 + $0x69] sm:$0xff]
        %v1869 = vld [vmem:[%s1733 + $0x71] sm:$0xff]
        %v1870 = vld [vmem:[%s1733 + $0x89] sm:$0xff]
        %v1871 = vld [vmem:[%s1733 + $0x91] sm:$0xff]
        %v1872 = vld [vmem:[%s1733 + $0xa9] sm:$0xff]
        %v1873 = vld [vmem:[%s1733 + $0xb1] sm:$0xff]
        %v1874 = vld [vmem:[%s1733 + $0xc9] sm:$0xff]
        %v1875 = vld [vmem:[%s1733 + $0xd1] sm:$0xff]
        %v1876 = vld [vmem:[%s1733 + $0xe9] sm:$0xff]
        %v1877 = vld [vmem:[%s1733 + $0xf1] sm:$0xff]
        %v1878 = vld [vmem:[%s1733 + $0x109] sm:$0xff]
        %v1879 = vld [vmem:[%s1733 + $0x111] sm:$0xff]
        %v1880 = vld [vmem:[%s1733 + $0x129] sm:$0xff]
        %v1881 = vld [vmem:[%s1733 + $0x131] sm:$0xff]
        %v1882 = vld [vmem:[%s1733 + $0x149] sm:$0xff]
        %v1883 = vld [vmem:[%s1733 + $0x151] sm:$0xff]
        %v1884 = vld [vmem:[%s1733 + $0x169] sm:$0xff]
        %v1885 = vld [vmem:[%s1733 + $0x171] sm:$0xff]
        %v1886 = vld [vmem:[%s1733 + $0x189] sm:$0xff]
        %v1887 = vld [vmem:[%s1733 + $0x191] sm:$0xff]
        %v1888 = vld [vmem:[%s1733 + $0x1a9] sm:$0xff]
        %v1889 = vld [vmem:[%s1733 + $0x1b1] sm:$0xff]
        %v1890 = vld [vmem:[%s1733 + $0x1c9] sm:$0xff]
        %v1891 = vld [vmem:[%s1733 + $0x1d1] sm:$0xff]
        %v1892 = vld [vmem:[%s1733 + $0x1e9] sm:$0xff]
        %v1893 = vld [vmem:[%s1733 + $0x1f1] sm:$0xff]
        %v1894 = vpack.c.bf16 %v1862, %v1862
        %v1895 = vpack.c.bf16 %v1863, %v1863
        %v1896 = vpack.c.bf16 %v1864, %v1864
        %v1897 = vpack.c.bf16 %v1865, %v1865
        %v1898 = vpack.c.bf16 %v1866, %v1866
        %v1899 = vpack.c.bf16 %v1867, %v1867
        %v1900 = vpack.c.bf16 %v1868, %v1868
        %v1901 = vpack.c.bf16 %v1869, %v1869
        %v1902 = vpack.c.bf16 %v1870, %v1870
        %v1903 = vpack.c.bf16 %v1871, %v1871
        %v1904 = vpack.c.bf16 %v1872, %v1872
        %v1905 = vpack.c.bf16 %v1873, %v1873
        %v1906 = vpack.c.bf16 %v1874, %v1874
        %v1907 = vpack.c.bf16 %v1875, %v1875
        %v1908 = vpack.c.bf16 %v1876, %v1876
        %v1909 = vpack.c.bf16 %v1877, %v1877
        %v1910 = vpack.c.bf16 %v1878, %v1878
        %v1911 = vpack.c.bf16 %v1879, %v1879
        %v1912 = vpack.c.bf16 %v1880, %v1880
        %v1913 = vpack.c.bf16 %v1881, %v1881
        %v1914 = vpack.c.bf16 %v1882, %v1882
        %v1915 = vpack.c.bf16 %v1883, %v1883
        %v1916 = vpack.c.bf16 %v1884, %v1884
        %v1917 = vpack.c.bf16 %v1885, %v1885
        %v1918 = vpack.c.bf16 %v1886, %v1886
        %v1919 = vpack.c.bf16 %v1887, %v1887
        %v1920 = vpack.c.bf16 %v1888, %v1888
        %v1921 = vpack.c.bf16 %v1889, %v1889
        %v1922 = vpack.c.bf16 %v1890, %v1890
        %v1923 = vpack.c.bf16 %v1891, %v1891
        %v1924 = vpack.c.bf16 %v1892, %v1892
        %v1925 = vpack.c.bf16 %v1893, %v1893
        %v1958 = vunpack.c.l.b16 %v1380
        %v1959 = vunpack.c.l.b16 %v1381
        %v1960 = vunpack.c.l.b16 %v1382
        %v1961 = vunpack.c.l.b16 %v1383
        %v1962 = vunpack.c.l.b16 %v1384
        %v1963 = vunpack.c.l.b16 %v1385
        %v1964 = vunpack.c.l.b16 %v1386
        %v1965 = vunpack.c.l.b16 %v1387
        %v1966 = vunpack.c.l.b16 %v1388
        %v1967 = vunpack.c.l.b16 %v1389
        %v1968 = vunpack.c.l.b16 %v1390
        %v1969 = vunpack.c.l.b16 %v1391
        %v1970 = vunpack.c.l.b16 %v1392
        %v1971 = vunpack.c.l.b16 %v1393
        %v1972 = vunpack.c.l.b16 %v1394
        %v1973 = vunpack.c.l.b16 %v1395
        %v1974 = vunpack.c.l.b16 %v1396
        %v1975 = vunpack.c.l.b16 %v1397
        %v1976 = vunpack.c.l.b16 %v1398
        %v1977 = vunpack.c.l.b16 %v1399
        %v1978 = vunpack.c.l.b16 %v1400
        %v1979 = vunpack.c.l.b16 %v1401
        %v1980 = vunpack.c.l.b16 %v1402
        %v1981 = vunpack.c.l.b16 %v1403
        %v1982 = vunpack.c.l.b16 %v1404
        %v1983 = vunpack.c.l.b16 %v1405
        %v1984 = vunpack.c.l.b16 %v1406
        %v1985 = vunpack.c.l.b16 %v1407
        %v1986 = vunpack.c.l.b16 %v1408
        %v1987 = vunpack.c.l.b16 %v1409
        %v1988 = vunpack.c.l.b16 %v1410
        %v1989 = vunpack.c.l.b16 %v1411
        %v1990 = vpack.c.b16 %v1959, %v1958
        %v1991 = vpack.c.b16 %v1961, %v1960
        %v1992 = vpack.c.b16 %v1963, %v1962
        %v1993 = vpack.c.b16 %v1965, %v1964
        %v1994 = vpack.c.b16 %v1967, %v1966
        %v1995 = vpack.c.b16 %v1969, %v1968
        %v1996 = vpack.c.b16 %v1971, %v1970
        %v1997 = vpack.c.b16 %v1973, %v1972
        %v1998 = vpack.c.b16 %v1975, %v1974
        %v1999 = vpack.c.b16 %v1977, %v1976
        %v2000 = vpack.c.b16 %v1979, %v1978
        %v2001 = vpack.c.b16 %v1981, %v1980
        %v2002 = vpack.c.b16 %v1983, %v1982
        %v2003 = vpack.c.b16 %v1985, %v1984
        %v2004 = vpack.c.b16 %v1987, %v1986
        %v2005 = vpack.c.b16 %v1989, %v1988
        %v2038 = vunpack.c.l.b16 %v1444
        %v2039 = vunpack.c.l.b16 %v1445
        %v2040 = vunpack.c.l.b16 %v1446
        %v2041 = vunpack.c.l.b16 %v1447
        %v2042 = vunpack.c.l.b16 %v1448
        %v2043 = vunpack.c.l.b16 %v1449
        %v2044 = vunpack.c.l.b16 %v1450
        %v2045 = vunpack.c.l.b16 %v1451
        %v2046 = vunpack.c.l.b16 %v1452
        %v2047 = vunpack.c.l.b16 %v1453
        %v2048 = vunpack.c.l.b16 %v1454
        %v2049 = vunpack.c.l.b16 %v1455
        %v2050 = vunpack.c.l.b16 %v1456
        %v2051 = vunpack.c.l.b16 %v1457
        %v2052 = vunpack.c.l.b16 %v1458
        %v2053 = vunpack.c.l.b16 %v1459
        %v2054 = vunpack.c.l.b16 %v1460
        %v2055 = vunpack.c.l.b16 %v1461
        %v2056 = vunpack.c.l.b16 %v1462
        %v2057 = vunpack.c.l.b16 %v1463
        %v2058 = vunpack.c.l.b16 %v1464
        %v2059 = vunpack.c.l.b16 %v1465
        %v2060 = vunpack.c.l.b16 %v1466
        %v2061 = vunpack.c.l.b16 %v1467
        %v2062 = vunpack.c.l.b16 %v1468
        %v2063 = vunpack.c.l.b16 %v1469
        %v2064 = vunpack.c.l.b16 %v1470
        %v2065 = vunpack.c.l.b16 %v1471
        %v2066 = vunpack.c.l.b16 %v1472
        %v2067 = vunpack.c.l.b16 %v1473
        %v2068 = vunpack.c.l.b16 %v1474
        %v2069 = vunpack.c.l.b16 %v1475
        %v2070 = vpack.c.b16 %v2039, %v2038
        %v2071 = vpack.c.b16 %v2041, %v2040
        %v2072 = vpack.c.b16 %v2043, %v2042
        %v2073 = vpack.c.b16 %v2045, %v2044
        %v2074 = vpack.c.b16 %v2047, %v2046
        %v2075 = vpack.c.b16 %v2049, %v2048
        %v2076 = vpack.c.b16 %v2051, %v2050
        %v2077 = vpack.c.b16 %v2053, %v2052
        %v2078 = vpack.c.b16 %v2055, %v2054
        %v2079 = vpack.c.b16 %v2057, %v2056
        %v2080 = vpack.c.b16 %v2059, %v2058
        %v2081 = vpack.c.b16 %v2061, %v2060
        %v2082 = vpack.c.b16 %v2063, %v2062
        %v2083 = vpack.c.b16 %v2065, %v2064
        %v2084 = vpack.c.b16 %v2067, %v2066
        %v2085 = vpack.c.b16 %v2069, %v2068
        %2086 = vrot.lane.b32.xlu0 %v2070, 64
        %v2087 = vpop.permute.xlu0 %2086
        %2088 = vrot.lane.b32.xlu0 %v2071, 64
        %v2089 = vpop.permute.xlu0 %2088
        %2090 = vrot.lane.b32.xlu0 %v2072, 64
        %v2091 = vpop.permute.xlu0 %2090
        %2092 = vrot.lane.b32.xlu0 %v2073, 64
        %v2093 = vpop.permute.xlu0 %2092
        %2094 = vrot.lane.b32.xlu0 %v2074, 64
        %v2095 = vpop.permute.xlu0 %2094
        %2096 = vrot.lane.b32.xlu0 %v2075, 64
        %v2097 = vpop.permute.xlu0 %2096
        %2098 = vrot.lane.b32.xlu0 %v2076, 64
        %v2099 = vpop.permute.xlu0 %2098
        %2100 = vrot.lane.b32.xlu0 %v2077, 64
        %v2101 = vpop.permute.xlu0 %2100
        %2102 = vrot.lane.b32.xlu0 %v2078, 64
        %v2103 = vpop.permute.xlu0 %2102
        %2104 = vrot.lane.b32.xlu0 %v2079, 64
        %v2105 = vpop.permute.xlu0 %2104
        %2106 = vrot.lane.b32.xlu0 %v2080, 64
        %v2107 = vpop.permute.xlu0 %2106
        %2108 = vrot.lane.b32.xlu0 %v2081, 64
        %v2109 = vpop.permute.xlu0 %2108
        %2110 = vrot.lane.b32.xlu0 %v2082, 64
        %v2111 = vpop.permute.xlu0 %2110
        %2112 = vrot.lane.b32.xlu0 %v2083, 64
        %v2113 = vpop.permute.xlu0 %2112
        %2114 = vrot.lane.b32.xlu0 %v2084, 64
        %v2115 = vpop.permute.xlu0 %2114
        %2116 = vrot.lane.b32.xlu0 %v2085, 64
        %v2117 = vpop.permute.xlu0 %2116
        %v2150 = vunpack.c.l.b16 %v1508
        %v2151 = vunpack.c.l.b16 %v1509
        %v2152 = vunpack.c.l.b16 %v1510
        %v2153 = vunpack.c.l.b16 %v1511
        %v2154 = vunpack.c.l.b16 %v1512
        %v2155 = vunpack.c.l.b16 %v1513
        %v2156 = vunpack.c.l.b16 %v1514
        %v2157 = vunpack.c.l.b16 %v1515
        %v2158 = vunpack.c.l.b16 %v1516
        %v2159 = vunpack.c.l.b16 %v1517
        %v2160 = vunpack.c.l.b16 %v1518
        %v2161 = vunpack.c.l.b16 %v1519
        %v2162 = vunpack.c.l.b16 %v1520
        %v2163 = vunpack.c.l.b16 %v1521
        %v2164 = vunpack.c.l.b16 %v1522
        %v2165 = vunpack.c.l.b16 %v1523
        %v2166 = vunpack.c.l.b16 %v1524
        %v2167 = vunpack.c.l.b16 %v1525
        %v2168 = vunpack.c.l.b16 %v1526
        %v2169 = vunpack.c.l.b16 %v1527
        %v2170 = vunpack.c.l.b16 %v1528
        %v2171 = vunpack.c.l.b16 %v1529
        %v2172 = vunpack.c.l.b16 %v1530
        %v2173 = vunpack.c.l.b16 %v1531
        %v2174 = vunpack.c.l.b16 %v1532
        %v2175 = vunpack.c.l.b16 %v1533
        %v2176 = vunpack.c.l.b16 %v1534
        %v2177 = vunpack.c.l.b16 %v1535
        %v2178 = vunpack.c.l.b16 %v1536
        %v2179 = vunpack.c.l.b16 %v1537
        %v2180 = vunpack.c.l.b16 %v1538
        %v2181 = vunpack.c.l.b16 %v1539
        %v2182 = vpack.c.b16 %v2151, %v2150
        %v2183 = vpack.c.b16 %v2153, %v2152
        %v2184 = vpack.c.b16 %v2155, %v2154
        %v2185 = vpack.c.b16 %v2157, %v2156
        %v2186 = vpack.c.b16 %v2159, %v2158
        %v2187 = vpack.c.b16 %v2161, %v2160
        %v2188 = vpack.c.b16 %v2163, %v2162
        %v2189 = vpack.c.b16 %v2165, %v2164
        %v2190 = vpack.c.b16 %v2167, %v2166
        %v2191 = vpack.c.b16 %v2169, %v2168
        %v2192 = vpack.c.b16 %v2171, %v2170
        %v2193 = vpack.c.b16 %v2173, %v2172
        %v2194 = vpack.c.b16 %v2175, %v2174
        %v2195 = vpack.c.b16 %v2177, %v2176
        %v2196 = vpack.c.b16 %v2179, %v2178
        %v2197 = vpack.c.b16 %v2181, %v2180
        %v2230 = vunpack.c.l.b16 %v1573
        %v2231 = vunpack.c.l.b16 %v1574
        %v2232 = vunpack.c.l.b16 %v1575
        %v2233 = vunpack.c.l.b16 %v1576
        %v2234 = vunpack.c.l.b16 %v1577
        %v2235 = vunpack.c.l.b16 %v1578
        %v2236 = vunpack.c.l.b16 %v1579
        %v2237 = vunpack.c.l.b16 %v1580
        %v2238 = vunpack.c.l.b16 %v1581
        %v2239 = vunpack.c.l.b16 %v1582
        %v2240 = vunpack.c.l.b16 %v1583
        %v2241 = vunpack.c.l.b16 %v1584
        %v2242 = vunpack.c.l.b16 %v1585
        %v2243 = vunpack.c.l.b16 %v1586
        %v2244 = vunpack.c.l.b16 %v1587
        %v2245 = vunpack.c.l.b16 %v1588
        %v2246 = vunpack.c.l.b16 %v1589
        %v2247 = vunpack.c.l.b16 %v1590
        %v2248 = vunpack.c.l.b16 %v1591
        %v2249 = vunpack.c.l.b16 %v1592
        %v2250 = vunpack.c.l.b16 %v1593
        %v2251 = vunpack.c.l.b16 %v1594
        %v2252 = vunpack.c.l.b16 %v1595
        %v2253 = vunpack.c.l.b16 %v1596
        %v2254 = vunpack.c.l.b16 %v1597
        %v2255 = vunpack.c.l.b16 %v1598
        %v2256 = vunpack.c.l.b16 %v1599
        %v2257 = vunpack.c.l.b16 %v1600
        %v2258 = vunpack.c.l.b16 %v1601
        %v2259 = vunpack.c.l.b16 %v1602
        %v2260 = vunpack.c.l.b16 %v1603
        %v2261 = vunpack.c.l.b16 %v1604
        %v2262 = vpack.c.b16 %v2231, %v2230
        %v2263 = vpack.c.b16 %v2233, %v2232
        %v2264 = vpack.c.b16 %v2235, %v2234
        %v2265 = vpack.c.b16 %v2237, %v2236
        %v2266 = vpack.c.b16 %v2239, %v2238
        %v2267 = vpack.c.b16 %v2241, %v2240
        %v2268 = vpack.c.b16 %v2243, %v2242
        %v2269 = vpack.c.b16 %v2245, %v2244
        %v2270 = vpack.c.b16 %v2247, %v2246
        %v2271 = vpack.c.b16 %v2249, %v2248
        %v2272 = vpack.c.b16 %v2251, %v2250
        %v2273 = vpack.c.b16 %v2253, %v2252
        %v2274 = vpack.c.b16 %v2255, %v2254
        %v2275 = vpack.c.b16 %v2257, %v2256
        %v2276 = vpack.c.b16 %v2259, %v2258
        %v2277 = vpack.c.b16 %v2261, %v2260
        %2278 = vrot.lane.b32.xlu0 %v2262, 64
        %v2279 = vpop.permute.xlu0 %2278
        %2280 = vrot.lane.b32.xlu0 %v2263, 64
        %v2281 = vpop.permute.xlu0 %2280
        %2282 = vrot.lane.b32.xlu0 %v2264, 64
        %v2283 = vpop.permute.xlu0 %2282
        %2284 = vrot.lane.b32.xlu0 %v2265, 64
        %v2285 = vpop.permute.xlu0 %2284
        %2286 = vrot.lane.b32.xlu0 %v2266, 64
        %v2287 = vpop.permute.xlu0 %2286
        %2288 = vrot.lane.b32.xlu0 %v2267, 64
        %v2289 = vpop.permute.xlu0 %2288
        %2290 = vrot.lane.b32.xlu0 %v2268, 64
        %v2291 = vpop.permute.xlu0 %2290
        %2292 = vrot.lane.b32.xlu0 %v2269, 64
        %v2293 = vpop.permute.xlu0 %2292
        %2294 = vrot.lane.b32.xlu0 %v2270, 64
        %v2295 = vpop.permute.xlu0 %2294
        %2296 = vrot.lane.b32.xlu0 %v2271, 64
        %v2297 = vpop.permute.xlu0 %2296
        %2298 = vrot.lane.b32.xlu0 %v2272, 64
        %v2299 = vpop.permute.xlu0 %2298
        %2300 = vrot.lane.b32.xlu0 %v2273, 64
        %v2301 = vpop.permute.xlu0 %2300
        %2302 = vrot.lane.b32.xlu0 %v2274, 64
        %v2303 = vpop.permute.xlu0 %2302
        %2304 = vrot.lane.b32.xlu0 %v2275, 64
        %v2305 = vpop.permute.xlu0 %2304
        %2306 = vrot.lane.b32.xlu0 %v2276, 64
        %v2307 = vpop.permute.xlu0 %2306
        %2308 = vrot.lane.b32.xlu0 %v2277, 64
        %v2309 = vpop.permute.xlu0 %2308
        %v2342 = vunpack.c.l.b16 %v1637
        %v2343 = vunpack.c.l.b16 %v1638
        %v2344 = vunpack.c.l.b16 %v1639
        %v2345 = vunpack.c.l.b16 %v1640
        %v2346 = vunpack.c.l.b16 %v1641
        %v2347 = vunpack.c.l.b16 %v1642
        %v2348 = vunpack.c.l.b16 %v1643
        %v2349 = vunpack.c.l.b16 %v1644
        %v2350 = vunpack.c.l.b16 %v1645
        %v2351 = vunpack.c.l.b16 %v1646
        %v2352 = vunpack.c.l.b16 %v1647
        %v2353 = vunpack.c.l.b16 %v1648
        %v2354 = vunpack.c.l.b16 %v1649
        %v2355 = vunpack.c.l.b16 %v1650
        %v2356 = vunpack.c.l.b16 %v1651
        %v2357 = vunpack.c.l.b16 %v1652
        %v2358 = vunpack.c.l.b16 %v1653
        %v2359 = vunpack.c.l.b16 %v1654
        %v2360 = vunpack.c.l.b16 %v1655
        %v2361 = vunpack.c.l.b16 %v1656
        %v2362 = vunpack.c.l.b16 %v1657
        %v2363 = vunpack.c.l.b16 %v1658
        %v2364 = vunpack.c.l.b16 %v1659
        %v2365 = vunpack.c.l.b16 %v1660
        %v2366 = vunpack.c.l.b16 %v1661
        %v2367 = vunpack.c.l.b16 %v1662
        %v2368 = vunpack.c.l.b16 %v1663
        %v2369 = vunpack.c.l.b16 %v1664
        %v2370 = vunpack.c.l.b16 %v1665
        %v2371 = vunpack.c.l.b16 %v1666
        %v2372 = vunpack.c.l.b16 %v1667
        %v2373 = vunpack.c.l.b16 %v1668
        %v2374 = vpack.c.b16 %v2343, %v2342
        %v2375 = vpack.c.b16 %v2345, %v2344
        %v2376 = vpack.c.b16 %v2347, %v2346
        %v2377 = vpack.c.b16 %v2349, %v2348
        %v2378 = vpack.c.b16 %v2351, %v2350
        %v2379 = vpack.c.b16 %v2353, %v2352
        %v2380 = vpack.c.b16 %v2355, %v2354
        %v2381 = vpack.c.b16 %v2357, %v2356
        %v2382 = vpack.c.b16 %v2359, %v2358
        %v2383 = vpack.c.b16 %v2361, %v2360
        %v2384 = vpack.c.b16 %v2363, %v2362
        %v2385 = vpack.c.b16 %v2365, %v2364
        %v2386 = vpack.c.b16 %v2367, %v2366
        %v2387 = vpack.c.b16 %v2369, %v2368
        %v2388 = vpack.c.b16 %v2371, %v2370
        %v2389 = vpack.c.b16 %v2373, %v2372
        %v2422 = vunpack.c.l.b16 %v1701
        %v2423 = vunpack.c.l.b16 %v1702
        %v2424 = vunpack.c.l.b16 %v1703
        %v2425 = vunpack.c.l.b16 %v1704
        %v2426 = vunpack.c.l.b16 %v1705
        %v2427 = vunpack.c.l.b16 %v1706
        %v2428 = vunpack.c.l.b16 %v1707
        %v2429 = vunpack.c.l.b16 %v1708
        %v2430 = vunpack.c.l.b16 %v1709
        %v2431 = vunpack.c.l.b16 %v1710
        %v2432 = vunpack.c.l.b16 %v1711
        %v2433 = vunpack.c.l.b16 %v1712
        %v2434 = vunpack.c.l.b16 %v1713
        %v2435 = vunpack.c.l.b16 %v1714
        %v2436 = vunpack.c.l.b16 %v1715
        %v2437 = vunpack.c.l.b16 %v1716
        %v2438 = vunpack.c.l.b16 %v1717
        %v2439 = vunpack.c.l.b16 %v1718
        %v2440 = vunpack.c.l.b16 %v1719
        %v2441 = vunpack.c.l.b16 %v1720
        %v2442 = vunpack.c.l.b16 %v1721
        %v2443 = vunpack.c.l.b16 %v1722
        %v2444 = vunpack.c.l.b16 %v1723
        %v2445 = vunpack.c.l.b16 %v1724
        %v2446 = vunpack.c.l.b16 %v1725
        %v2447 = vunpack.c.l.b16 %v1726
        %v2448 = vunpack.c.l.b16 %v1727
        %v2449 = vunpack.c.l.b16 %v1728
        %v2450 = vunpack.c.l.b16 %v1729
        %v2451 = vunpack.c.l.b16 %v1730
        %v2452 = vunpack.c.l.b16 %v1731
        %v2453 = vunpack.c.l.b16 %v1732
        %v2454 = vpack.c.b16 %v2423, %v2422
        %v2455 = vpack.c.b16 %v2425, %v2424
        %v2456 = vpack.c.b16 %v2427, %v2426
        %v2457 = vpack.c.b16 %v2429, %v2428
        %v2458 = vpack.c.b16 %v2431, %v2430
        %v2459 = vpack.c.b16 %v2433, %v2432
        %v2460 = vpack.c.b16 %v2435, %v2434
        %v2461 = vpack.c.b16 %v2437, %v2436
        %v2462 = vpack.c.b16 %v2439, %v2438
        %v2463 = vpack.c.b16 %v2441, %v2440
        %v2464 = vpack.c.b16 %v2443, %v2442
        %v2465 = vpack.c.b16 %v2445, %v2444
        %v2466 = vpack.c.b16 %v2447, %v2446
        %v2467 = vpack.c.b16 %v2449, %v2448
        %v2468 = vpack.c.b16 %v2451, %v2450
        %v2469 = vpack.c.b16 %v2453, %v2452
        %2470 = vrot.lane.b32.xlu0 %v2454, 64
        %v2471 = vpop.permute.xlu0 %2470
        %2472 = vrot.lane.b32.xlu0 %v2455, 64
        %v2473 = vpop.permute.xlu0 %2472
        %2474 = vrot.lane.b32.xlu0 %v2456, 64
        %v2475 = vpop.permute.xlu0 %2474
        %2476 = vrot.lane.b32.xlu0 %v2457, 64
        %v2477 = vpop.permute.xlu0 %2476
        %2478 = vrot.lane.b32.xlu0 %v2458, 64
        %v2479 = vpop.permute.xlu0 %2478
        %2480 = vrot.lane.b32.xlu0 %v2459, 64
        %v2481 = vpop.permute.xlu0 %2480
        %2482 = vrot.lane.b32.xlu0 %v2460, 64
        %v2483 = vpop.permute.xlu0 %2482
        %2484 = vrot.lane.b32.xlu0 %v2461, 64
        %v2485 = vpop.permute.xlu0 %2484
        %2486 = vrot.lane.b32.xlu0 %v2462, 64
        %v2487 = vpop.permute.xlu0 %2486
        %2488 = vrot.lane.b32.xlu0 %v2463, 64
        %v2489 = vpop.permute.xlu0 %2488
        %2490 = vrot.lane.b32.xlu0 %v2464, 64
        %v2491 = vpop.permute.xlu0 %2490
        %2492 = vrot.lane.b32.xlu0 %v2465, 64
        %v2493 = vpop.permute.xlu0 %2492
        %2494 = vrot.lane.b32.xlu0 %v2466, 64
        %v2495 = vpop.permute.xlu0 %2494
        %2496 = vrot.lane.b32.xlu0 %v2467, 64
        %v2497 = vpop.permute.xlu0 %2496
        %2498 = vrot.lane.b32.xlu0 %v2468, 64
        %v2499 = vpop.permute.xlu0 %2498
        %2500 = vrot.lane.b32.xlu0 %v2469, 64
        %v2501 = vpop.permute.xlu0 %2500
        %v2534 = vunpack.c.l.b16 %v1766
        %v2535 = vunpack.c.l.b16 %v1767
        %v2536 = vunpack.c.l.b16 %v1768
        %v2537 = vunpack.c.l.b16 %v1769
        %v2538 = vunpack.c.l.b16 %v1770
        %v2539 = vunpack.c.l.b16 %v1771
        %v2540 = vunpack.c.l.b16 %v1772
        %v2541 = vunpack.c.l.b16 %v1773
        %v2542 = vunpack.c.l.b16 %v1774
        %v2543 = vunpack.c.l.b16 %v1775
        %v2544 = vunpack.c.l.b16 %v1776
        %v2545 = vunpack.c.l.b16 %v1777
        %v2546 = vunpack.c.l.b16 %v1778
        %v2547 = vunpack.c.l.b16 %v1779
        %v2548 = vunpack.c.l.b16 %v1780
        %v2549 = vunpack.c.l.b16 %v1781
        %v2550 = vunpack.c.l.b16 %v1782
        %v2551 = vunpack.c.l.b16 %v1783
        %v2552 = vunpack.c.l.b16 %v1784
        %v2553 = vunpack.c.l.b16 %v1785
        %v2554 = vunpack.c.l.b16 %v1786
        %v2555 = vunpack.c.l.b16 %v1787
        %v2556 = vunpack.c.l.b16 %v1788
        %v2557 = vunpack.c.l.b16 %v1789
        %v2558 = vunpack.c.l.b16 %v1790
        %v2559 = vunpack.c.l.b16 %v1791
        %v2560 = vunpack.c.l.b16 %v1792
        %v2561 = vunpack.c.l.b16 %v1793
        %v2562 = vunpack.c.l.b16 %v1794
        %v2563 = vunpack.c.l.b16 %v1795
        %v2564 = vunpack.c.l.b16 %v1796
        %v2565 = vunpack.c.l.b16 %v1797
        %v2566 = vpack.c.b16 %v2535, %v2534
        %v2567 = vpack.c.b16 %v2537, %v2536
        %v2568 = vpack.c.b16 %v2539, %v2538
        %v2569 = vpack.c.b16 %v2541, %v2540
        %v2570 = vpack.c.b16 %v2543, %v2542
        %v2571 = vpack.c.b16 %v2545, %v2544
        %v2572 = vpack.c.b16 %v2547, %v2546
        %v2573 = vpack.c.b16 %v2549, %v2548
        %v2574 = vpack.c.b16 %v2551, %v2550
        %v2575 = vpack.c.b16 %v2553, %v2552
        %v2576 = vpack.c.b16 %v2555, %v2554
        %v2577 = vpack.c.b16 %v2557, %v2556
        %v2578 = vpack.c.b16 %v2559, %v2558
        %v2579 = vpack.c.b16 %v2561, %v2560
        %v2580 = vpack.c.b16 %v2563, %v2562
        %v2581 = vpack.c.b16 %v2565, %v2564
        %v2614 = vunpack.c.l.b16 %v1830
        %v2615 = vunpack.c.l.b16 %v1831
        %v2616 = vunpack.c.l.b16 %v1832
        %v2617 = vunpack.c.l.b16 %v1833
        %v2618 = vunpack.c.l.b16 %v1834
        %v2619 = vunpack.c.l.b16 %v1835
        %v2620 = vunpack.c.l.b16 %v1836
        %v2621 = vunpack.c.l.b16 %v1837
        %v2622 = vunpack.c.l.b16 %v1838
        %v2623 = vunpack.c.l.b16 %v1839
        %v2624 = vunpack.c.l.b16 %v1840
        %v2625 = vunpack.c.l.b16 %v1841
        %v2626 = vunpack.c.l.b16 %v1842
        %v2627 = vunpack.c.l.b16 %v1843
        %v2628 = vunpack.c.l.b16 %v1844
        %v2629 = vunpack.c.l.b16 %v1845
        %v2630 = vunpack.c.l.b16 %v1846
        %v2631 = vunpack.c.l.b16 %v1847
        %v2632 = vunpack.c.l.b16 %v1848
        %v2633 = vunpack.c.l.b16 %v1849
        %v2634 = vunpack.c.l.b16 %v1850
        %v2635 = vunpack.c.l.b16 %v1851
        %v2636 = vunpack.c.l.b16 %v1852
        %v2637 = vunpack.c.l.b16 %v1853
        %v2638 = vunpack.c.l.b16 %v1854
        %v2639 = vunpack.c.l.b16 %v1855
        %v2640 = vunpack.c.l.b16 %v1856
        %v2641 = vunpack.c.l.b16 %v1857
        %v2642 = vunpack.c.l.b16 %v1858
        %v2643 = vunpack.c.l.b16 %v1859
        %v2644 = vunpack.c.l.b16 %v1860
        %v2645 = vunpack.c.l.b16 %v1861
        %v2646 = vpack.c.b16 %v2615, %v2614
        %v2647 = vpack.c.b16 %v2617, %v2616
        %v2648 = vpack.c.b16 %v2619, %v2618
        %v2649 = vpack.c.b16 %v2621, %v2620
        %v2650 = vpack.c.b16 %v2623, %v2622
        %v2651 = vpack.c.b16 %v2625, %v2624
        %v2652 = vpack.c.b16 %v2627, %v2626
        %v2653 = vpack.c.b16 %v2629, %v2628
        %v2654 = vpack.c.b16 %v2631, %v2630
        %v2655 = vpack.c.b16 %v2633, %v2632
        %v2656 = vpack.c.b16 %v2635, %v2634
        %v2657 = vpack.c.b16 %v2637, %v2636
        %v2658 = vpack.c.b16 %v2639, %v2638
        %v2659 = vpack.c.b16 %v2641, %v2640
        %v2660 = vpack.c.b16 %v2643, %v2642
        %v2661 = vpack.c.b16 %v2645, %v2644
        %2662 = vrot.lane.b32.xlu0 %v2646, 64
        %v2663 = vpop.permute.xlu0 %2662
        %2664 = vrot.lane.b32.xlu0 %v2647, 64
        %v2665 = vpop.permute.xlu0 %2664
        %2666 = vrot.lane.b32.xlu0 %v2648, 64
        %v2667 = vpop.permute.xlu0 %2666
        %2668 = vrot.lane.b32.xlu0 %v2649, 64
        %v2669 = vpop.permute.xlu0 %2668
        %2670 = vrot.lane.b32.xlu0 %v2650, 64
        %v2671 = vpop.permute.xlu0 %2670
        %2672 = vrot.lane.b32.xlu0 %v2651, 64
        %v2673 = vpop.permute.xlu0 %2672
        %2674 = vrot.lane.b32.xlu0 %v2652, 64
        %v2675 = vpop.permute.xlu0 %2674
        %2676 = vrot.lane.b32.xlu0 %v2653, 64
        %v2677 = vpop.permute.xlu0 %2676
        %2678 = vrot.lane.b32.xlu0 %v2654, 64
        %v2679 = vpop.permute.xlu0 %2678
        %2680 = vrot.lane.b32.xlu0 %v2655, 64
        %v2681 = vpop.permute.xlu0 %2680
        %2682 = vrot.lane.b32.xlu0 %v2656, 64
        %v2683 = vpop.permute.xlu0 %2682
        %2684 = vrot.lane.b32.xlu0 %v2657, 64
        %v2685 = vpop.permute.xlu0 %2684
        %2686 = vrot.lane.b32.xlu0 %v2658, 64
        %v2687 = vpop.permute.xlu0 %2686
        %2688 = vrot.lane.b32.xlu0 %v2659, 64
        %v2689 = vpop.permute.xlu0 %2688
        %2690 = vrot.lane.b32.xlu0 %v2660, 64
        %v2691 = vpop.permute.xlu0 %2690
        %2692 = vrot.lane.b32.xlu0 %v2661, 64
        %v2693 = vpop.permute.xlu0 %2692
        %v2726 = vunpack.c.l.b16 %v1894
        %v2727 = vunpack.c.l.b16 %v1895
        %v2728 = vunpack.c.l.b16 %v1896
        %v2729 = vunpack.c.l.b16 %v1897
        %v2730 = vunpack.c.l.b16 %v1898
        %v2731 = vunpack.c.l.b16 %v1899
        %v2732 = vunpack.c.l.b16 %v1900
        %v2733 = vunpack.c.l.b16 %v1901
        %v2734 = vunpack.c.l.b16 %v1902
        %v2735 = vunpack.c.l.b16 %v1903
        %v2736 = vunpack.c.l.b16 %v1904
        %v2737 = vunpack.c.l.b16 %v1905
        %v2738 = vunpack.c.l.b16 %v1906
        %v2739 = vunpack.c.l.b16 %v1907
        %v2740 = vunpack.c.l.b16 %v1908
        %v2741 = vunpack.c.l.b16 %v1909
        %v2742 = vunpack.c.l.b16 %v1910
        %v2743 = vunpack.c.l.b16 %v1911
        %v2744 = vunpack.c.l.b16 %v1912
        %v2745 = vunpack.c.l.b16 %v1913
        %v2746 = vunpack.c.l.b16 %v1914
        %v2747 = vunpack.c.l.b16 %v1915
        %v2748 = vunpack.c.l.b16 %v1916
        %v2749 = vunpack.c.l.b16 %v1917
        %v2750 = vunpack.c.l.b16 %v1918
        %v2751 = vunpack.c.l.b16 %v1919
        %v2752 = vunpack.c.l.b16 %v1920
        %v2753 = vunpack.c.l.b16 %v1921
        %v2754 = vunpack.c.l.b16 %v1922
        %v2755 = vunpack.c.l.b16 %v1923
        %v2756 = vunpack.c.l.b16 %v1924
        %v2757 = vunpack.c.l.b16 %v1925
        %v2758 = vpack.c.b16 %v2727, %v2726
        %v2759 = vpack.c.b16 %v2729, %v2728
        %v2760 = vpack.c.b16 %v2731, %v2730
        %v2761 = vpack.c.b16 %v2733, %v2732
        %v2762 = vpack.c.b16 %v2735, %v2734
        %v2763 = vpack.c.b16 %v2737, %v2736
        %v2764 = vpack.c.b16 %v2739, %v2738
        %v2765 = vpack.c.b16 %v2741, %v2740
        %v2766 = vpack.c.b16 %v2743, %v2742
        %v2767 = vpack.c.b16 %v2745, %v2744
        %v2768 = vpack.c.b16 %v2747, %v2746
        %v2769 = vpack.c.b16 %v2749, %v2748
        %v2770 = vpack.c.b16 %v2751, %v2750
        %v2771 = vpack.c.b16 %v2753, %v2752
        %v2772 = vpack.c.b16 %v2755, %v2754
        %v2773 = vpack.c.b16 %v2757, %v2756
        %v2776 = vsel %vm1036, %v1990, %v2087
        %v2780 = vsel %vm1036, %v1991, %v2089
        %v2784 = vsel %vm1036, %v1992, %v2091
        %v2788 = vsel %vm1036, %v1993, %v2093
        %v2792 = vsel %vm1036, %v1994, %v2095
        %v2796 = vsel %vm1036, %v1995, %v2097
        %v2800 = vsel %vm1036, %v1996, %v2099
        %v2804 = vsel %vm1036, %v1997, %v2101
        %v2808 = vsel %vm1036, %v1998, %v2103
        %v2812 = vsel %vm1036, %v1999, %v2105
        %v2816 = vsel %vm1036, %v2000, %v2107
        %v2820 = vsel %vm1036, %v2001, %v2109
        %v2824 = vsel %vm1036, %v2002, %v2111
        %v2828 = vsel %vm1036, %v2003, %v2113
        %v2832 = vsel %vm1036, %v2004, %v2115
        %v2836 = vsel %vm1036, %v2005, %v2117
        %v2840 = vsel %vm1036, %v2182, %v2279
        %v2844 = vsel %vm1036, %v2183, %v2281
        %v2848 = vsel %vm1036, %v2184, %v2283
        %v2852 = vsel %vm1036, %v2185, %v2285
        %v2856 = vsel %vm1036, %v2186, %v2287
        %v2860 = vsel %vm1036, %v2187, %v2289
        %v2864 = vsel %vm1036, %v2188, %v2291
        %v2868 = vsel %vm1036, %v2189, %v2293
        %v2872 = vsel %vm1036, %v2190, %v2295
        %v2876 = vsel %vm1036, %v2191, %v2297
        %v2880 = vsel %vm1036, %v2192, %v2299
        %v2884 = vsel %vm1036, %v2193, %v2301
        %v2888 = vsel %vm1036, %v2194, %v2303
        %v2892 = vsel %vm1036, %v2195, %v2305
        %v2896 = vsel %vm1036, %v2196, %v2307
        %v2900 = vsel %vm1036, %v2197, %v2309
        %v2904 = vsel %vm1036, %v2374, %v2471
        %v2908 = vsel %vm1036, %v2375, %v2473
        %v2912 = vsel %vm1036, %v2376, %v2475
        %v2916 = vsel %vm1036, %v2377, %v2477
        %v2920 = vsel %vm1036, %v2378, %v2479
        %v2924 = vsel %vm1036, %v2379, %v2481
        %v2928 = vsel %vm1036, %v2380, %v2483
        %v2932 = vsel %vm1036, %v2381, %v2485
        %v2936 = vsel %vm1036, %v2382, %v2487
        %v2940 = vsel %vm1036, %v2383, %v2489
        %v2944 = vsel %vm1036, %v2384, %v2491
        %v2948 = vsel %vm1036, %v2385, %v2493
        %v2952 = vsel %vm1036, %v2386, %v2495
        %v2956 = vsel %vm1036, %v2387, %v2497
        %v2960 = vsel %vm1036, %v2388, %v2499
        %v2964 = vsel %vm1036, %v2389, %v2501
        %v2968 = vsel %vm1036, %v2566, %v2663
        %v2972 = vsel %vm1036, %v2567, %v2665
        %v2976 = vsel %vm1036, %v2568, %v2667
        %v2980 = vsel %vm1036, %v2569, %v2669
        %v2984 = vsel %vm1036, %v2570, %v2671
        %v2988 = vsel %vm1036, %v2571, %v2673
        %v2992 = vsel %vm1036, %v2572, %v2675
        %v2996 = vsel %vm1036, %v2573, %v2677
        %v3000 = vsel %vm1036, %v2574, %v2679
        %v3004 = vsel %vm1036, %v2575, %v2681
        %v3008 = vsel %vm1036, %v2576, %v2683
        %v3012 = vsel %vm1036, %v2577, %v2685
        %v3016 = vsel %vm1036, %v2578, %v2687
        %v3020 = vsel %vm1036, %v2579, %v2689
        %v3024 = vsel %vm1036, %v2580, %v2691
        %v3028 = vsel %vm1036, %v2581, %v2693
        %v3030 = vld [vmem:[%s4] sm:$0xf]
        %v3031 = vld [vmem:[%s4 + $0x4] sm:$0xf]
        %v3032 = vld [vmem:[%s4 + $0x8] sm:$0xf]
        %v3033 = vld [vmem:[%s4 + $0xc] sm:$0xf]
        %v3034 = vld [vmem:[%s4 + $0x10] sm:$0xf]
        %v3035 = vld [vmem:[%s4 + $0x14] sm:$0xf]
        %v3036 = vld [vmem:[%s4 + $0x18] sm:$0xf]
        %v3037 = vld [vmem:[%s4 + $0x1c] sm:$0xf]
        %v3038 = vld [vmem:[%s4 + $0x20] sm:$0xf]
        %v3039 = vld [vmem:[%s4 + $0x24] sm:$0xf]
        %v3040 = vld [vmem:[%s4 + $0x28] sm:$0xf]
        %v3041 = vld [vmem:[%s4 + $0x2c] sm:$0xf]
        %v3042 = vld [vmem:[%s4 + $0x30] sm:$0xf]
        %v3043 = vld [vmem:[%s4 + $0x34] sm:$0xf]
        %v3044 = vld [vmem:[%s4 + $0x38] sm:$0xf]
        %v3045 = vld [vmem:[%s4 + $0x3c] sm:$0xf]
        %v3046 = vld [vmem:[%s4 + $0x40] sm:$0xf]
        %v3047 = vld [vmem:[%s4 + $0x44] sm:$0xf]
        %v3048 = vld [vmem:[%s4 + $0x48] sm:$0xf]
        %v3049 = vld [vmem:[%s4 + $0x4c] sm:$0xf]
        %v3050 = vld [vmem:[%s4 + $0x50] sm:$0xf]
        %v3051 = vld [vmem:[%s4 + $0x54] sm:$0xf]
        %v3052 = vld [vmem:[%s4 + $0x58] sm:$0xf]
        %v3053 = vld [vmem:[%s4 + $0x5c] sm:$0xf]
        %v3054 = vld [vmem:[%s4 + $0x60] sm:$0xf]
        %v3055 = vld [vmem:[%s4 + $0x64] sm:$0xf]
        %v3056 = vld [vmem:[%s4 + $0x68] sm:$0xf]
        %v3057 = vld [vmem:[%s4 + $0x6c] sm:$0xf]
        %v3058 = vld [vmem:[%s4 + $0x70] sm:$0xf]
        %v3059 = vld [vmem:[%s4 + $0x74] sm:$0xf]
        %v3060 = vld [vmem:[%s4 + $0x78] sm:$0xf]
        %v3061 = vld [vmem:[%s4 + $0x7c] sm:$0xf]
        %v3062 = vld [vmem:[%s4 + $0x80] sm:$0xf]
        %v3063 = vld [vmem:[%s4 + $0x84] sm:$0xf]
        %v3064 = vld [vmem:[%s4 + $0x88] sm:$0xf]
        %v3065 = vld [vmem:[%s4 + $0x8c] sm:$0xf]
        %v3066 = vld [vmem:[%s4 + $0x90] sm:$0xf]
        %v3067 = vld [vmem:[%s4 + $0x94] sm:$0xf]
        %v3068 = vld [vmem:[%s4 + $0x98] sm:$0xf]
        %v3069 = vld [vmem:[%s4 + $0x9c] sm:$0xf]
        %v3070 = vld [vmem:[%s4 + $0xa0] sm:$0xf]
        %v3071 = vld [vmem:[%s4 + $0xa4] sm:$0xf]
        %v3072 = vld [vmem:[%s4 + $0xa8] sm:$0xf]
        %v3073 = vld [vmem:[%s4 + $0xac] sm:$0xf]
        %v3074 = vld [vmem:[%s4 + $0xb0] sm:$0xf]
        %v3075 = vld [vmem:[%s4 + $0xb4] sm:$0xf]
        %v3076 = vld [vmem:[%s4 + $0xb8] sm:$0xf]
        %v3077 = vld [vmem:[%s4 + $0xbc] sm:$0xf]
        %v3078 = vld [vmem:[%s4 + $0xc0] sm:$0xf]
        %v3079 = vld [vmem:[%s4 + $0xc4] sm:$0xf]
        %v3080 = vld [vmem:[%s4 + $0xc8] sm:$0xf]
        %v3081 = vld [vmem:[%s4 + $0xcc] sm:$0xf]
        %v3082 = vld [vmem:[%s4 + $0xd0] sm:$0xf]
        %v3083 = vld [vmem:[%s4 + $0xd4] sm:$0xf]
        %v3084 = vld [vmem:[%s4 + $0xd8] sm:$0xf]
        %v3085 = vld [vmem:[%s4 + $0xdc] sm:$0xf]
        %v3086 = vld [vmem:[%s4 + $0xe0] sm:$0xf]
        %v3087 = vld [vmem:[%s4 + $0xe4] sm:$0xf]
        %v3088 = vld [vmem:[%s4 + $0xe8] sm:$0xf]
        %v3089 = vld [vmem:[%s4 + $0xec] sm:$0xf]
        %v3090 = vld [vmem:[%s4 + $0xf0] sm:$0xf]
        %v3091 = vld [vmem:[%s4 + $0xf4] sm:$0xf]
        %v3092 = vld [vmem:[%s4 + $0xf8] sm:$0xf]
        %v3093 = vld [vmem:[%s4 + $0xfc] sm:$0xf]
        %v3094 = vld [vmem:[%s4 + $0x100] sm:$0xf]
        %v3095 = vld [vmem:[%s4 + $0x104] sm:$0xf]
        %v3096 = vld [vmem:[%s4 + $0x108] sm:$0xf]
        %v3097 = vld [vmem:[%s4 + $0x10c] sm:$0xf]
        %v3098 = vld [vmem:[%s4 + $0x110] sm:$0xf]
        %v3099 = vld [vmem:[%s4 + $0x114] sm:$0xf]
        %v3100 = vld [vmem:[%s4 + $0x118] sm:$0xf]
        %v3101 = vld [vmem:[%s4 + $0x11c] sm:$0xf]
        %v3102 = vld [vmem:[%s5] sm:$0x1]
        %v3104 = vperm.slane %v3102, 0
        %v3178 = vunpack.c.l.b16 %v3030
        %v3179 = vunpack.c.l.b16 %v3031
        %v3180 = vunpack.c.l.b16 %v3032
        %v3181 = vunpack.c.l.b16 %v3033
        %v3182 = vunpack.c.l.b16 %v3034
        %v3183 = vunpack.c.l.b16 %v3035
        %v3184 = vunpack.c.l.b16 %v3036
        %v3185 = vunpack.c.l.b16 %v3037
        %v3186 = vunpack.c.l.b16 %v3038
        %v3187 = vunpack.c.l.b16 %v3039
        %v3188 = vunpack.c.l.b16 %v3040
        %v3189 = vunpack.c.l.b16 %v3041
        %v3190 = vunpack.c.l.b16 %v3042
        %v3191 = vunpack.c.l.b16 %v3043
        %v3192 = vunpack.c.l.b16 %v3044
        %v3193 = vunpack.c.l.b16 %v3045
        %v3194 = vunpack.c.l.b16 %v3046
        %v3195 = vunpack.c.l.b16 %v3047
        %v3196 = vunpack.c.l.b16 %v3048
        %v3197 = vunpack.c.l.b16 %v3049
        %v3198 = vunpack.c.l.b16 %v3050
        %v3199 = vunpack.c.l.b16 %v3051
        %v3200 = vunpack.c.l.b16 %v3052
        %v3201 = vunpack.c.l.b16 %v3053
        %v3202 = vunpack.c.l.b16 %v3054
        %v3203 = vunpack.c.l.b16 %v3055
        %v3204 = vunpack.c.l.b16 %v3056
        %v3205 = vunpack.c.l.b16 %v3057
        %v3206 = vunpack.c.l.b16 %v3058
        %v3207 = vunpack.c.l.b16 %v3059
        %v3208 = vunpack.c.l.b16 %v3060
        %v3209 = vunpack.c.l.b16 %v3061
        %v3210 = vunpack.c.l.b16 %v3062
        %v3211 = vunpack.c.l.b16 %v3063
        %v3212 = vunpack.c.l.b16 %v3064
        %v3213 = vunpack.c.l.b16 %v3065
        %v3214 = vunpack.c.l.b16 %v3066
        %v3215 = vunpack.c.l.b16 %v3067
        %v3216 = vunpack.c.l.b16 %v3068
        %v3217 = vunpack.c.l.b16 %v3069
        %v3218 = vunpack.c.l.b16 %v3070
        %v3219 = vunpack.c.l.b16 %v3071
        %v3220 = vunpack.c.l.b16 %v3072
        %v3221 = vunpack.c.l.b16 %v3073
        %v3222 = vunpack.c.l.b16 %v3074
        %v3223 = vunpack.c.l.b16 %v3075
        %v3224 = vunpack.c.l.b16 %v3076
        %v3225 = vunpack.c.l.b16 %v3077
        %v3226 = vunpack.c.l.b16 %v3078
        %v3227 = vunpack.c.l.b16 %v3079
        %v3228 = vunpack.c.l.b16 %v3080
        %v3229 = vunpack.c.l.b16 %v3081
        %v3230 = vunpack.c.l.b16 %v3082
        %v3231 = vunpack.c.l.b16 %v3083
        %v3232 = vunpack.c.l.b16 %v3084
        %v3233 = vunpack.c.l.b16 %v3085
        %v3234 = vunpack.c.l.b16 %v3086
        %v3235 = vunpack.c.l.b16 %v3087
        %v3236 = vunpack.c.l.b16 %v3088
        %v3237 = vunpack.c.l.b16 %v3089
        %v3238 = vunpack.c.l.b16 %v3090
        %v3239 = vunpack.c.l.b16 %v3091
        %v3240 = vunpack.c.l.b16 %v3092
        %v3241 = vunpack.c.l.b16 %v3093
        %v3242 = vunpack.c.l.b16 %v3094
        %v3243 = vunpack.c.l.b16 %v3095
        %v3244 = vunpack.c.l.b16 %v3096
        %v3245 = vunpack.c.l.b16 %v3097
        %v3246 = vunpack.c.l.b16 %v3098
        %v3247 = vunpack.c.l.b16 %v3099
        %v3248 = vunpack.c.l.b16 %v3100
        %v3249 = vunpack.c.l.b16 %v3101
        %v3250 = vpack.c.b16 %v3179, %v3178
        %v3251 = vpack.c.b16 %v3181, %v3180
        %v3252 = vpack.c.b16 %v3183, %v3182
        %v3253 = vpack.c.b16 %v3185, %v3184
        %v3254 = vpack.c.b16 %v3187, %v3186
        %v3255 = vpack.c.b16 %v3189, %v3188
        %v3256 = vpack.c.b16 %v3191, %v3190
        %v3257 = vpack.c.b16 %v3193, %v3192
        %v3258 = vpack.c.b16 %v3195, %v3194
        %v3259 = vpack.c.b16 %v3197, %v3196
        %v3260 = vpack.c.b16 %v3199, %v3198
        %v3261 = vpack.c.b16 %v3201, %v3200
        %v3262 = vpack.c.b16 %v3203, %v3202
        %v3263 = vpack.c.b16 %v3205, %v3204
        %v3264 = vpack.c.b16 %v3207, %v3206
        %v3265 = vpack.c.b16 %v3209, %v3208
        %v3266 = vpack.c.b16 %v3211, %v3210
        %v3267 = vpack.c.b16 %v3213, %v3212
        %v3268 = vpack.c.b16 %v3215, %v3214
        %v3269 = vpack.c.b16 %v3217, %v3216
        %v3270 = vpack.c.b16 %v3219, %v3218
        %v3271 = vpack.c.b16 %v3221, %v3220
        %v3272 = vpack.c.b16 %v3223, %v3222
        %v3273 = vpack.c.b16 %v3225, %v3224
        %v3274 = vpack.c.b16 %v3227, %v3226
        %v3275 = vpack.c.b16 %v3229, %v3228
        %v3276 = vpack.c.b16 %v3231, %v3230
        %v3277 = vpack.c.b16 %v3233, %v3232
        %v3278 = vpack.c.b16 %v3235, %v3234
        %v3279 = vpack.c.b16 %v3237, %v3236
        %v3280 = vpack.c.b16 %v3239, %v3238
        %v3281 = vpack.c.b16 %v3241, %v3240
        %v3282 = vpack.c.b16 %v3243, %v3242
        %v3283 = vpack.c.b16 %v3245, %v3244
        %v3284 = vpack.c.b16 %v3247, %v3246
        %v3285 = vpack.c.b16 %v3249, %v3248
        %v3323 = vsel %vm1036, %v2758, 0
        %v3326 = vsel %vm1036, %v2759, 0
        %v3329 = vsel %vm1036, %v2760, 0
        %v3332 = vsel %vm1036, %v2761, 0
        %v3335 = vsel %vm1036, %v2762, 0
        %v3338 = vsel %vm1036, %v2763, 0
        %v3341 = vsel %vm1036, %v2764, 0
        %v3344 = vsel %vm1036, %v2765, 0
        %v3347 = vsel %vm1036, %v2766, 0
        %v3350 = vsel %vm1036, %v2767, 0
        %v3353 = vsel %vm1036, %v2768, 0
        %v3356 = vsel %vm1036, %v2769, 0
        %v3359 = vsel %vm1036, %v2770, 0
        %v3362 = vsel %vm1036, %v2771, 0
        %v3365 = vsel %vm1036, %v2772, 0
        %v3368 = vsel %vm1036, %v2773, 0
        %3370 = vmatpush.bf16.msra.mxu0 %v3257
        %3371 = vmatpush.bf16.msra.mxu0 %v3256
        %3372 = vmatpush.bf16.msra.mxu0 %v3255
        %3373 = vmatpush.bf16.msra.mxu0 %v3254
        %3374 = vmatpush.bf16.msra.mxu0 %v3253
        %3375 = vmatpush.bf16.msra.mxu0 %v3252
        %3376 = vmatpush.bf16.msra.mxu0 %v3251
        %3377 = vmatpush.bf16.msra.mxu0 %v3250
        %3378 = vmatmul.bf16.gmra.mxu0 %v2776
        %v3379 = vpop.f32.mrf.mxu0
        %v3380 = vadd.f32 %v3104, %v3379
        %v3381 = vpop.f32.mrf.mxu0
        %v3382 = vadd.f32 %v3104, %v3381
        %3383 = vmatmul.bf16.gmra.mxu0 %v2780
        %v3384 = vpop.f32.mrf.mxu0
        %v3385 = vadd.f32 %v3104, %v3384
        %v3386 = vpop.f32.mrf.mxu0
        %v3387 = vadd.f32 %v3104, %v3386
        %3388 = vmatmul.bf16.gmra.mxu0 %v2784
        %v3389 = vpop.f32.mrf.mxu0
        %v3390 = vadd.f32 %v3104, %v3389
        %v3391 = vpop.f32.mrf.mxu0
        %v3392 = vadd.f32 %v3104, %v3391
        %3393 = vmatmul.bf16.gmra.mxu0 %v2788
        %v3394 = vpop.f32.mrf.mxu0
        %v3395 = vadd.f32 %v3104, %v3394
        %v3396 = vpop.f32.mrf.mxu0
        %v3397 = vadd.f32 %v3104, %v3396
        %3398 = vmatmul.bf16.gmra.mxu0 %v2792
        %v3399 = vpop.f32.mrf.mxu0
        %v3400 = vadd.f32 %v3104, %v3399
        %v3401 = vpop.f32.mrf.mxu0
        %v3402 = vadd.f32 %v3104, %v3401
        %3403 = vmatmul.bf16.gmra.mxu0 %v2796
        %v3404 = vpop.f32.mrf.mxu0
        %v3405 = vadd.f32 %v3104, %v3404
        %v3406 = vpop.f32.mrf.mxu0
        %v3407 = vadd.f32 %v3104, %v3406
        %3408 = vmatmul.bf16.gmra.mxu0 %v2800
        %v3409 = vpop.f32.mrf.mxu0
        %v3410 = vadd.f32 %v3104, %v3409
        %v3411 = vpop.f32.mrf.mxu0
        %v3412 = vadd.f32 %v3104, %v3411
        %3413 = vmatmul.bf16.gmra.mxu0 %v2804
        %v3414 = vpop.f32.mrf.mxu0
        %v3415 = vadd.f32 %v3104, %v3414
        %v3416 = vpop.f32.mrf.mxu0
        %v3417 = vadd.f32 %v3104, %v3416
        %3418 = vmatmul.bf16.gmra.mxu0 %v2808
        %v3419 = vpop.f32.mrf.mxu0
        %v3420 = vadd.f32 %v3104, %v3419
        %v3421 = vpop.f32.mrf.mxu0
        %v3422 = vadd.f32 %v3104, %v3421
        %3423 = vmatmul.bf16.gmra.mxu0 %v2812
        %v3424 = vpop.f32.mrf.mxu0
        %v3425 = vadd.f32 %v3104, %v3424
        %v3426 = vpop.f32.mrf.mxu0
        %v3427 = vadd.f32 %v3104, %v3426
        %3428 = vmatmul.bf16.gmra.mxu0 %v2816
        %v3429 = vpop.f32.mrf.mxu0
        %v3430 = vadd.f32 %v3104, %v3429
        %v3431 = vpop.f32.mrf.mxu0
        %v3432 = vadd.f32 %v3104, %v3431
        %3433 = vmatmul.bf16.gmra.mxu0 %v2820
        %v3434 = vpop.f32.mrf.mxu0
        %v3435 = vadd.f32 %v3104, %v3434
        %v3436 = vpop.f32.mrf.mxu0
        %v3437 = vadd.f32 %v3104, %v3436
        %3438 = vmatmul.bf16.gmra.mxu0 %v2824
        %v3439 = vpop.f32.mrf.mxu0
        %v3440 = vadd.f32 %v3104, %v3439
        %v3441 = vpop.f32.mrf.mxu0
        %v3442 = vadd.f32 %v3104, %v3441
        %3443 = vmatmul.bf16.gmra.mxu0 %v2828
        %v3444 = vpop.f32.mrf.mxu0
        %v3445 = vadd.f32 %v3104, %v3444
        %v3446 = vpop.f32.mrf.mxu0
        %v3447 = vadd.f32 %v3104, %v3446
        %3448 = vmatmul.bf16.gmra.mxu0 %v2832
        %v3449 = vpop.f32.mrf.mxu0
        %v3450 = vadd.f32 %v3104, %v3449
        %v3451 = vpop.f32.mrf.mxu0
        %v3452 = vadd.f32 %v3104, %v3451
        %3453 = vmatmul.bf16.gmra.mxu0 %v2836
        %v3454 = vpop.f32.mrf.mxu0
        %v3455 = vadd.f32 %v3104, %v3454
        %v3456 = vpop.f32.mrf.mxu0
        %v3457 = vadd.f32 %v3104, %v3456
        %3458 = vdwg.mxu0
        %3459 = vmatpush.bf16.msra.mxu0 %v3265
        %3460 = vmatpush.bf16.msra.mxu0 %v3264
        %3461 = vmatpush.bf16.msra.mxu0 %v3263
        %3462 = vmatpush.bf16.msra.mxu0 %v3262
        %3463 = vmatpush.bf16.msra.mxu0 %v3261
        %3464 = vmatpush.bf16.msra.mxu0 %v3260
        %3465 = vmatpush.bf16.msra.mxu0 %v3259
        %3466 = vmatpush.bf16.msra.mxu0 %v3258
        %3467 = vmatmul.bf16.gmra.mxu0 %v2840
        %v3468 = vpop.f32.mrf.mxu0
        %v3469 = vadd.f32 %v3380, %v3468
        %v3470 = vpop.f32.mrf.mxu0
        %v3471 = vadd.f32 %v3382, %v3470
        %3472 = vmatmul.bf16.gmra.mxu0 %v2844
        %v3473 = vpop.f32.mrf.mxu0
        %v3474 = vadd.f32 %v3385, %v3473
        %v3475 = vpop.f32.mrf.mxu0
        %v3476 = vadd.f32 %v3387, %v3475
        %3477 = vmatmul.bf16.gmra.mxu0 %v2848
        %v3478 = vpop.f32.mrf.mxu0
        %v3479 = vadd.f32 %v3390, %v3478
        %v3480 = vpop.f32.mrf.mxu0
        %v3481 = vadd.f32 %v3392, %v3480
        %3482 = vmatmul.bf16.gmra.mxu0 %v2852
        %v3483 = vpop.f32.mrf.mxu0
        %v3484 = vadd.f32 %v3395, %v3483
        %v3485 = vpop.f32.mrf.mxu0
        %v3486 = vadd.f32 %v3397, %v3485
        %3487 = vmatmul.bf16.gmra.mxu0 %v2856
        %v3488 = vpop.f32.mrf.mxu0
        %v3489 = vadd.f32 %v3400, %v3488
        %v3490 = vpop.f32.mrf.mxu0
        %v3491 = vadd.f32 %v3402, %v3490
        %3492 = vmatmul.bf16.gmra.mxu0 %v2860
        %v3493 = vpop.f32.mrf.mxu0
        %v3494 = vadd.f32 %v3405, %v3493
        %v3495 = vpop.f32.mrf.mxu0
        %v3496 = vadd.f32 %v3407, %v3495
        %3497 = vmatmul.bf16.gmra.mxu0 %v2864
        %v3498 = vpop.f32.mrf.mxu0
        %v3499 = vadd.f32 %v3410, %v3498
        %v3500 = vpop.f32.mrf.mxu0
        %v3501 = vadd.f32 %v3412, %v3500
        %3502 = vmatmul.bf16.gmra.mxu0 %v2868
        %v3503 = vpop.f32.mrf.mxu0
        %v3504 = vadd.f32 %v3415, %v3503
        %v3505 = vpop.f32.mrf.mxu0
        %v3506 = vadd.f32 %v3417, %v3505
        %3507 = vmatmul.bf16.gmra.mxu0 %v2872
        %v3508 = vpop.f32.mrf.mxu0
        %v3509 = vadd.f32 %v3420, %v3508
        %v3510 = vpop.f32.mrf.mxu0
        %v3511 = vadd.f32 %v3422, %v3510
        %3512 = vmatmul.bf16.gmra.mxu0 %v2876
        %v3513 = vpop.f32.mrf.mxu0
        %v3514 = vadd.f32 %v3425, %v3513
        %v3515 = vpop.f32.mrf.mxu0
        %v3516 = vadd.f32 %v3427, %v3515
        %3517 = vmatmul.bf16.gmra.mxu0 %v2880
        %v3518 = vpop.f32.mrf.mxu0
        %v3519 = vadd.f32 %v3430, %v3518
        %v3520 = vpop.f32.mrf.mxu0
        %v3521 = vadd.f32 %v3432, %v3520
        %3522 = vmatmul.bf16.gmra.mxu0 %v2884
        %v3523 = vpop.f32.mrf.mxu0
        %v3524 = vadd.f32 %v3435, %v3523
        %v3525 = vpop.f32.mrf.mxu0
        %v3526 = vadd.f32 %v3437, %v3525
        %3527 = vmatmul.bf16.gmra.mxu0 %v2888
        %v3528 = vpop.f32.mrf.mxu0
        %v3529 = vadd.f32 %v3440, %v3528
        %v3530 = vpop.f32.mrf.mxu0
        %v3531 = vadd.f32 %v3442, %v3530
        %3532 = vmatmul.bf16.gmra.mxu0 %v2892
        %v3533 = vpop.f32.mrf.mxu0
        %v3534 = vadd.f32 %v3445, %v3533
        %v3535 = vpop.f32.mrf.mxu0
        %v3536 = vadd.f32 %v3447, %v3535
        %3537 = vmatmul.bf16.gmra.mxu0 %v2896
        %v3538 = vpop.f32.mrf.mxu0
        %v3539 = vadd.f32 %v3450, %v3538
        %v3540 = vpop.f32.mrf.mxu0
        %v3541 = vadd.f32 %v3452, %v3540
        %3542 = vmatmul.bf16.gmra.mxu0 %v2900
        %v3543 = vpop.f32.mrf.mxu0
        %v3544 = vadd.f32 %v3455, %v3543
        %v3545 = vpop.f32.mrf.mxu0
        %v3546 = vadd.f32 %v3457, %v3545
        %3547 = vdwg.mxu0
        %3548 = vmatpush.bf16.msra.mxu0 %v3273
        %3549 = vmatpush.bf16.msra.mxu0 %v3272
        %3550 = vmatpush.bf16.msra.mxu0 %v3271
        %3551 = vmatpush.bf16.msra.mxu0 %v3270
        %3552 = vmatpush.bf16.msra.mxu0 %v3269
        %3553 = vmatpush.bf16.msra.mxu0 %v3268
        %3554 = vmatpush.bf16.msra.mxu0 %v3267
        %3555 = vmatpush.bf16.msra.mxu0 %v3266
        %3556 = vmatmul.bf16.gmra.mxu0 %v2904
        %v3557 = vpop.f32.mrf.mxu0
        %v3558 = vadd.f32 %v3469, %v3557
        %v3559 = vpop.f32.mrf.mxu0
        %v3560 = vadd.f32 %v3471, %v3559
        %3561 = vmatmul.bf16.gmra.mxu0 %v2908
        %v3562 = vpop.f32.mrf.mxu0
        %v3563 = vadd.f32 %v3474, %v3562
        %v3564 = vpop.f32.mrf.mxu0
        %v3565 = vadd.f32 %v3476, %v3564
        %3566 = vmatmul.bf16.gmra.mxu0 %v2912
        %v3567 = vpop.f32.mrf.mxu0
        %v3568 = vadd.f32 %v3479, %v3567
        %v3569 = vpop.f32.mrf.mxu0
        %v3570 = vadd.f32 %v3481, %v3569
        %3571 = vmatmul.bf16.gmra.mxu0 %v2916
        %v3572 = vpop.f32.mrf.mxu0
        %v3573 = vadd.f32 %v3484, %v3572
        %v3574 = vpop.f32.mrf.mxu0
        %v3575 = vadd.f32 %v3486, %v3574
        %3576 = vmatmul.bf16.gmra.mxu0 %v2920
        %v3577 = vpop.f32.mrf.mxu0
        %v3578 = vadd.f32 %v3489, %v3577
        %v3579 = vpop.f32.mrf.mxu0
        %v3580 = vadd.f32 %v3491, %v3579
        %3581 = vmatmul.bf16.gmra.mxu0 %v2924
        %v3582 = vpop.f32.mrf.mxu0
        %v3583 = vadd.f32 %v3494, %v3582
        %v3584 = vpop.f32.mrf.mxu0
        %v3585 = vadd.f32 %v3496, %v3584
        %3586 = vmatmul.bf16.gmra.mxu0 %v2928
        %v3587 = vpop.f32.mrf.mxu0
        %v3588 = vadd.f32 %v3499, %v3587
        %v3589 = vpop.f32.mrf.mxu0
        %v3590 = vadd.f32 %v3501, %v3589
        %3591 = vmatmul.bf16.gmra.mxu0 %v2932
        %v3592 = vpop.f32.mrf.mxu0
        %v3593 = vadd.f32 %v3504, %v3592
        %v3594 = vpop.f32.mrf.mxu0
        %v3595 = vadd.f32 %v3506, %v3594
        %3596 = vmatmul.bf16.gmra.mxu0 %v2936
        %v3597 = vpop.f32.mrf.mxu0
        %v3598 = vadd.f32 %v3509, %v3597
        %v3599 = vpop.f32.mrf.mxu0
        %v3600 = vadd.f32 %v3511, %v3599
        %3601 = vmatmul.bf16.gmra.mxu0 %v2940
        %v3602 = vpop.f32.mrf.mxu0
        %v3603 = vadd.f32 %v3514, %v3602
        %v3604 = vpop.f32.mrf.mxu0
        %v3605 = vadd.f32 %v3516, %v3604
        %3606 = vmatmul.bf16.gmra.mxu0 %v2944
        %v3607 = vpop.f32.mrf.mxu0
        %v3608 = vadd.f32 %v3519, %v3607
        %v3609 = vpop.f32.mrf.mxu0
        %v3610 = vadd.f32 %v3521, %v3609
        %3611 = vmatmul.bf16.gmra.mxu0 %v2948
        %v3612 = vpop.f32.mrf.mxu0
        %v3613 = vadd.f32 %v3524, %v3612
        %v3614 = vpop.f32.mrf.mxu0
        %v3615 = vadd.f32 %v3526, %v3614
        %3616 = vmatmul.bf16.gmra.mxu0 %v2952
        %v3617 = vpop.f32.mrf.mxu0
        %v3618 = vadd.f32 %v3529, %v3617
        %v3619 = vpop.f32.mrf.mxu0
        %v3620 = vadd.f32 %v3531, %v3619
        %3621 = vmatmul.bf16.gmra.mxu0 %v2956
        %v3622 = vpop.f32.mrf.mxu0
        %v3623 = vadd.f32 %v3534, %v3622
        %v3624 = vpop.f32.mrf.mxu0
        %v3625 = vadd.f32 %v3536, %v3624
        %3626 = vmatmul.bf16.gmra.mxu0 %v2960
        %v3627 = vpop.f32.mrf.mxu0
        %v3628 = vadd.f32 %v3539, %v3627
        %v3629 = vpop.f32.mrf.mxu0
        %v3630 = vadd.f32 %v3541, %v3629
        %3631 = vmatmul.bf16.gmra.mxu0 %v2964
        %v3632 = vpop.f32.mrf.mxu0
        %v3633 = vadd.f32 %v3544, %v3632
        %v3634 = vpop.f32.mrf.mxu0
        %v3635 = vadd.f32 %v3546, %v3634
        %3636 = vdwg.mxu0
        %3637 = vmatpush.bf16.msra.mxu0 %v3281
        %3638 = vmatpush.bf16.msra.mxu0 %v3280
        %3639 = vmatpush.bf16.msra.mxu0 %v3279
        %3640 = vmatpush.bf16.msra.mxu0 %v3278
        %3641 = vmatpush.bf16.msra.mxu0 %v3277
        %3642 = vmatpush.bf16.msra.mxu0 %v3276
        %3643 = vmatpush.bf16.msra.mxu0 %v3275
        %3644 = vmatpush.bf16.msra.mxu0 %v3274
        %3645 = vmatmul.bf16.gmra.mxu0 %v2968
        %v3646 = vpop.f32.mrf.mxu0
        %v3647 = vadd.f32 %v3558, %v3646
        %v3648 = vpop.f32.mrf.mxu0
        %v3649 = vadd.f32 %v3560, %v3648
        %3650 = vmatmul.bf16.gmra.mxu0 %v2972
        %v3651 = vpop.f32.mrf.mxu0
        %v3652 = vadd.f32 %v3563, %v3651
        %v3653 = vpop.f32.mrf.mxu0
        %v3654 = vadd.f32 %v3565, %v3653
        %3655 = vmatmul.bf16.gmra.mxu0 %v2976
        %v3656 = vpop.f32.mrf.mxu0
        %v3657 = vadd.f32 %v3568, %v3656
        %v3658 = vpop.f32.mrf.mxu0
        %v3659 = vadd.f32 %v3570, %v3658
        %3660 = vmatmul.bf16.gmra.mxu0 %v2980
        %v3661 = vpop.f32.mrf.mxu0
        %v3662 = vadd.f32 %v3573, %v3661
        %v3663 = vpop.f32.mrf.mxu0
        %v3664 = vadd.f32 %v3575, %v3663
        %3665 = vmatmul.bf16.gmra.mxu0 %v2984
        %v3666 = vpop.f32.mrf.mxu0
        %v3667 = vadd.f32 %v3578, %v3666
        %v3668 = vpop.f32.mrf.mxu0
        %v3669 = vadd.f32 %v3580, %v3668
        %3670 = vmatmul.bf16.gmra.mxu0 %v2988
        %v3671 = vpop.f32.mrf.mxu0
        %v3672 = vadd.f32 %v3583, %v3671
        %v3673 = vpop.f32.mrf.mxu0
        %v3674 = vadd.f32 %v3585, %v3673
        %3675 = vmatmul.bf16.gmra.mxu0 %v2992
        %v3676 = vpop.f32.mrf.mxu0
        %v3677 = vadd.f32 %v3588, %v3676
        %v3678 = vpop.f32.mrf.mxu0
        %v3679 = vadd.f32 %v3590, %v3678
        %3680 = vmatmul.bf16.gmra.mxu0 %v2996
        %v3681 = vpop.f32.mrf.mxu0
        %v3682 = vadd.f32 %v3593, %v3681
        %v3683 = vpop.f32.mrf.mxu0
        %v3684 = vadd.f32 %v3595, %v3683
        %3685 = vmatmul.bf16.gmra.mxu0 %v3000
        %v3686 = vpop.f32.mrf.mxu0
        %v3687 = vadd.f32 %v3598, %v3686
        %v3688 = vpop.f32.mrf.mxu0
        %v3689 = vadd.f32 %v3600, %v3688
        %3690 = vmatmul.bf16.gmra.mxu0 %v3004
        %v3691 = vpop.f32.mrf.mxu0
        %v3692 = vadd.f32 %v3603, %v3691
        %v3693 = vpop.f32.mrf.mxu0
        %v3694 = vadd.f32 %v3605, %v3693
        %3695 = vmatmul.bf16.gmra.mxu0 %v3008
        %v3696 = vpop.f32.mrf.mxu0
        %v3697 = vadd.f32 %v3608, %v3696
        %v3698 = vpop.f32.mrf.mxu0
        %v3699 = vadd.f32 %v3610, %v3698
        %3700 = vmatmul.bf16.gmra.mxu0 %v3012
        %v3701 = vpop.f32.mrf.mxu0
        %v3702 = vadd.f32 %v3613, %v3701
        %v3703 = vpop.f32.mrf.mxu0
        %v3704 = vadd.f32 %v3615, %v3703
        %3705 = vmatmul.bf16.gmra.mxu0 %v3016
        %v3706 = vpop.f32.mrf.mxu0
        %v3707 = vadd.f32 %v3618, %v3706
        %v3708 = vpop.f32.mrf.mxu0
        %v3709 = vadd.f32 %v3620, %v3708
        %3710 = vmatmul.bf16.gmra.mxu0 %v3020
        %v3711 = vpop.f32.mrf.mxu0
        %v3712 = vadd.f32 %v3623, %v3711
        %v3713 = vpop.f32.mrf.mxu0
        %v3714 = vadd.f32 %v3625, %v3713
        %3715 = vmatmul.bf16.gmra.mxu0 %v3024
        %v3716 = vpop.f32.mrf.mxu0
        %v3717 = vadd.f32 %v3628, %v3716
        %v3718 = vpop.f32.mrf.mxu0
        %v3719 = vadd.f32 %v3630, %v3718
        %3720 = vmatmul.bf16.gmra.mxu0 %v3028
        %v3721 = vpop.f32.mrf.mxu0
        %v3722 = vadd.f32 %v3633, %v3721
        %v3723 = vpop.f32.mrf.mxu0
        %v3724 = vadd.f32 %v3635, %v3723
        %3725 = vdwg.mxu0
        %3726 = vmatpush.bf16.msra.mxu0 0
        %3727 = vmatpush.bf16.msra.mxu0 0
        %3728 = vmatpush.bf16.msra.mxu0 0
        %3729 = vmatpush.bf16.msra.mxu0 0
        %3730 = vmatpush.bf16.msra.mxu0 %v3285
        %3731 = vmatpush.bf16.msra.mxu0 %v3284
        %3732 = vmatpush.bf16.msra.mxu0 %v3283
        %3733 = vmatpush.bf16.msra.mxu0 %v3282
        %3734 = vmatmul.bf16.gmra.mxu0 %v3323
        %v3735 = vpop.f32.mrf.mxu0
        %v3736 = vadd.f32 %v3647, %v3735
        %v3737 = vpop.f32.mrf.mxu0
        %v3738 = vadd.f32 %v3649, %v3737
        %3739 = vmatmul.bf16.gmra.mxu0 %v3326
        %v3740 = vpop.f32.mrf.mxu0
        %v3741 = vadd.f32 %v3652, %v3740
        %v3742 = vpop.f32.mrf.mxu0
        %v3743 = vadd.f32 %v3654, %v3742
        %3744 = vmatmul.bf16.gmra.mxu0 %v3329
        %v3745 = vpop.f32.mrf.mxu0
        %v3746 = vadd.f32 %v3657, %v3745
        %v3747 = vpop.f32.mrf.mxu0
        %v3748 = vadd.f32 %v3659, %v3747
        %3749 = vmatmul.bf16.gmra.mxu0 %v3332
        %v3750 = vpop.f32.mrf.mxu0
        %v3751 = vadd.f32 %v3662, %v3750
        %v3752 = vpop.f32.mrf.mxu0
        %v3753 = vadd.f32 %v3664, %v3752
        %3754 = vmatmul.bf16.gmra.mxu0 %v3335
        %v3755 = vpop.f32.mrf.mxu0
        %v3756 = vadd.f32 %v3667, %v3755
        %v3757 = vpop.f32.mrf.mxu0
        %v3758 = vadd.f32 %v3669, %v3757
        %3759 = vmatmul.bf16.gmra.mxu0 %v3338
        %v3760 = vpop.f32.mrf.mxu0
        %v3761 = vadd.f32 %v3672, %v3760
        %v3762 = vpop.f32.mrf.mxu0
        %v3763 = vadd.f32 %v3674, %v3762
        %3764 = vmatmul.bf16.gmra.mxu0 %v3341
        %v3765 = vpop.f32.mrf.mxu0
        %v3766 = vadd.f32 %v3677, %v3765
        %v3767 = vpop.f32.mrf.mxu0
        %v3768 = vadd.f32 %v3679, %v3767
        %3769 = vmatmul.bf16.gmra.mxu0 %v3344
        %v3770 = vpop.f32.mrf.mxu0
        %v3771 = vadd.f32 %v3682, %v3770
        %v3772 = vpop.f32.mrf.mxu0
        %v3773 = vadd.f32 %v3684, %v3772
        %3774 = vmatmul.bf16.gmra.mxu0 %v3347
        %v3775 = vpop.f32.mrf.mxu0
        %v3776 = vadd.f32 %v3687, %v3775
        %v3777 = vpop.f32.mrf.mxu0
        %v3778 = vadd.f32 %v3689, %v3777
        %3779 = vmatmul.bf16.gmra.mxu0 %v3350
        %v3780 = vpop.f32.mrf.mxu0
        %v3781 = vadd.f32 %v3692, %v3780
        %v3782 = vpop.f32.mrf.mxu0
        %v3783 = vadd.f32 %v3694, %v3782
        %3784 = vmatmul.bf16.gmra.mxu0 %v3353
        %v3785 = vpop.f32.mrf.mxu0
        %v3786 = vadd.f32 %v3697, %v3785
        %v3787 = vpop.f32.mrf.mxu0
        %v3788 = vadd.f32 %v3699, %v3787
        %3789 = vmatmul.bf16.gmra.mxu0 %v3356
        %v3790 = vpop.f32.mrf.mxu0
        %v3791 = vadd.f32 %v3702, %v3790
        %v3792 = vpop.f32.mrf.mxu0
        %v3793 = vadd.f32 %v3704, %v3792
        %3794 = vmatmul.bf16.gmra.mxu0 %v3359
        %v3795 = vpop.f32.mrf.mxu0
        %v3796 = vadd.f32 %v3707, %v3795
        %v3797 = vpop.f32.mrf.mxu0
        %v3798 = vadd.f32 %v3709, %v3797
        %3799 = vmatmul.bf16.gmra.mxu0 %v3362
        %v3800 = vpop.f32.mrf.mxu0
        %v3801 = vadd.f32 %v3712, %v3800
        %v3802 = vpop.f32.mrf.mxu0
        %v3803 = vadd.f32 %v3714, %v3802
        %3804 = vmatmul.bf16.gmra.mxu0 %v3365
        %v3805 = vpop.f32.mrf.mxu0
        %v3806 = vadd.f32 %v3717, %v3805
        %v3807 = vpop.f32.mrf.mxu0
        %v3808 = vadd.f32 %v3719, %v3807
        %3809 = vmatmul.bf16.gmra.mxu0 %v3368
        %v3810 = vpop.f32.mrf.mxu0
        %v3811 = vadd.f32 %v3722, %v3810
        %v3812 = vpop.f32.mrf.mxu0
        %v3813 = vadd.f32 %v3724, %v3812
        %3814 = vdwg.mxu0
        %v3815 = vld [vmem:[#allocation3 + $0x7] sm:$0xff]
        %v3816 = vld [vmem:[#allocation3 + $0xf] sm:$0xff]
        %v3817 = vld [vmem:[#allocation3 + $0x27] sm:$0xff]
        %v3818 = vld [vmem:[#allocation3 + $0x2f] sm:$0xff]
        %v3819 = vld [vmem:[#allocation3 + $0x47] sm:$0xff]
        %v3820 = vld [vmem:[#allocation3 + $0x4f] sm:$0xff]
        %v3821 = vld [vmem:[#allocation3 + $0x67] sm:$0xff]
        %v3822 = vld [vmem:[#allocation3 + $0x6f] sm:$0xff]
        %v3823 = vld [vmem:[#allocation3 + $0x87] sm:$0xff]
        %v3824 = vld [vmem:[#allocation3 + $0x8f] sm:$0xff]
        %v3825 = vld [vmem:[#allocation3 + $0xa7] sm:$0xff]
        %v3826 = vld [vmem:[#allocation3 + $0xaf] sm:$0xff]
        %v3827 = vld [vmem:[#allocation3 + $0xc7] sm:$0xff]
        %v3828 = vld [vmem:[#allocation3 + $0xcf] sm:$0xff]
        %v3829 = vld [vmem:[#allocation3 + $0xe7] sm:$0xff]
        %v3830 = vld [vmem:[#allocation3 + $0xef] sm:$0xff]
        %v3831 = vld [vmem:[#allocation3 + $0x107] sm:$0xff]
        %v3832 = vld [vmem:[#allocation3 + $0x10f] sm:$0xff]
        %v3833 = vld [vmem:[#allocation3 + $0x127] sm:$0xff]
        %v3834 = vld [vmem:[#allocation3 + $0x12f] sm:$0xff]
        %v3835 = vld [vmem:[#allocation3 + $0x147] sm:$0xff]
        %v3836 = vld [vmem:[#allocation3 + $0x14f] sm:$0xff]
        %v3837 = vld [vmem:[#allocation3 + $0x167] sm:$0xff]
        %v3838 = vld [vmem:[#allocation3 + $0x16f] sm:$0xff]
        %v3839 = vld [vmem:[#allocation3 + $0x187] sm:$0xff]
        %v3840 = vld [vmem:[#allocation3 + $0x18f] sm:$0xff]
        %v3841 = vld [vmem:[#allocation3 + $0x1a7] sm:$0xff]
        %v3842 = vld [vmem:[#allocation3 + $0x1af] sm:$0xff]
        %v3843 = vld [vmem:[#allocation3 + $0x1c7] sm:$0xff]
        %v3844 = vld [vmem:[#allocation3 + $0x1cf] sm:$0xff]
        %v3845 = vld [vmem:[#allocation3 + $0x1e7] sm:$0xff]
        %v3846 = vld [vmem:[#allocation3 + $0x1ef] sm:$0xff]
        %v3847 = vpack.c.bf16 %v3815, %v3815
        %v3848 = vpack.c.bf16 %v3816, %v3816
        %v3849 = vpack.c.bf16 %v3817, %v3817
        %v3850 = vpack.c.bf16 %v3818, %v3818
        %v3851 = vpack.c.bf16 %v3819, %v3819
        %v3852 = vpack.c.bf16 %v3820, %v3820
        %v3853 = vpack.c.bf16 %v3821, %v3821
        %v3854 = vpack.c.bf16 %v3822, %v3822
        %v3855 = vpack.c.bf16 %v3823, %v3823
        %v3856 = vpack.c.bf16 %v3824, %v3824
        %v3857 = vpack.c.bf16 %v3825, %v3825
        %v3858 = vpack.c.bf16 %v3826, %v3826
        %v3859 = vpack.c.bf16 %v3827, %v3827
        %v3860 = vpack.c.bf16 %v3828, %v3828
        %v3861 = vpack.c.bf16 %v3829, %v3829
        %v3862 = vpack.c.bf16 %v3830, %v3830
        %v3863 = vpack.c.bf16 %v3831, %v3831
        %v3864 = vpack.c.bf16 %v3832, %v3832
        %v3865 = vpack.c.bf16 %v3833, %v3833
        %v3866 = vpack.c.bf16 %v3834, %v3834
        %v3867 = vpack.c.bf16 %v3835, %v3835
        %v3868 = vpack.c.bf16 %v3836, %v3836
        %v3869 = vpack.c.bf16 %v3837, %v3837
        %v3870 = vpack.c.bf16 %v3838, %v3838
        %v3871 = vpack.c.bf16 %v3839, %v3839
        %v3872 = vpack.c.bf16 %v3840, %v3840
        %v3873 = vpack.c.bf16 %v3841, %v3841
        %v3874 = vpack.c.bf16 %v3842, %v3842
        %v3875 = vpack.c.bf16 %v3843, %v3843
        %v3876 = vpack.c.bf16 %v3844, %v3844
        %v3877 = vpack.c.bf16 %v3845, %v3845
        %v3878 = vpack.c.bf16 %v3846, %v3846
        %v3879 = vld [vmem:[#allocation3 + $0x8] sm:$0xff]
        %v3880 = vld [vmem:[#allocation3 + $0x10] sm:$0xff]
        %v3881 = vld [vmem:[#allocation3 + $0x28] sm:$0xff]
        %v3882 = vld [vmem:[#allocation3 + $0x30] sm:$0xff]
        %v3883 = vld [vmem:[#allocation3 + $0x48] sm:$0xff]
        %v3884 = vld [vmem:[#allocation3 + $0x50] sm:$0xff]
        %v3885 = vld [vmem:[#allocation3 + $0x68] sm:$0xff]
        %v3886 = vld [vmem:[#allocation3 + $0x70] sm:$0xff]
        %v3887 = vld [vmem:[#allocation3 + $0x88] sm:$0xff]
        %v3888 = vld [vmem:[#allocation3 + $0x90] sm:$0xff]
        %v3889 = vld [vmem:[#allocation3 + $0xa8] sm:$0xff]
        %v3890 = vld [vmem:[#allocation3 + $0xb0] sm:$0xff]
        %v3891 = vld [vmem:[#allocation3 + $0xc8] sm:$0xff]
        %v3892 = vld [vmem:[#allocation3 + $0xd0] sm:$0xff]
        %v3893 = vld [vmem:[#allocation3 + $0xe8] sm:$0xff]
        %v3894 = vld [vmem:[#allocation3 + $0xf0] sm:$0xff]
        %v3895 = vld [vmem:[#allocation3 + $0x108] sm:$0xff]
        %v3896 = vld [vmem:[#allocation3 + $0x110] sm:$0xff]
        %v3897 = vld [vmem:[#allocation3 + $0x128] sm:$0xff]
        %v3898 = vld [vmem:[#allocation3 + $0x130] sm:$0xff]
        %v3899 = vld [vmem:[#allocation3 + $0x148] sm:$0xff]
        %v3900 = vld [vmem:[#allocation3 + $0x150] sm:$0xff]
        %v3901 = vld [vmem:[#allocation3 + $0x168] sm:$0xff]
        %v3902 = vld [vmem:[#allocation3 + $0x170] sm:$0xff]
        %v3903 = vld [vmem:[#allocation3 + $0x188] sm:$0xff]
        %v3904 = vld [vmem:[#allocation3 + $0x190] sm:$0xff]
        %v3905 = vld [vmem:[#allocation3 + $0x1a8] sm:$0xff]
        %v3906 = vld [vmem:[#allocation3 + $0x1b0] sm:$0xff]
        %v3907 = vld [vmem:[#allocation3 + $0x1c8] sm:$0xff]
        %v3908 = vld [vmem:[#allocation3 + $0x1d0] sm:$0xff]
        %v3909 = vld [vmem:[#allocation3 + $0x1e8] sm:$0xff]
        %v3910 = vld [vmem:[#allocation3 + $0x1f0] sm:$0xff]
        %v3911 = vpack.c.bf16 %v3879, %v3879
        %v3912 = vpack.c.bf16 %v3880, %v3880
        %v3913 = vpack.c.bf16 %v3881, %v3881
        %v3914 = vpack.c.bf16 %v3882, %v3882
        %v3915 = vpack.c.bf16 %v3883, %v3883
        %v3916 = vpack.c.bf16 %v3884, %v3884
        %v3917 = vpack.c.bf16 %v3885, %v3885
        %v3918 = vpack.c.bf16 %v3886, %v3886
        %v3919 = vpack.c.bf16 %v3887, %v3887
        %v3920 = vpack.c.bf16 %v3888, %v3888
        %v3921 = vpack.c.bf16 %v3889, %v3889
        %v3922 = vpack.c.bf16 %v3890, %v3890
        %v3923 = vpack.c.bf16 %v3891, %v3891
        %v3924 = vpack.c.bf16 %v3892, %v3892
        %v3925 = vpack.c.bf16 %v3893, %v3893
        %v3926 = vpack.c.bf16 %v3894, %v3894
        %v3927 = vpack.c.bf16 %v3895, %v3895
        %v3928 = vpack.c.bf16 %v3896, %v3896
        %v3929 = vpack.c.bf16 %v3897, %v3897
        %v3930 = vpack.c.bf16 %v3898, %v3898
        %v3931 = vpack.c.bf16 %v3899, %v3899
        %v3932 = vpack.c.bf16 %v3900, %v3900
        %v3933 = vpack.c.bf16 %v3901, %v3901
        %v3934 = vpack.c.bf16 %v3902, %v3902
        %v3935 = vpack.c.bf16 %v3903, %v3903
        %v3936 = vpack.c.bf16 %v3904, %v3904
        %v3937 = vpack.c.bf16 %v3905, %v3905
        %v3938 = vpack.c.bf16 %v3906, %v3906
        %v3939 = vpack.c.bf16 %v3907, %v3907
        %v3940 = vpack.c.bf16 %v3908, %v3908
        %v3941 = vpack.c.bf16 %v3909, %v3909
        %v3942 = vpack.c.bf16 %v3910, %v3910
        %v3943 = vld [vmem:[#allocation3 + $0x9] sm:$0xff]
        %v3944 = vld [vmem:[#allocation3 + $0x11] sm:$0xff]
        %v3945 = vld [vmem:[#allocation3 + $0x29] sm:$0xff]
        %v3946 = vld [vmem:[#allocation3 + $0x31] sm:$0xff]
        %v3947 = vld [vmem:[#allocation3 + $0x49] sm:$0xff]
        %v3948 = vld [vmem:[#allocation3 + $0x51] sm:$0xff]
        %v3949 = vld [vmem:[#allocation3 + $0x69] sm:$0xff]
        %v3950 = vld [vmem:[#allocation3 + $0x71] sm:$0xff]
        %v3951 = vld [vmem:[#allocation3 + $0x89] sm:$0xff]
        %v3952 = vld [vmem:[#allocation3 + $0x91] sm:$0xff]
        %v3953 = vld [vmem:[#allocation3 + $0xa9] sm:$0xff]
        %v3954 = vld [vmem:[#allocation3 + $0xb1] sm:$0xff]
        %v3955 = vld [vmem:[#allocation3 + $0xc9] sm:$0xff]
        %v3956 = vld [vmem:[#allocation3 + $0xd1] sm:$0xff]
        %v3957 = vld [vmem:[#allocation3 + $0xe9] sm:$0xff]
        %v3958 = vld [vmem:[#allocation3 + $0xf1] sm:$0xff]
        %v3959 = vld [vmem:[#allocation3 + $0x109] sm:$0xff]
        %v3960 = vld [vmem:[#allocation3 + $0x111] sm:$0xff]
        %v3961 = vld [vmem:[#allocation3 + $0x129] sm:$0xff]
        %v3962 = vld [vmem:[#allocation3 + $0x131] sm:$0xff]
        %v3963 = vld [vmem:[#allocation3 + $0x149] sm:$0xff]
        %v3964 = vld [vmem:[#allocation3 + $0x151] sm:$0xff]
        %v3965 = vld [vmem:[#allocation3 + $0x169] sm:$0xff]
        %v3966 = vld [vmem:[#allocation3 + $0x171] sm:$0xff]
        %v3967 = vld [vmem:[#allocation3 + $0x189] sm:$0xff]
        %v3968 = vld [vmem:[#allocation3 + $0x191] sm:$0xff]
        %v3969 = vld [vmem:[#allocation3 + $0x1a9] sm:$0xff]
        %v3970 = vld [vmem:[#allocation3 + $0x1b1] sm:$0xff]
        %v3971 = vld [vmem:[#allocation3 + $0x1c9] sm:$0xff]
        %v3972 = vld [vmem:[#allocation3 + $0x1d1] sm:$0xff]
        %v3973 = vld [vmem:[#allocation3 + $0x1e9] sm:$0xff]
        %v3974 = vld [vmem:[#allocation3 + $0x1f1] sm:$0xff]
        %v3975 = vpack.c.bf16 %v3943, %v3943
        %v3976 = vpack.c.bf16 %v3944, %v3944
        %v3977 = vpack.c.bf16 %v3945, %v3945
        %v3978 = vpack.c.bf16 %v3946, %v3946
        %v3979 = vpack.c.bf16 %v3947, %v3947
        %v3980 = vpack.c.bf16 %v3948, %v3948
        %v3981 = vpack.c.bf16 %v3949, %v3949
        %v3982 = vpack.c.bf16 %v3950, %v3950
        %v3983 = vpack.c.bf16 %v3951, %v3951
        %v3984 = vpack.c.bf16 %v3952, %v3952
        %v3985 = vpack.c.bf16 %v3953, %v3953
        %v3986 = vpack.c.bf16 %v3954, %v3954
        %v3987 = vpack.c.bf16 %v3955, %v3955
        %v3988 = vpack.c.bf16 %v3956, %v3956
        %v3989 = vpack.c.bf16 %v3957, %v3957
        %v3990 = vpack.c.bf16 %v3958, %v3958
        %v3991 = vpack.c.bf16 %v3959, %v3959
        %v3992 = vpack.c.bf16 %v3960, %v3960
        %v3993 = vpack.c.bf16 %v3961, %v3961
        %v3994 = vpack.c.bf16 %v3962, %v3962
        %v3995 = vpack.c.bf16 %v3963, %v3963
        %v3996 = vpack.c.bf16 %v3964, %v3964
        %v3997 = vpack.c.bf16 %v3965, %v3965
        %v3998 = vpack.c.bf16 %v3966, %v3966
        %v3999 = vpack.c.bf16 %v3967, %v3967
        %v4000 = vpack.c.bf16 %v3968, %v3968
        %v4001 = vpack.c.bf16 %v3969, %v3969
        %v4002 = vpack.c.bf16 %v3970, %v3970
        %v4003 = vpack.c.bf16 %v3971, %v3971
        %v4004 = vpack.c.bf16 %v3972, %v3972
        %v4005 = vpack.c.bf16 %v3973, %v3973
        %v4006 = vpack.c.bf16 %v3974, %v3974
        %s4007 = scalar_lea.vmem [#allocation3], 32
        %v4008 = vld [vmem:[%s4007 + $0x7] sm:$0xff]
        %v4009 = vld [vmem:[%s4007 + $0xf] sm:$0xff]
        %v4010 = vld [vmem:[%s4007 + $0x27] sm:$0xff]
        %v4011 = vld [vmem:[%s4007 + $0x2f] sm:$0xff]
        %v4012 = vld [vmem:[%s4007 + $0x47] sm:$0xff]
        %v4013 = vld [vmem:[%s4007 + $0x4f] sm:$0xff]
        %v4014 = vld [vmem:[%s4007 + $0x67] sm:$0xff]
        %v4015 = vld [vmem:[%s4007 + $0x6f] sm:$0xff]
        %v4016 = vld [vmem:[%s4007 + $0x87] sm:$0xff]
        %v4017 = vld [vmem:[%s4007 + $0x8f] sm:$0xff]
        %v4018 = vld [vmem:[%s4007 + $0xa7] sm:$0xff]
        %v4019 = vld [vmem:[%s4007 + $0xaf] sm:$0xff]
        %v4020 = vld [vmem:[%s4007 + $0xc7] sm:$0xff]
        %v4021 = vld [vmem:[%s4007 + $0xcf] sm:$0xff]
        %v4022 = vld [vmem:[%s4007 + $0xe7] sm:$0xff]
        %v4023 = vld [vmem:[%s4007 + $0xef] sm:$0xff]
        %v4024 = vld [vmem:[%s4007 + $0x107] sm:$0xff]
        %v4025 = vld [vmem:[%s4007 + $0x10f] sm:$0xff]
        %v4026 = vld [vmem:[%s4007 + $0x127] sm:$0xff]
        %v4027 = vld [vmem:[%s4007 + $0x12f] sm:$0xff]
        %v4028 = vld [vmem:[%s4007 + $0x147] sm:$0xff]
        %v4029 = vld [vmem:[%s4007 + $0x14f] sm:$0xff]
        %v4030 = vld [vmem:[%s4007 + $0x167] sm:$0xff]
        %v4031 = vld [vmem:[%s4007 + $0x16f] sm:$0xff]
        %v4032 = vld [vmem:[%s4007 + $0x187] sm:$0xff]
        %v4033 = vld [vmem:[%s4007 + $0x18f] sm:$0xff]
        %v4034 = vld [vmem:[%s4007 + $0x1a7] sm:$0xff]
        %v4035 = vld [vmem:[%s4007 + $0x1af] sm:$0xff]
        %v4036 = vld [vmem:[%s4007 + $0x1c7] sm:$0xff]
        %v4037 = vld [vmem:[%s4007 + $0x1cf] sm:$0xff]
        %v4038 = vld [vmem:[%s4007 + $0x1e7] sm:$0xff]
        %v4039 = vld [vmem:[%s4007 + $0x1ef] sm:$0xff]
        %v4040 = vpack.c.bf16 %v4008, %v4008
        %v4041 = vpack.c.bf16 %v4009, %v4009
        %v4042 = vpack.c.bf16 %v4010, %v4010
        %v4043 = vpack.c.bf16 %v4011, %v4011
        %v4044 = vpack.c.bf16 %v4012, %v4012
        %v4045 = vpack.c.bf16 %v4013, %v4013
        %v4046 = vpack.c.bf16 %v4014, %v4014
        %v4047 = vpack.c.bf16 %v4015, %v4015
        %v4048 = vpack.c.bf16 %v4016, %v4016
        %v4049 = vpack.c.bf16 %v4017, %v4017
        %v4050 = vpack.c.bf16 %v4018, %v4018
        %v4051 = vpack.c.bf16 %v4019, %v4019
        %v4052 = vpack.c.bf16 %v4020, %v4020
        %v4053 = vpack.c.bf16 %v4021, %v4021
        %v4054 = vpack.c.bf16 %v4022, %v4022
        %v4055 = vpack.c.bf16 %v4023, %v4023
        %v4056 = vpack.c.bf16 %v4024, %v4024
        %v4057 = vpack.c.bf16 %v4025, %v4025
        %v4058 = vpack.c.bf16 %v4026, %v4026
        %v4059 = vpack.c.bf16 %v4027, %v4027
        %v4060 = vpack.c.bf16 %v4028, %v4028
        %v4061 = vpack.c.bf16 %v4029, %v4029
        %v4062 = vpack.c.bf16 %v4030, %v4030
        %v4063 = vpack.c.bf16 %v4031, %v4031
        %v4064 = vpack.c.bf16 %v4032, %v4032
        %v4065 = vpack.c.bf16 %v4033, %v4033
        %v4066 = vpack.c.bf16 %v4034, %v4034
        %v4067 = vpack.c.bf16 %v4035, %v4035
        %v4068 = vpack.c.bf16 %v4036, %v4036
        %v4069 = vpack.c.bf16 %v4037, %v4037
        %v4070 = vpack.c.bf16 %v4038, %v4038
        %v4071 = vpack.c.bf16 %v4039, %v4039
        %v4072 = vld [vmem:[%s4007 + $0x8] sm:$0xff]
        %v4073 = vld [vmem:[%s4007 + $0x10] sm:$0xff]
        %v4074 = vld [vmem:[%s4007 + $0x28] sm:$0xff]
        %v4075 = vld [vmem:[%s4007 + $0x30] sm:$0xff]
        %v4076 = vld [vmem:[%s4007 + $0x48] sm:$0xff]
        %v4077 = vld [vmem:[%s4007 + $0x50] sm:$0xff]
        %v4078 = vld [vmem:[%s4007 + $0x68] sm:$0xff]
        %v4079 = vld [vmem:[%s4007 + $0x70] sm:$0xff]
        %v4080 = vld [vmem:[%s4007 + $0x88] sm:$0xff]
        %v4081 = vld [vmem:[%s4007 + $0x90] sm:$0xff]
        %v4082 = vld [vmem:[%s4007 + $0xa8] sm:$0xff]
        %v4083 = vld [vmem:[%s4007 + $0xb0] sm:$0xff]
        %v4084 = vld [vmem:[%s4007 + $0xc8] sm:$0xff]
        %v4085 = vld [vmem:[%s4007 + $0xd0] sm:$0xff]
        %v4086 = vld [vmem:[%s4007 + $0xe8] sm:$0xff]
        %v4087 = vld [vmem:[%s4007 + $0xf0] sm:$0xff]
        %v4088 = vld [vmem:[%s4007 + $0x108] sm:$0xff]
        %v4089 = vld [vmem:[%s4007 + $0x110] sm:$0xff]
        %v4090 = vld [vmem:[%s4007 + $0x128] sm:$0xff]
        %v4091 = vld [vmem:[%s4007 + $0x130] sm:$0xff]
        %v4092 = vld [vmem:[%s4007 + $0x148] sm:$0xff]
        %v4093 = vld [vmem:[%s4007 + $0x150] sm:$0xff]
        %v4094 = vld [vmem:[%s4007 + $0x168] sm:$0xff]
        %v4095 = vld [vmem:[%s4007 + $0x170] sm:$0xff]
        %v4096 = vld [vmem:[%s4007 + $0x188] sm:$0xff]
        %v4097 = vld [vmem:[%s4007 + $0x190] sm:$0xff]
        %v4098 = vld [vmem:[%s4007 + $0x1a8] sm:$0xff]
        %v4099 = vld [vmem:[%s4007 + $0x1b0] sm:$0xff]
        %v4100 = vld [vmem:[%s4007 + $0x1c8] sm:$0xff]
        %v4101 = vld [vmem:[%s4007 + $0x1d0] sm:$0xff]
        %v4102 = vld [vmem:[%s4007 + $0x1e8] sm:$0xff]
        %v4103 = vld [vmem:[%s4007 + $0x1f0] sm:$0xff]
        %v4104 = vpack.c.bf16 %v4072, %v4072
        %v4105 = vpack.c.bf16 %v4073, %v4073
        %v4106 = vpack.c.bf16 %v4074, %v4074
        %v4107 = vpack.c.bf16 %v4075, %v4075
        %v4108 = vpack.c.bf16 %v4076, %v4076
        %v4109 = vpack.c.bf16 %v4077, %v4077
        %v4110 = vpack.c.bf16 %v4078, %v4078
        %v4111 = vpack.c.bf16 %v4079, %v4079
        %v4112 = vpack.c.bf16 %v4080, %v4080
        %v4113 = vpack.c.bf16 %v4081, %v4081
        %v4114 = vpack.c.bf16 %v4082, %v4082
        %v4115 = vpack.c.bf16 %v4083, %v4083
        %v4116 = vpack.c.bf16 %v4084, %v4084
        %v4117 = vpack.c.bf16 %v4085, %v4085
        %v4118 = vpack.c.bf16 %v4086, %v4086
        %v4119 = vpack.c.bf16 %v4087, %v4087
        %v4120 = vpack.c.bf16 %v4088, %v4088
        %v4121 = vpack.c.bf16 %v4089, %v4089
        %v4122 = vpack.c.bf16 %v4090, %v4090
        %v4123 = vpack.c.bf16 %v4091, %v4091
        %v4124 = vpack.c.bf16 %v4092, %v4092
        %v4125 = vpack.c.bf16 %v4093, %v4093
        %v4126 = vpack.c.bf16 %v4094, %v4094
        %v4127 = vpack.c.bf16 %v4095, %v4095
        %v4128 = vpack.c.bf16 %v4096, %v4096
        %v4129 = vpack.c.bf16 %v4097, %v4097
        %v4130 = vpack.c.bf16 %v4098, %v4098
        %v4131 = vpack.c.bf16 %v4099, %v4099
        %v4132 = vpack.c.bf16 %v4100, %v4100
        %v4133 = vpack.c.bf16 %v4101, %v4101
        %v4134 = vpack.c.bf16 %v4102, %v4102
        %v4135 = vpack.c.bf16 %v4103, %v4103
        %v4136 = vld [vmem:[%s4007 + $0x9] sm:$0xff]
        %v4137 = vld [vmem:[%s4007 + $0x11] sm:$0xff]
        %v4138 = vld [vmem:[%s4007 + $0x29] sm:$0xff]
        %v4139 = vld [vmem:[%s4007 + $0x31] sm:$0xff]
        %v4140 = vld [vmem:[%s4007 + $0x49] sm:$0xff]
        %v4141 = vld [vmem:[%s4007 + $0x51] sm:$0xff]
        %v4142 = vld [vmem:[%s4007 + $0x69] sm:$0xff]
        %v4143 = vld [vmem:[%s4007 + $0x71] sm:$0xff]
        %v4144 = vld [vmem:[%s4007 + $0x89] sm:$0xff]
        %v4145 = vld [vmem:[%s4007 + $0x91] sm:$0xff]
        %v4146 = vld [vmem:[%s4007 + $0xa9] sm:$0xff]
        %v4147 = vld [vmem:[%s4007 + $0xb1] sm:$0xff]
        %v4148 = vld [vmem:[%s4007 + $0xc9] sm:$0xff]
        %v4149 = vld [vmem:[%s4007 + $0xd1] sm:$0xff]
        %v4150 = vld [vmem:[%s4007 + $0xe9] sm:$0xff]
        %v4151 = vld [vmem:[%s4007 + $0xf1] sm:$0xff]
        %v4152 = vld [vmem:[%s4007 + $0x109] sm:$0xff]
        %v4153 = vld [vmem:[%s4007 + $0x111] sm:$0xff]
        %v4154 = vld [vmem:[%s4007 + $0x129] sm:$0xff]
        %v4155 = vld [vmem:[%s4007 + $0x131] sm:$0xff]
        %v4156 = vld [vmem:[%s4007 + $0x149] sm:$0xff]
        %v4157 = vld [vmem:[%s4007 + $0x151] sm:$0xff]
        %v4158 = vld [vmem:[%s4007 + $0x169] sm:$0xff]
        %v4159 = vld [vmem:[%s4007 + $0x171] sm:$0xff]
        %v4160 = vld [vmem:[%s4007 + $0x189] sm:$0xff]
        %v4161 = vld [vmem:[%s4007 + $0x191] sm:$0xff]
        %v4162 = vld [vmem:[%s4007 + $0x1a9] sm:$0xff]
        %v4163 = vld [vmem:[%s4007 + $0x1b1] sm:$0xff]
        %v4164 = vld [vmem:[%s4007 + $0x1c9] sm:$0xff]
        %v4165 = vld [vmem:[%s4007 + $0x1d1] sm:$0xff]
        %v4166 = vld [vmem:[%s4007 + $0x1e9] sm:$0xff]
        %v4167 = vld [vmem:[%s4007 + $0x1f1] sm:$0xff]
        %v4168 = vpack.c.bf16 %v4136, %v4136
        %v4169 = vpack.c.bf16 %v4137, %v4137
        %v4170 = vpack.c.bf16 %v4138, %v4138
        %v4171 = vpack.c.bf16 %v4139, %v4139
        %v4172 = vpack.c.bf16 %v4140, %v4140
        %v4173 = vpack.c.bf16 %v4141, %v4141
        %v4174 = vpack.c.bf16 %v4142, %v4142
        %v4175 = vpack.c.bf16 %v4143, %v4143
        %v4176 = vpack.c.bf16 %v4144, %v4144
        %v4177 = vpack.c.bf16 %v4145, %v4145
        %v4178 = vpack.c.bf16 %v4146, %v4146
        %v4179 = vpack.c.bf16 %v4147, %v4147
        %v4180 = vpack.c.bf16 %v4148, %v4148
        %v4181 = vpack.c.bf16 %v4149, %v4149
        %v4182 = vpack.c.bf16 %v4150, %v4150
        %v4183 = vpack.c.bf16 %v4151, %v4151
        %v4184 = vpack.c.bf16 %v4152, %v4152
        %v4185 = vpack.c.bf16 %v4153, %v4153
        %v4186 = vpack.c.bf16 %v4154, %v4154
        %v4187 = vpack.c.bf16 %v4155, %v4155
        %v4188 = vpack.c.bf16 %v4156, %v4156
        %v4189 = vpack.c.bf16 %v4157, %v4157
        %v4190 = vpack.c.bf16 %v4158, %v4158
        %v4191 = vpack.c.bf16 %v4159, %v4159
        %v4192 = vpack.c.bf16 %v4160, %v4160
        %v4193 = vpack.c.bf16 %v4161, %v4161
        %v4194 = vpack.c.bf16 %v4162, %v4162
        %v4195 = vpack.c.bf16 %v4163, %v4163
        %v4196 = vpack.c.bf16 %v4164, %v4164
        %v4197 = vpack.c.bf16 %v4165, %v4165
        %v4198 = vpack.c.bf16 %v4166, %v4166
        %v4199 = vpack.c.bf16 %v4167, %v4167
        %s4200 = scalar_lea.vmem [#allocation3], 64
        %v4201 = vld [vmem:[%s4200 + $0x7] sm:$0xff]
        %v4202 = vld [vmem:[%s4200 + $0xf] sm:$0xff]
        %v4203 = vld [vmem:[%s4200 + $0x27] sm:$0xff]
        %v4204 = vld [vmem:[%s4200 + $0x2f] sm:$0xff]
        %v4205 = vld [vmem:[%s4200 + $0x47] sm:$0xff]
        %v4206 = vld [vmem:[%s4200 + $0x4f] sm:$0xff]
        %v4207 = vld [vmem:[%s4200 + $0x67] sm:$0xff]
        %v4208 = vld [vmem:[%s4200 + $0x6f] sm:$0xff]
        %v4209 = vld [vmem:[%s4200 + $0x87] sm:$0xff]
        %v4210 = vld [vmem:[%s4200 + $0x8f] sm:$0xff]
        %v4211 = vld [vmem:[%s4200 + $0xa7] sm:$0xff]
        %v4212 = vld [vmem:[%s4200 + $0xaf] sm:$0xff]
        %v4213 = vld [vmem:[%s4200 + $0xc7] sm:$0xff]
        %v4214 = vld [vmem:[%s4200 + $0xcf] sm:$0xff]
        %v4215 = vld [vmem:[%s4200 + $0xe7] sm:$0xff]
        %v4216 = vld [vmem:[%s4200 + $0xef] sm:$0xff]
        %v4217 = vld [vmem:[%s4200 + $0x107] sm:$0xff]
        %v4218 = vld [vmem:[%s4200 + $0x10f] sm:$0xff]
        %v4219 = vld [vmem:[%s4200 + $0x127] sm:$0xff]
        %v4220 = vld [vmem:[%s4200 + $0x12f] sm:$0xff]
        %v4221 = vld [vmem:[%s4200 + $0x147] sm:$0xff]
        %v4222 = vld [vmem:[%s4200 + $0x14f] sm:$0xff]
        %v4223 = vld [vmem:[%s4200 + $0x167] sm:$0xff]
        %v4224 = vld [vmem:[%s4200 + $0x16f] sm:$0xff]
        %v4225 = vld [vmem:[%s4200 + $0x187] sm:$0xff]
        %v4226 = vld [vmem:[%s4200 + $0x18f] sm:$0xff]
        %v4227 = vld [vmem:[%s4200 + $0x1a7] sm:$0xff]
        %v4228 = vld [vmem:[%s4200 + $0x1af] sm:$0xff]
        %v4229 = vld [vmem:[%s4200 + $0x1c7] sm:$0xff]
        %v4230 = vld [vmem:[%s4200 + $0x1cf] sm:$0xff]
        %v4231 = vld [vmem:[%s4200 + $0x1e7] sm:$0xff]
        %v4232 = vld [vmem:[%s4200 + $0x1ef] sm:$0xff]
        %v4233 = vpack.c.bf16 %v4201, %v4201
        %v4234 = vpack.c.bf16 %v4202, %v4202
        %v4235 = vpack.c.bf16 %v4203, %v4203
        %v4236 = vpack.c.bf16 %v4204, %v4204
        %v4237 = vpack.c.bf16 %v4205, %v4205
        %v4238 = vpack.c.bf16 %v4206, %v4206
        %v4239 = vpack.c.bf16 %v4207, %v4207
        %v4240 = vpack.c.bf16 %v4208, %v4208
        %v4241 = vpack.c.bf16 %v4209, %v4209
        %v4242 = vpack.c.bf16 %v4210, %v4210
        %v4243 = vpack.c.bf16 %v4211, %v4211
        %v4244 = vpack.c.bf16 %v4212, %v4212
        %v4245 = vpack.c.bf16 %v4213, %v4213
        %v4246 = vpack.c.bf16 %v4214, %v4214
        %v4247 = vpack.c.bf16 %v4215, %v4215
        %v4248 = vpack.c.bf16 %v4216, %v4216
        %v4249 = vpack.c.bf16 %v4217, %v4217
        %v4250 = vpack.c.bf16 %v4218, %v4218
        %v4251 = vpack.c.bf16 %v4219, %v4219
        %v4252 = vpack.c.bf16 %v4220, %v4220
        %v4253 = vpack.c.bf16 %v4221, %v4221
        %v4254 = vpack.c.bf16 %v4222, %v4222
        %v4255 = vpack.c.bf16 %v4223, %v4223
        %v4256 = vpack.c.bf16 %v4224, %v4224
        %v4257 = vpack.c.bf16 %v4225, %v4225
        %v4258 = vpack.c.bf16 %v4226, %v4226
        %v4259 = vpack.c.bf16 %v4227, %v4227
        %v4260 = vpack.c.bf16 %v4228, %v4228
        %v4261 = vpack.c.bf16 %v4229, %v4229
        %v4262 = vpack.c.bf16 %v4230, %v4230
        %v4263 = vpack.c.bf16 %v4231, %v4231
        %v4264 = vpack.c.bf16 %v4232, %v4232
        %v4265 = vld [vmem:[%s4200 + $0x8] sm:$0xff]
        %v4266 = vld [vmem:[%s4200 + $0x10] sm:$0xff]
        %v4267 = vld [vmem:[%s4200 + $0x28] sm:$0xff]
        %v4268 = vld [vmem:[%s4200 + $0x30] sm:$0xff]
        %v4269 = vld [vmem:[%s4200 + $0x48] sm:$0xff]
        %v4270 = vld [vmem:[%s4200 + $0x50] sm:$0xff]
        %v4271 = vld [vmem:[%s4200 + $0x68] sm:$0xff]
        %v4272 = vld [vmem:[%s4200 + $0x70] sm:$0xff]
        %v4273 = vld [vmem:[%s4200 + $0x88] sm:$0xff]
        %v4274 = vld [vmem:[%s4200 + $0x90] sm:$0xff]
        %v4275 = vld [vmem:[%s4200 + $0xa8] sm:$0xff]
        %v4276 = vld [vmem:[%s4200 + $0xb0] sm:$0xff]
        %v4277 = vld [vmem:[%s4200 + $0xc8] sm:$0xff]
        %v4278 = vld [vmem:[%s4200 + $0xd0] sm:$0xff]
        %v4279 = vld [vmem:[%s4200 + $0xe8] sm:$0xff]
        %v4280 = vld [vmem:[%s4200 + $0xf0] sm:$0xff]
        %v4281 = vld [vmem:[%s4200 + $0x108] sm:$0xff]
        %v4282 = vld [vmem:[%s4200 + $0x110] sm:$0xff]
        %v4283 = vld [vmem:[%s4200 + $0x128] sm:$0xff]
        %v4284 = vld [vmem:[%s4200 + $0x130] sm:$0xff]
        %v4285 = vld [vmem:[%s4200 + $0x148] sm:$0xff]
        %v4286 = vld [vmem:[%s4200 + $0x150] sm:$0xff]
        %v4287 = vld [vmem:[%s4200 + $0x168] sm:$0xff]
        %v4288 = vld [vmem:[%s4200 + $0x170] sm:$0xff]
        %v4289 = vld [vmem:[%s4200 + $0x188] sm:$0xff]
        %v4290 = vld [vmem:[%s4200 + $0x190] sm:$0xff]
        %v4291 = vld [vmem:[%s4200 + $0x1a8] sm:$0xff]
        %v4292 = vld [vmem:[%s4200 + $0x1b0] sm:$0xff]
        %v4293 = vld [vmem:[%s4200 + $0x1c8] sm:$0xff]
        %v4294 = vld [vmem:[%s4200 + $0x1d0] sm:$0xff]
        %v4295 = vld [vmem:[%s4200 + $0x1e8] sm:$0xff]
        %v4296 = vld [vmem:[%s4200 + $0x1f0] sm:$0xff]
        %v4297 = vpack.c.bf16 %v4265, %v4265
        %v4298 = vpack.c.bf16 %v4266, %v4266
        %v4299 = vpack.c.bf16 %v4267, %v4267
        %v4300 = vpack.c.bf16 %v4268, %v4268
        %v4301 = vpack.c.bf16 %v4269, %v4269
        %v4302 = vpack.c.bf16 %v4270, %v4270
        %v4303 = vpack.c.bf16 %v4271, %v4271
        %v4304 = vpack.c.bf16 %v4272, %v4272
        %v4305 = vpack.c.bf16 %v4273, %v4273
        %v4306 = vpack.c.bf16 %v4274, %v4274
        %v4307 = vpack.c.bf16 %v4275, %v4275
        %v4308 = vpack.c.bf16 %v4276, %v4276
        %v4309 = vpack.c.bf16 %v4277, %v4277
        %v4310 = vpack.c.bf16 %v4278, %v4278
        %v4311 = vpack.c.bf16 %v4279, %v4279
        %v4312 = vpack.c.bf16 %v4280, %v4280
        %v4313 = vpack.c.bf16 %v4281, %v4281
        %v4314 = vpack.c.bf16 %v4282, %v4282
        %v4315 = vpack.c.bf16 %v4283, %v4283
        %v4316 = vpack.c.bf16 %v4284, %v4284
        %v4317 = vpack.c.bf16 %v4285, %v4285
        %v4318 = vpack.c.bf16 %v4286, %v4286
        %v4319 = vpack.c.bf16 %v4287, %v4287
        %v4320 = vpack.c.bf16 %v4288, %v4288
        %v4321 = vpack.c.bf16 %v4289, %v4289
        %v4322 = vpack.c.bf16 %v4290, %v4290
        %v4323 = vpack.c.bf16 %v4291, %v4291
        %v4324 = vpack.c.bf16 %v4292, %v4292
        %v4325 = vpack.c.bf16 %v4293, %v4293
        %v4326 = vpack.c.bf16 %v4294, %v4294
        %v4327 = vpack.c.bf16 %v4295, %v4295
        %v4328 = vpack.c.bf16 %v4296, %v4296
        %v4329 = vld [vmem:[%s4200 + $0x9] sm:$0xff]
        %v4330 = vld [vmem:[%s4200 + $0x11] sm:$0xff]
        %v4331 = vld [vmem:[%s4200 + $0x29] sm:$0xff]
        %v4332 = vld [vmem:[%s4200 + $0x31] sm:$0xff]
        %v4333 = vld [vmem:[%s4200 + $0x49] sm:$0xff]
        %v4334 = vld [vmem:[%s4200 + $0x51] sm:$0xff]
        %v4335 = vld [vmem:[%s4200 + $0x69] sm:$0xff]
        %v4336 = vld [vmem:[%s4200 + $0x71] sm:$0xff]
        %v4337 = vld [vmem:[%s4200 + $0x89] sm:$0xff]
        %v4338 = vld [vmem:[%s4200 + $0x91] sm:$0xff]
        %v4339 = vld [vmem:[%s4200 + $0xa9] sm:$0xff]
        %v4340 = vld [vmem:[%s4200 + $0xb1] sm:$0xff]
        %v4341 = vld [vmem:[%s4200 + $0xc9] sm:$0xff]
        %v4342 = vld [vmem:[%s4200 + $0xd1] sm:$0xff]
        %v4343 = vld [vmem:[%s4200 + $0xe9] sm:$0xff]
        %v4344 = vld [vmem:[%s4200 + $0xf1] sm:$0xff]
        %v4345 = vld [vmem:[%s4200 + $0x109] sm:$0xff]
        %v4346 = vld [vmem:[%s4200 + $0x111] sm:$0xff]
        %v4347 = vld [vmem:[%s4200 + $0x129] sm:$0xff]
        %v4348 = vld [vmem:[%s4200 + $0x131] sm:$0xff]
        %v4349 = vld [vmem:[%s4200 + $0x149] sm:$0xff]
        %v4350 = vld [vmem:[%s4200 + $0x151] sm:$0xff]
        %v4351 = vld [vmem:[%s4200 + $0x169] sm:$0xff]
        %v4352 = vld [vmem:[%s4200 + $0x171] sm:$0xff]
        %v4353 = vld [vmem:[%s4200 + $0x189] sm:$0xff]
        %v4354 = vld [vmem:[%s4200 + $0x191] sm:$0xff]
        %v4355 = vld [vmem:[%s4200 + $0x1a9] sm:$0xff]
        %v4356 = vld [vmem:[%s4200 + $0x1b1] sm:$0xff]
        %v4357 = vld [vmem:[%s4200 + $0x1c9] sm:$0xff]
        %v4358 = vld [vmem:[%s4200 + $0x1d1] sm:$0xff]
        %v4359 = vld [vmem:[%s4200 + $0x1e9] sm:$0xff]
        %v4360 = vld [vmem:[%s4200 + $0x1f1] sm:$0xff]
        %v4361 = vpack.c.bf16 %v4329, %v4329
        %v4362 = vpack.c.bf16 %v4330, %v4330
        %v4363 = vpack.c.bf16 %v4331, %v4331
        %v4364 = vpack.c.bf16 %v4332, %v4332
        %v4365 = vpack.c.bf16 %v4333, %v4333
        %v4366 = vpack.c.bf16 %v4334, %v4334
        %v4367 = vpack.c.bf16 %v4335, %v4335
        %v4368 = vpack.c.bf16 %v4336, %v4336
        %v4369 = vpack.c.bf16 %v4337, %v4337
        %v4370 = vpack.c.bf16 %v4338, %v4338
        %v4371 = vpack.c.bf16 %v4339, %v4339
        %v4372 = vpack.c.bf16 %v4340, %v4340
        %v4373 = vpack.c.bf16 %v4341, %v4341
        %v4374 = vpack.c.bf16 %v4342, %v4342
        %v4375 = vpack.c.bf16 %v4343, %v4343
        %v4376 = vpack.c.bf16 %v4344, %v4344
        %v4377 = vpack.c.bf16 %v4345, %v4345
        %v4378 = vpack.c.bf16 %v4346, %v4346
        %v4379 = vpack.c.bf16 %v4347, %v4347
        %v4380 = vpack.c.bf16 %v4348, %v4348
        %v4381 = vpack.c.bf16 %v4349, %v4349
        %v4382 = vpack.c.bf16 %v4350, %v4350
        %v4383 = vpack.c.bf16 %v4351, %v4351
        %v4384 = vpack.c.bf16 %v4352, %v4352
        %v4385 = vpack.c.bf16 %v4353, %v4353
        %v4386 = vpack.c.bf16 %v4354, %v4354
        %v4387 = vpack.c.bf16 %v4355, %v4355
        %v4388 = vpack.c.bf16 %v4356, %v4356
        %v4389 = vpack.c.bf16 %v4357, %v4357
        %v4390 = vpack.c.bf16 %v4358, %v4358
        %v4391 = vpack.c.bf16 %v4359, %v4359
        %v4392 = vpack.c.bf16 %v4360, %v4360
        %v4425 = vunpack.c.l.b16 %v3847
        %v4426 = vunpack.c.l.b16 %v3848
        %v4427 = vunpack.c.l.b16 %v3849
        %v4428 = vunpack.c.l.b16 %v3850
        %v4429 = vunpack.c.l.b16 %v3851
        %v4430 = vunpack.c.l.b16 %v3852
        %v4431 = vunpack.c.l.b16 %v3853
        %v4432 = vunpack.c.l.b16 %v3854
        %v4433 = vunpack.c.l.b16 %v3855
        %v4434 = vunpack.c.l.b16 %v3856
        %v4435 = vunpack.c.l.b16 %v3857
        %v4436 = vunpack.c.l.b16 %v3858
        %v4437 = vunpack.c.l.b16 %v3859
        %v4438 = vunpack.c.l.b16 %v3860
        %v4439 = vunpack.c.l.b16 %v3861
        %v4440 = vunpack.c.l.b16 %v3862
        %v4441 = vunpack.c.l.b16 %v3863
        %v4442 = vunpack.c.l.b16 %v3864
        %v4443 = vunpack.c.l.b16 %v3865
        %v4444 = vunpack.c.l.b16 %v3866
        %v4445 = vunpack.c.l.b16 %v3867
        %v4446 = vunpack.c.l.b16 %v3868
        %v4447 = vunpack.c.l.b16 %v3869
        %v4448 = vunpack.c.l.b16 %v3870
        %v4449 = vunpack.c.l.b16 %v3871
        %v4450 = vunpack.c.l.b16 %v3872
        %v4451 = vunpack.c.l.b16 %v3873
        %v4452 = vunpack.c.l.b16 %v3874
        %v4453 = vunpack.c.l.b16 %v3875
        %v4454 = vunpack.c.l.b16 %v3876
        %v4455 = vunpack.c.l.b16 %v3877
        %v4456 = vunpack.c.l.b16 %v3878
        %v4457 = vpack.c.b16 %v4426, %v4425
        %v4458 = vpack.c.b16 %v4428, %v4427
        %v4459 = vpack.c.b16 %v4430, %v4429
        %v4460 = vpack.c.b16 %v4432, %v4431
        %v4461 = vpack.c.b16 %v4434, %v4433
        %v4462 = vpack.c.b16 %v4436, %v4435
        %v4463 = vpack.c.b16 %v4438, %v4437
        %v4464 = vpack.c.b16 %v4440, %v4439
        %v4465 = vpack.c.b16 %v4442, %v4441
        %v4466 = vpack.c.b16 %v4444, %v4443
        %v4467 = vpack.c.b16 %v4446, %v4445
        %v4468 = vpack.c.b16 %v4448, %v4447
        %v4469 = vpack.c.b16 %v4450, %v4449
        %v4470 = vpack.c.b16 %v4452, %v4451
        %v4471 = vpack.c.b16 %v4454, %v4453
        %v4472 = vpack.c.b16 %v4456, %v4455
        %v4505 = vunpack.c.l.b16 %v3911
        %v4506 = vunpack.c.l.b16 %v3912
        %v4507 = vunpack.c.l.b16 %v3913
        %v4508 = vunpack.c.l.b16 %v3914
        %v4509 = vunpack.c.l.b16 %v3915
        %v4510 = vunpack.c.l.b16 %v3916
        %v4511 = vunpack.c.l.b16 %v3917
        %v4512 = vunpack.c.l.b16 %v3918
        %v4513 = vunpack.c.l.b16 %v3919
        %v4514 = vunpack.c.l.b16 %v3920
        %v4515 = vunpack.c.l.b16 %v3921
        %v4516 = vunpack.c.l.b16 %v3922
        %v4517 = vunpack.c.l.b16 %v3923
        %v4518 = vunpack.c.l.b16 %v3924
        %v4519 = vunpack.c.l.b16 %v3925
        %v4520 = vunpack.c.l.b16 %v3926
        %v4521 = vunpack.c.l.b16 %v3927
        %v4522 = vunpack.c.l.b16 %v3928
        %v4523 = vunpack.c.l.b16 %v3929
        %v4524 = vunpack.c.l.b16 %v3930
        %v4525 = vunpack.c.l.b16 %v3931
        %v4526 = vunpack.c.l.b16 %v3932
        %v4527 = vunpack.c.l.b16 %v3933
        %v4528 = vunpack.c.l.b16 %v3934
        %v4529 = vunpack.c.l.b16 %v3935
        %v4530 = vunpack.c.l.b16 %v3936
        %v4531 = vunpack.c.l.b16 %v3937
        %v4532 = vunpack.c.l.b16 %v3938
        %v4533 = vunpack.c.l.b16 %v3939
        %v4534 = vunpack.c.l.b16 %v3940
        %v4535 = vunpack.c.l.b16 %v3941
        %v4536 = vunpack.c.l.b16 %v3942
        %v4537 = vpack.c.b16 %v4506, %v4505
        %v4538 = vpack.c.b16 %v4508, %v4507
        %v4539 = vpack.c.b16 %v4510, %v4509
        %v4540 = vpack.c.b16 %v4512, %v4511
        %v4541 = vpack.c.b16 %v4514, %v4513
        %v4542 = vpack.c.b16 %v4516, %v4515
        %v4543 = vpack.c.b16 %v4518, %v4517
        %v4544 = vpack.c.b16 %v4520, %v4519
        %v4545 = vpack.c.b16 %v4522, %v4521
        %v4546 = vpack.c.b16 %v4524, %v4523
        %v4547 = vpack.c.b16 %v4526, %v4525
        %v4548 = vpack.c.b16 %v4528, %v4527
        %v4549 = vpack.c.b16 %v4530, %v4529
        %v4550 = vpack.c.b16 %v4532, %v4531
        %v4551 = vpack.c.b16 %v4534, %v4533
        %v4552 = vpack.c.b16 %v4536, %v4535
        %4553 = vrot.lane.b32.xlu0 %v4537, 64
        %v4554 = vpop.permute.xlu0 %4553
        %4555 = vrot.lane.b32.xlu0 %v4538, 64
        %v4556 = vpop.permute.xlu0 %4555
        %4557 = vrot.lane.b32.xlu0 %v4539, 64
        %v4558 = vpop.permute.xlu0 %4557
        %4559 = vrot.lane.b32.xlu0 %v4540, 64
        %v4560 = vpop.permute.xlu0 %4559
        %4561 = vrot.lane.b32.xlu0 %v4541, 64
        %v4562 = vpop.permute.xlu0 %4561
        %4563 = vrot.lane.b32.xlu0 %v4542, 64
        %v4564 = vpop.permute.xlu0 %4563
        %4565 = vrot.lane.b32.xlu0 %v4543, 64
        %v4566 = vpop.permute.xlu0 %4565
        %4567 = vrot.lane.b32.xlu0 %v4544, 64
        %v4568 = vpop.permute.xlu0 %4567
        %4569 = vrot.lane.b32.xlu0 %v4545, 64
        %v4570 = vpop.permute.xlu0 %4569
        %4571 = vrot.lane.b32.xlu0 %v4546, 64
        %v4572 = vpop.permute.xlu0 %4571
        %4573 = vrot.lane.b32.xlu0 %v4547, 64
        %v4574 = vpop.permute.xlu0 %4573
        %4575 = vrot.lane.b32.xlu0 %v4548, 64
        %v4576 = vpop.permute.xlu0 %4575
        %4577 = vrot.lane.b32.xlu0 %v4549, 64
        %v4578 = vpop.permute.xlu0 %4577
        %4579 = vrot.lane.b32.xlu0 %v4550, 64
        %v4580 = vpop.permute.xlu0 %4579
        %4581 = vrot.lane.b32.xlu0 %v4551, 64
        %v4582 = vpop.permute.xlu0 %4581
        %4583 = vrot.lane.b32.xlu0 %v4552, 64
        %v4584 = vpop.permute.xlu0 %4583
        %v4617 = vunpack.c.l.b16 %v3975
        %v4618 = vunpack.c.l.b16 %v3976
        %v4619 = vunpack.c.l.b16 %v3977
        %v4620 = vunpack.c.l.b16 %v3978
        %v4621 = vunpack.c.l.b16 %v3979
        %v4622 = vunpack.c.l.b16 %v3980
        %v4623 = vunpack.c.l.b16 %v3981
        %v4624 = vunpack.c.l.b16 %v3982
        %v4625 = vunpack.c.l.b16 %v3983
        %v4626 = vunpack.c.l.b16 %v3984
        %v4627 = vunpack.c.l.b16 %v3985
        %v4628 = vunpack.c.l.b16 %v3986
        %v4629 = vunpack.c.l.b16 %v3987
        %v4630 = vunpack.c.l.b16 %v3988
        %v4631 = vunpack.c.l.b16 %v3989
        %v4632 = vunpack.c.l.b16 %v3990
        %v4633 = vunpack.c.l.b16 %v3991
        %v4634 = vunpack.c.l.b16 %v3992
        %v4635 = vunpack.c.l.b16 %v3993
        %v4636 = vunpack.c.l.b16 %v3994
        %v4637 = vunpack.c.l.b16 %v3995
        %v4638 = vunpack.c.l.b16 %v3996
        %v4639 = vunpack.c.l.b16 %v3997
        %v4640 = vunpack.c.l.b16 %v3998
        %v4641 = vunpack.c.l.b16 %v3999
        %v4642 = vunpack.c.l.b16 %v4000
        %v4643 = vunpack.c.l.b16 %v4001
        %v4644 = vunpack.c.l.b16 %v4002
        %v4645 = vunpack.c.l.b16 %v4003
        %v4646 = vunpack.c.l.b16 %v4004
        %v4647 = vunpack.c.l.b16 %v4005
        %v4648 = vunpack.c.l.b16 %v4006
        %v4649 = vpack.c.b16 %v4618, %v4617
        %v4650 = vpack.c.b16 %v4620, %v4619
        %v4651 = vpack.c.b16 %v4622, %v4621
        %v4652 = vpack.c.b16 %v4624, %v4623
        %v4653 = vpack.c.b16 %v4626, %v4625
        %v4654 = vpack.c.b16 %v4628, %v4627
        %v4655 = vpack.c.b16 %v4630, %v4629
        %v4656 = vpack.c.b16 %v4632, %v4631
        %v4657 = vpack.c.b16 %v4634, %v4633
        %v4658 = vpack.c.b16 %v4636, %v4635
        %v4659 = vpack.c.b16 %v4638, %v4637
        %v4660 = vpack.c.b16 %v4640, %v4639
        %v4661 = vpack.c.b16 %v4642, %v4641
        %v4662 = vpack.c.b16 %v4644, %v4643
        %v4663 = vpack.c.b16 %v4646, %v4645
        %v4664 = vpack.c.b16 %v4648, %v4647
        %v4697 = vunpack.c.l.b16 %v4040
        %v4698 = vunpack.c.l.b16 %v4041
        %v4699 = vunpack.c.l.b16 %v4042
        %v4700 = vunpack.c.l.b16 %v4043
        %v4701 = vunpack.c.l.b16 %v4044
        %v4702 = vunpack.c.l.b16 %v4045
        %v4703 = vunpack.c.l.b16 %v4046
        %v4704 = vunpack.c.l.b16 %v4047
        %v4705 = vunpack.c.l.b16 %v4048
        %v4706 = vunpack.c.l.b16 %v4049
        %v4707 = vunpack.c.l.b16 %v4050
        %v4708 = vunpack.c.l.b16 %v4051
        %v4709 = vunpack.c.l.b16 %v4052
        %v4710 = vunpack.c.l.b16 %v4053
        %v4711 = vunpack.c.l.b16 %v4054
        %v4712 = vunpack.c.l.b16 %v4055
        %v4713 = vunpack.c.l.b16 %v4056
        %v4714 = vunpack.c.l.b16 %v4057
        %v4715 = vunpack.c.l.b16 %v4058
        %v4716 = vunpack.c.l.b16 %v4059
        %v4717 = vunpack.c.l.b16 %v4060
        %v4718 = vunpack.c.l.b16 %v4061
        %v4719 = vunpack.c.l.b16 %v4062
        %v4720 = vunpack.c.l.b16 %v4063
        %v4721 = vunpack.c.l.b16 %v4064
        %v4722 = vunpack.c.l.b16 %v4065
        %v4723 = vunpack.c.l.b16 %v4066
        %v4724 = vunpack.c.l.b16 %v4067
        %v4725 = vunpack.c.l.b16 %v4068
        %v4726 = vunpack.c.l.b16 %v4069
        %v4727 = vunpack.c.l.b16 %v4070
        %v4728 = vunpack.c.l.b16 %v4071
        %v4729 = vpack.c.b16 %v4698, %v4697
        %v4730 = vpack.c.b16 %v4700, %v4699
        %v4731 = vpack.c.b16 %v4702, %v4701
        %v4732 = vpack.c.b16 %v4704, %v4703
        %v4733 = vpack.c.b16 %v4706, %v4705
        %v4734 = vpack.c.b16 %v4708, %v4707
        %v4735 = vpack.c.b16 %v4710, %v4709
        %v4736 = vpack.c.b16 %v4712, %v4711
        %v4737 = vpack.c.b16 %v4714, %v4713
        %v4738 = vpack.c.b16 %v4716, %v4715
        %v4739 = vpack.c.b16 %v4718, %v4717
        %v4740 = vpack.c.b16 %v4720, %v4719
        %v4741 = vpack.c.b16 %v4722, %v4721
        %v4742 = vpack.c.b16 %v4724, %v4723
        %v4743 = vpack.c.b16 %v4726, %v4725
        %v4744 = vpack.c.b16 %v4728, %v4727
        %4745 = vrot.lane.b32.xlu0 %v4729, 64
        %v4746 = vpop.permute.xlu0 %4745
        %4747 = vrot.lane.b32.xlu0 %v4730, 64
        %v4748 = vpop.permute.xlu0 %4747
        %4749 = vrot.lane.b32.xlu0 %v4731, 64
        %v4750 = vpop.permute.xlu0 %4749
        %4751 = vrot.lane.b32.xlu0 %v4732, 64
        %v4752 = vpop.permute.xlu0 %4751
        %4753 = vrot.lane.b32.xlu0 %v4733, 64
        %v4754 = vpop.permute.xlu0 %4753
        %4755 = vrot.lane.b32.xlu0 %v4734, 64
        %v4756 = vpop.permute.xlu0 %4755
        %4757 = vrot.lane.b32.xlu0 %v4735, 64
        %v4758 = vpop.permute.xlu0 %4757
        %4759 = vrot.lane.b32.xlu0 %v4736, 64
        %v4760 = vpop.permute.xlu0 %4759
        %4761 = vrot.lane.b32.xlu0 %v4737, 64
        %v4762 = vpop.permute.xlu0 %4761
        %4763 = vrot.lane.b32.xlu0 %v4738, 64
        %v4764 = vpop.permute.xlu0 %4763
        %4765 = vrot.lane.b32.xlu0 %v4739, 64
        %v4766 = vpop.permute.xlu0 %4765
        %4767 = vrot.lane.b32.xlu0 %v4740, 64
        %v4768 = vpop.permute.xlu0 %4767
        %4769 = vrot.lane.b32.xlu0 %v4741, 64
        %v4770 = vpop.permute.xlu0 %4769
        %4771 = vrot.lane.b32.xlu0 %v4742, 64
        %v4772 = vpop.permute.xlu0 %4771
        %4773 = vrot.lane.b32.xlu0 %v4743, 64
        %v4774 = vpop.permute.xlu0 %4773
        %4775 = vrot.lane.b32.xlu0 %v4744, 64
        %v4776 = vpop.permute.xlu0 %4775
        %v4809 = vunpack.c.l.b16 %v4104
        %v4810 = vunpack.c.l.b16 %v4105
        %v4811 = vunpack.c.l.b16 %v4106
        %v4812 = vunpack.c.l.b16 %v4107
        %v4813 = vunpack.c.l.b16 %v4108
        %v4814 = vunpack.c.l.b16 %v4109
        %v4815 = vunpack.c.l.b16 %v4110
        %v4816 = vunpack.c.l.b16 %v4111
        %v4817 = vunpack.c.l.b16 %v4112
        %v4818 = vunpack.c.l.b16 %v4113
        %v4819 = vunpack.c.l.b16 %v4114
        %v4820 = vunpack.c.l.b16 %v4115
        %v4821 = vunpack.c.l.b16 %v4116
        %v4822 = vunpack.c.l.b16 %v4117
        %v4823 = vunpack.c.l.b16 %v4118
        %v4824 = vunpack.c.l.b16 %v4119
        %v4825 = vunpack.c.l.b16 %v4120
        %v4826 = vunpack.c.l.b16 %v4121
        %v4827 = vunpack.c.l.b16 %v4122
        %v4828 = vunpack.c.l.b16 %v4123
        %v4829 = vunpack.c.l.b16 %v4124
        %v4830 = vunpack.c.l.b16 %v4125
        %v4831 = vunpack.c.l.b16 %v4126
        %v4832 = vunpack.c.l.b16 %v4127
        %v4833 = vunpack.c.l.b16 %v4128
        %v4834 = vunpack.c.l.b16 %v4129
        %v4835 = vunpack.c.l.b16 %v4130
        %v4836 = vunpack.c.l.b16 %v4131
        %v4837 = vunpack.c.l.b16 %v4132
        %v4838 = vunpack.c.l.b16 %v4133
        %v4839 = vunpack.c.l.b16 %v4134
        %v4840 = vunpack.c.l.b16 %v4135
        %v4841 = vpack.c.b16 %v4810, %v4809
        %v4842 = vpack.c.b16 %v4812, %v4811
        %v4843 = vpack.c.b16 %v4814, %v4813
        %v4844 = vpack.c.b16 %v4816, %v4815
        %v4845 = vpack.c.b16 %v4818, %v4817
        %v4846 = vpack.c.b16 %v4820, %v4819
        %v4847 = vpack.c.b16 %v4822, %v4821
        %v4848 = vpack.c.b16 %v4824, %v4823
        %v4849 = vpack.c.b16 %v4826, %v4825
        %v4850 = vpack.c.b16 %v4828, %v4827
        %v4851 = vpack.c.b16 %v4830, %v4829
        %v4852 = vpack.c.b16 %v4832, %v4831
        %v4853 = vpack.c.b16 %v4834, %v4833
        %v4854 = vpack.c.b16 %v4836, %v4835
        %v4855 = vpack.c.b16 %v4838, %v4837
        %v4856 = vpack.c.b16 %v4840, %v4839
        %v4889 = vunpack.c.l.b16 %v4168
        %v4890 = vunpack.c.l.b16 %v4169
        %v4891 = vunpack.c.l.b16 %v4170
        %v4892 = vunpack.c.l.b16 %v4171
        %v4893 = vunpack.c.l.b16 %v4172
        %v4894 = vunpack.c.l.b16 %v4173
        %v4895 = vunpack.c.l.b16 %v4174
        %v4896 = vunpack.c.l.b16 %v4175
        %v4897 = vunpack.c.l.b16 %v4176
        %v4898 = vunpack.c.l.b16 %v4177
        %v4899 = vunpack.c.l.b16 %v4178
        %v4900 = vunpack.c.l.b16 %v4179
        %v4901 = vunpack.c.l.b16 %v4180
        %v4902 = vunpack.c.l.b16 %v4181
        %v4903 = vunpack.c.l.b16 %v4182
        %v4904 = vunpack.c.l.b16 %v4183
        %v4905 = vunpack.c.l.b16 %v4184
        %v4906 = vunpack.c.l.b16 %v4185
        %v4907 = vunpack.c.l.b16 %v4186
        %v4908 = vunpack.c.l.b16 %v4187
        %v4909 = vunpack.c.l.b16 %v4188
        %v4910 = vunpack.c.l.b16 %v4189
        %v4911 = vunpack.c.l.b16 %v4190
        %v4912 = vunpack.c.l.b16 %v4191
        %v4913 = vunpack.c.l.b16 %v4192
        %v4914 = vunpack.c.l.b16 %v4193
        %v4915 = vunpack.c.l.b16 %v4194
        %v4916 = vunpack.c.l.b16 %v4195
        %v4917 = vunpack.c.l.b16 %v4196
        %v4918 = vunpack.c.l.b16 %v4197
        %v4919 = vunpack.c.l.b16 %v4198
        %v4920 = vunpack.c.l.b16 %v4199
        %v4921 = vpack.c.b16 %v4890, %v4889
        %v4922 = vpack.c.b16 %v4892, %v4891
        %v4923 = vpack.c.b16 %v4894, %v4893
        %v4924 = vpack.c.b16 %v4896, %v4895
        %v4925 = vpack.c.b16 %v4898, %v4897
        %v4926 = vpack.c.b16 %v4900, %v4899
        %v4927 = vpack.c.b16 %v4902, %v4901
        %v4928 = vpack.c.b16 %v4904, %v4903
        %v4929 = vpack.c.b16 %v4906, %v4905
        %v4930 = vpack.c.b16 %v4908, %v4907
        %v4931 = vpack.c.b16 %v4910, %v4909
        %v4932 = vpack.c.b16 %v4912, %v4911
        %v4933 = vpack.c.b16 %v4914, %v4913
        %v4934 = vpack.c.b16 %v4916, %v4915
        %v4935 = vpack.c.b16 %v4918, %v4917
        %v4936 = vpack.c.b16 %v4920, %v4919
        %4937 = vrot.lane.b32.xlu0 %v4921, 64
        %v4938 = vpop.permute.xlu0 %4937
        %4939 = vrot.lane.b32.xlu0 %v4922, 64
        %v4940 = vpop.permute.xlu0 %4939
        %4941 = vrot.lane.b32.xlu0 %v4923, 64
        %v4942 = vpop.permute.xlu0 %4941
        %4943 = vrot.lane.b32.xlu0 %v4924, 64
        %v4944 = vpop.permute.xlu0 %4943
        %4945 = vrot.lane.b32.xlu0 %v4925, 64
        %v4946 = vpop.permute.xlu0 %4945
        %4947 = vrot.lane.b32.xlu0 %v4926, 64
        %v4948 = vpop.permute.xlu0 %4947
        %4949 = vrot.lane.b32.xlu0 %v4927, 64
        %v4950 = vpop.permute.xlu0 %4949
        %4951 = vrot.lane.b32.xlu0 %v4928, 64
        %v4952 = vpop.permute.xlu0 %4951
        %4953 = vrot.lane.b32.xlu0 %v4929, 64
        %v4954 = vpop.permute.xlu0 %4953
        %4955 = vrot.lane.b32.xlu0 %v4930, 64
        %v4956 = vpop.permute.xlu0 %4955
        %4957 = vrot.lane.b32.xlu0 %v4931, 64
        %v4958 = vpop.permute.xlu0 %4957
        %4959 = vrot.lane.b32.xlu0 %v4932, 64
        %v4960 = vpop.permute.xlu0 %4959
        %4961 = vrot.lane.b32.xlu0 %v4933, 64
        %v4962 = vpop.permute.xlu0 %4961
        %4963 = vrot.lane.b32.xlu0 %v4934, 64
        %v4964 = vpop.permute.xlu0 %4963
        %4965 = vrot.lane.b32.xlu0 %v4935, 64
        %v4966 = vpop.permute.xlu0 %4965
        %4967 = vrot.lane.b32.xlu0 %v4936, 64
        %v4968 = vpop.permute.xlu0 %4967
        %v5001 = vunpack.c.l.b16 %v4233
        %v5002 = vunpack.c.l.b16 %v4234
        %v5003 = vunpack.c.l.b16 %v4235
        %v5004 = vunpack.c.l.b16 %v4236
        %v5005 = vunpack.c.l.b16 %v4237
        %v5006 = vunpack.c.l.b16 %v4238
        %v5007 = vunpack.c.l.b16 %v4239
        %v5008 = vunpack.c.l.b16 %v4240
        %v5009 = vunpack.c.l.b16 %v4241
        %v5010 = vunpack.c.l.b16 %v4242
        %v5011 = vunpack.c.l.b16 %v4243
        %v5012 = vunpack.c.l.b16 %v4244
        %v5013 = vunpack.c.l.b16 %v4245
        %v5014 = vunpack.c.l.b16 %v4246
        %v5015 = vunpack.c.l.b16 %v4247
        %v5016 = vunpack.c.l.b16 %v4248
        %v5017 = vunpack.c.l.b16 %v4249
        %v5018 = vunpack.c.l.b16 %v4250
        %v5019 = vunpack.c.l.b16 %v4251
        %v5020 = vunpack.c.l.b16 %v4252
        %v5021 = vunpack.c.l.b16 %v4253
        %v5022 = vunpack.c.l.b16 %v4254
        %v5023 = vunpack.c.l.b16 %v4255
        %v5024 = vunpack.c.l.b16 %v4256
        %v5025 = vunpack.c.l.b16 %v4257
        %v5026 = vunpack.c.l.b16 %v4258
        %v5027 = vunpack.c.l.b16 %v4259
        %v5028 = vunpack.c.l.b16 %v4260
        %v5029 = vunpack.c.l.b16 %v4261
        %v5030 = vunpack.c.l.b16 %v4262
        %v5031 = vunpack.c.l.b16 %v4263
        %v5032 = vunpack.c.l.b16 %v4264
        %v5033 = vpack.c.b16 %v5002, %v5001
        %v5034 = vpack.c.b16 %v5004, %v5003
        %v5035 = vpack.c.b16 %v5006, %v5005
        %v5036 = vpack.c.b16 %v5008, %v5007
        %v5037 = vpack.c.b16 %v5010, %v5009
        %v5038 = vpack.c.b16 %v5012, %v5011
        %v5039 = vpack.c.b16 %v5014, %v5013
        %v5040 = vpack.c.b16 %v5016, %v5015
        %v5041 = vpack.c.b16 %v5018, %v5017
        %v5042 = vpack.c.b16 %v5020, %v5019
        %v5043 = vpack.c.b16 %v5022, %v5021
        %v5044 = vpack.c.b16 %v5024, %v5023
        %v5045 = vpack.c.b16 %v5026, %v5025
        %v5046 = vpack.c.b16 %v5028, %v5027
        %v5047 = vpack.c.b16 %v5030, %v5029
        %v5048 = vpack.c.b16 %v5032, %v5031
        %v5081 = vunpack.c.l.b16 %v4297
        %v5082 = vunpack.c.l.b16 %v4298
        %v5083 = vunpack.c.l.b16 %v4299
        %v5084 = vunpack.c.l.b16 %v4300
        %v5085 = vunpack.c.l.b16 %v4301
        %v5086 = vunpack.c.l.b16 %v4302
        %v5087 = vunpack.c.l.b16 %v4303
        %v5088 = vunpack.c.l.b16 %v4304
        %v5089 = vunpack.c.l.b16 %v4305
        %v5090 = vunpack.c.l.b16 %v4306
        %v5091 = vunpack.c.l.b16 %v4307
        %v5092 = vunpack.c.l.b16 %v4308
        %v5093 = vunpack.c.l.b16 %v4309
        %v5094 = vunpack.c.l.b16 %v4310
        %v5095 = vunpack.c.l.b16 %v4311
        %v5096 = vunpack.c.l.b16 %v4312
        %v5097 = vunpack.c.l.b16 %v4313
        %v5098 = vunpack.c.l.b16 %v4314
        %v5099 = vunpack.c.l.b16 %v4315
        %v5100 = vunpack.c.l.b16 %v4316
        %v5101 = vunpack.c.l.b16 %v4317
        %v5102 = vunpack.c.l.b16 %v4318
        %v5103 = vunpack.c.l.b16 %v4319
        %v5104 = vunpack.c.l.b16 %v4320
        %v5105 = vunpack.c.l.b16 %v4321
        %v5106 = vunpack.c.l.b16 %v4322
        %v5107 = vunpack.c.l.b16 %v4323
        %v5108 = vunpack.c.l.b16 %v4324
        %v5109 = vunpack.c.l.b16 %v4325
        %v5110 = vunpack.c.l.b16 %v4326
        %v5111 = vunpack.c.l.b16 %v4327
        %v5112 = vunpack.c.l.b16 %v4328
        %v5113 = vpack.c.b16 %v5082, %v5081
        %v5114 = vpack.c.b16 %v5084, %v5083
        %v5115 = vpack.c.b16 %v5086, %v5085
        %v5116 = vpack.c.b16 %v5088, %v5087
        %v5117 = vpack.c.b16 %v5090, %v5089
        %v5118 = vpack.c.b16 %v5092, %v5091
        %v5119 = vpack.c.b16 %v5094, %v5093
        %v5120 = vpack.c.b16 %v5096, %v5095
        %v5121 = vpack.c.b16 %v5098, %v5097
        %v5122 = vpack.c.b16 %v5100, %v5099
        %v5123 = vpack.c.b16 %v5102, %v5101
        %v5124 = vpack.c.b16 %v5104, %v5103
        %v5125 = vpack.c.b16 %v5106, %v5105
        %v5126 = vpack.c.b16 %v5108, %v5107
        %v5127 = vpack.c.b16 %v5110, %v5109
        %v5128 = vpack.c.b16 %v5112, %v5111
        %5129 = vrot.lane.b32.xlu0 %v5113, 64
        %v5130 = vpop.permute.xlu0 %5129
        %5131 = vrot.lane.b32.xlu0 %v5114, 64
        %v5132 = vpop.permute.xlu0 %5131
        %5133 = vrot.lane.b32.xlu0 %v5115, 64
        %v5134 = vpop.permute.xlu0 %5133
        %5135 = vrot.lane.b32.xlu0 %v5116, 64
        %v5136 = vpop.permute.xlu0 %5135
        %5137 = vrot.lane.b32.xlu0 %v5117, 64
        %v5138 = vpop.permute.xlu0 %5137
        %5139 = vrot.lane.b32.xlu0 %v5118, 64
        %v5140 = vpop.permute.xlu0 %5139
        %5141 = vrot.lane.b32.xlu0 %v5119, 64
        %v5142 = vpop.permute.xlu0 %5141
        %5143 = vrot.lane.b32.xlu0 %v5120, 64
        %v5144 = vpop.permute.xlu0 %5143
        %5145 = vrot.lane.b32.xlu0 %v5121, 64
        %v5146 = vpop.permute.xlu0 %5145
        %5147 = vrot.lane.b32.xlu0 %v5122, 64
        %v5148 = vpop.permute.xlu0 %5147
        %5149 = vrot.lane.b32.xlu0 %v5123, 64
        %v5150 = vpop.permute.xlu0 %5149
        %5151 = vrot.lane.b32.xlu0 %v5124, 64
        %v5152 = vpop.permute.xlu0 %5151
        %5153 = vrot.lane.b32.xlu0 %v5125, 64
        %v5154 = vpop.permute.xlu0 %5153
        %5155 = vrot.lane.b32.xlu0 %v5126, 64
        %v5156 = vpop.permute.xlu0 %5155
        %5157 = vrot.lane.b32.xlu0 %v5127, 64
        %v5158 = vpop.permute.xlu0 %5157
        %5159 = vrot.lane.b32.xlu0 %v5128, 64
        %v5160 = vpop.permute.xlu0 %5159
        %v5193 = vunpack.c.l.b16 %v4361
        %v5194 = vunpack.c.l.b16 %v4362
        %v5195 = vunpack.c.l.b16 %v4363
        %v5196 = vunpack.c.l.b16 %v4364
        %v5197 = vunpack.c.l.b16 %v4365
        %v5198 = vunpack.c.l.b16 %v4366
        %v5199 = vunpack.c.l.b16 %v4367
        %v5200 = vunpack.c.l.b16 %v4368
        %v5201 = vunpack.c.l.b16 %v4369
        %v5202 = vunpack.c.l.b16 %v4370
        %v5203 = vunpack.c.l.b16 %v4371
        %v5204 = vunpack.c.l.b16 %v4372
        %v5205 = vunpack.c.l.b16 %v4373
        %v5206 = vunpack.c.l.b16 %v4374
        %v5207 = vunpack.c.l.b16 %v4375
        %v5208 = vunpack.c.l.b16 %v4376
        %v5209 = vunpack.c.l.b16 %v4377
        %v5210 = vunpack.c.l.b16 %v4378
        %v5211 = vunpack.c.l.b16 %v4379
        %v5212 = vunpack.c.l.b16 %v4380
        %v5213 = vunpack.c.l.b16 %v4381
        %v5214 = vunpack.c.l.b16 %v4382
        %v5215 = vunpack.c.l.b16 %v4383
        %v5216 = vunpack.c.l.b16 %v4384
        %v5217 = vunpack.c.l.b16 %v4385
        %v5218 = vunpack.c.l.b16 %v4386
        %v5219 = vunpack.c.l.b16 %v4387
        %v5220 = vunpack.c.l.b16 %v4388
        %v5221 = vunpack.c.l.b16 %v4389
        %v5222 = vunpack.c.l.b16 %v4390
        %v5223 = vunpack.c.l.b16 %v4391
        %v5224 = vunpack.c.l.b16 %v4392
        %v5225 = vpack.c.b16 %v5194, %v5193
        %v5226 = vpack.c.b16 %v5196, %v5195
        %v5227 = vpack.c.b16 %v5198, %v5197
        %v5228 = vpack.c.b16 %v5200, %v5199
        %v5229 = vpack.c.b16 %v5202, %v5201
        %v5230 = vpack.c.b16 %v5204, %v5203
        %v5231 = vpack.c.b16 %v5206, %v5205
        %v5232 = vpack.c.b16 %v5208, %v5207
        %v5233 = vpack.c.b16 %v5210, %v5209
        %v5234 = vpack.c.b16 %v5212, %v5211
        %v5235 = vpack.c.b16 %v5214, %v5213
        %v5236 = vpack.c.b16 %v5216, %v5215
        %v5237 = vpack.c.b16 %v5218, %v5217
        %v5238 = vpack.c.b16 %v5220, %v5219
        %v5239 = vpack.c.b16 %v5222, %v5221
        %v5240 = vpack.c.b16 %v5224, %v5223
        %v5243 = vsel %vm1036, %v4457, %v4554
        %v5247 = vsel %vm1036, %v4458, %v4556
        %v5251 = vsel %vm1036, %v4459, %v4558
        %v5255 = vsel %vm1036, %v4460, %v4560
        %v5259 = vsel %vm1036, %v4461, %v4562
        %v5263 = vsel %vm1036, %v4462, %v4564
        %v5267 = vsel %vm1036, %v4463, %v4566
        %v5271 = vsel %vm1036, %v4464, %v4568
        %v5275 = vsel %vm1036, %v4465, %v4570
        %v5279 = vsel %vm1036, %v4466, %v4572
        %v5283 = vsel %vm1036, %v4467, %v4574
        %v5287 = vsel %vm1036, %v4468, %v4576
        %v5291 = vsel %vm1036, %v4469, %v4578
        %v5295 = vsel %vm1036, %v4470, %v4580
        %v5299 = vsel %vm1036, %v4471, %v4582
        %v5303 = vsel %vm1036, %v4472, %v4584
        %v5307 = vsel %vm1036, %v4649, %v4746
        %v5311 = vsel %vm1036, %v4650, %v4748
        %v5315 = vsel %vm1036, %v4651, %v4750
        %v5319 = vsel %vm1036, %v4652, %v4752
        %v5323 = vsel %vm1036, %v4653, %v4754
        %v5327 = vsel %vm1036, %v4654, %v4756
        %v5331 = vsel %vm1036, %v4655, %v4758
        %v5335 = vsel %vm1036, %v4656, %v4760
        %v5339 = vsel %vm1036, %v4657, %v4762
        %v5343 = vsel %vm1036, %v4658, %v4764
        %v5347 = vsel %vm1036, %v4659, %v4766
        %v5351 = vsel %vm1036, %v4660, %v4768
        %v5355 = vsel %vm1036, %v4661, %v4770
        %v5359 = vsel %vm1036, %v4662, %v4772
        %v5363 = vsel %vm1036, %v4663, %v4774
        %v5367 = vsel %vm1036, %v4664, %v4776
        %v5371 = vsel %vm1036, %v4841, %v4938
        %v5375 = vsel %vm1036, %v4842, %v4940
        %v5379 = vsel %vm1036, %v4843, %v4942
        %v5383 = vsel %vm1036, %v4844, %v4944
        %v5387 = vsel %vm1036, %v4845, %v4946
        %v5391 = vsel %vm1036, %v4846, %v4948
        %v5395 = vsel %vm1036, %v4847, %v4950
        %v5399 = vsel %vm1036, %v4848, %v4952
        %v5403 = vsel %vm1036, %v4849, %v4954
        %v5407 = vsel %vm1036, %v4850, %v4956
        %v5411 = vsel %vm1036, %v4851, %v4958
        %v5415 = vsel %vm1036, %v4852, %v4960
        %v5419 = vsel %vm1036, %v4853, %v4962
        %v5423 = vsel %vm1036, %v4854, %v4964
        %v5427 = vsel %vm1036, %v4855, %v4966
        %v5431 = vsel %vm1036, %v4856, %v4968
        %v5435 = vsel %vm1036, %v5033, %v5130
        %v5439 = vsel %vm1036, %v5034, %v5132
        %v5443 = vsel %vm1036, %v5035, %v5134
        %v5447 = vsel %vm1036, %v5036, %v5136
        %v5451 = vsel %vm1036, %v5037, %v5138
        %v5455 = vsel %vm1036, %v5038, %v5140
        %v5459 = vsel %vm1036, %v5039, %v5142
        %v5463 = vsel %vm1036, %v5040, %v5144
        %v5467 = vsel %vm1036, %v5041, %v5146
        %v5471 = vsel %vm1036, %v5042, %v5148
        %v5475 = vsel %vm1036, %v5043, %v5150
        %v5479 = vsel %vm1036, %v5044, %v5152
        %v5483 = vsel %vm1036, %v5045, %v5154
        %v5487 = vsel %vm1036, %v5046, %v5156
        %v5491 = vsel %vm1036, %v5047, %v5158
        %v5495 = vsel %vm1036, %v5048, %v5160
        %v5498 = vsel %vm1036, %v5225, 0
        %v5501 = vsel %vm1036, %v5226, 0
        %v5504 = vsel %vm1036, %v5227, 0
        %v5507 = vsel %vm1036, %v5228, 0
        %v5510 = vsel %vm1036, %v5229, 0
        %v5513 = vsel %vm1036, %v5230, 0
        %v5516 = vsel %vm1036, %v5231, 0
        %v5519 = vsel %vm1036, %v5232, 0
        %v5522 = vsel %vm1036, %v5233, 0
        %v5525 = vsel %vm1036, %v5234, 0
        %v5528 = vsel %vm1036, %v5235, 0
        %v5531 = vsel %vm1036, %v5236, 0
        %v5534 = vsel %vm1036, %v5237, 0
        %v5537 = vsel %vm1036, %v5238, 0
        %v5540 = vsel %vm1036, %v5239, 0
        %v5543 = vsel %vm1036, %v5240, 0
        %5545 = vmatpush.bf16.msra.mxu0 %v3257
        %5546 = vmatpush.bf16.msra.mxu0 %v3256
        %5547 = vmatpush.bf16.msra.mxu0 %v3255
        %5548 = vmatpush.bf16.msra.mxu0 %v3254
        %5549 = vmatpush.bf16.msra.mxu0 %v3253
        %5550 = vmatpush.bf16.msra.mxu0 %v3252
        %5551 = vmatpush.bf16.msra.mxu0 %v3251
        %5552 = vmatpush.bf16.msra.mxu0 %v3250
        %5553 = vmatmul.bf16.gmra.mxu0 %v5243
        %v5554 = vpop.f32.mrf.mxu0
        %v5555 = vadd.f32 %v3104, %v5554
        %v5556 = vpop.f32.mrf.mxu0
        %v5557 = vadd.f32 %v3104, %v5556
        %5558 = vmatmul.bf16.gmra.mxu0 %v5247
        %v5559 = vpop.f32.mrf.mxu0
        %v5560 = vadd.f32 %v3104, %v5559
        %v5561 = vpop.f32.mrf.mxu0
        %v5562 = vadd.f32 %v3104, %v5561
        %5563 = vmatmul.bf16.gmra.mxu0 %v5251
        %v5564 = vpop.f32.mrf.mxu0
        %v5565 = vadd.f32 %v3104, %v5564
        %v5566 = vpop.f32.mrf.mxu0
        %v5567 = vadd.f32 %v3104, %v5566
        %5568 = vmatmul.bf16.gmra.mxu0 %v5255
        %v5569 = vpop.f32.mrf.mxu0
        %v5570 = vadd.f32 %v3104, %v5569
        %v5571 = vpop.f32.mrf.mxu0
        %v5572 = vadd.f32 %v3104, %v5571
        %5573 = vmatmul.bf16.gmra.mxu0 %v5259
        %v5574 = vpop.f32.mrf.mxu0
        %v5575 = vadd.f32 %v3104, %v5574
        %v5576 = vpop.f32.mrf.mxu0
        %v5577 = vadd.f32 %v3104, %v5576
        %5578 = vmatmul.bf16.gmra.mxu0 %v5263
        %v5579 = vpop.f32.mrf.mxu0
        %v5580 = vadd.f32 %v3104, %v5579
        %v5581 = vpop.f32.mrf.mxu0
        %v5582 = vadd.f32 %v3104, %v5581
        %5583 = vmatmul.bf16.gmra.mxu0 %v5267
        %v5584 = vpop.f32.mrf.mxu0
        %v5585 = vadd.f32 %v3104, %v5584
        %v5586 = vpop.f32.mrf.mxu0
        %v5587 = vadd.f32 %v3104, %v5586
        %5588 = vmatmul.bf16.gmra.mxu0 %v5271
        %v5589 = vpop.f32.mrf.mxu0
        %v5590 = vadd.f32 %v3104, %v5589
        %v5591 = vpop.f32.mrf.mxu0
        %v5592 = vadd.f32 %v3104, %v5591
        %5593 = vmatmul.bf16.gmra.mxu0 %v5275
        %v5594 = vpop.f32.mrf.mxu0
        %v5595 = vadd.f32 %v3104, %v5594
        %v5596 = vpop.f32.mrf.mxu0
        %v5597 = vadd.f32 %v3104, %v5596
        %5598 = vmatmul.bf16.gmra.mxu0 %v5279
        %v5599 = vpop.f32.mrf.mxu0
        %v5600 = vadd.f32 %v3104, %v5599
        %v5601 = vpop.f32.mrf.mxu0
        %v5602 = vadd.f32 %v3104, %v5601
        %5603 = vmatmul.bf16.gmra.mxu0 %v5283
        %v5604 = vpop.f32.mrf.mxu0
        %v5605 = vadd.f32 %v3104, %v5604
        %v5606 = vpop.f32.mrf.mxu0
        %v5607 = vadd.f32 %v3104, %v5606
        %5608 = vmatmul.bf16.gmra.mxu0 %v5287
        %v5609 = vpop.f32.mrf.mxu0
        %v5610 = vadd.f32 %v3104, %v5609
        %v5611 = vpop.f32.mrf.mxu0
        %v5612 = vadd.f32 %v3104, %v5611
        %5613 = vmatmul.bf16.gmra.mxu0 %v5291
        %v5614 = vpop.f32.mrf.mxu0
        %v5615 = vadd.f32 %v3104, %v5614
        %v5616 = vpop.f32.mrf.mxu0
        %v5617 = vadd.f32 %v3104, %v5616
        %5618 = vmatmul.bf16.gmra.mxu0 %v5295
        %v5619 = vpop.f32.mrf.mxu0
        %v5620 = vadd.f32 %v3104, %v5619
        %v5621 = vpop.f32.mrf.mxu0
        %v5622 = vadd.f32 %v3104, %v5621
        %5623 = vmatmul.bf16.gmra.mxu0 %v5299
        %v5624 = vpop.f32.mrf.mxu0
        %v5625 = vadd.f32 %v3104, %v5624
        %v5626 = vpop.f32.mrf.mxu0
        %v5627 = vadd.f32 %v3104, %v5626
        %5628 = vmatmul.bf16.gmra.mxu0 %v5303
        %v5629 = vpop.f32.mrf.mxu0
        %v5630 = vadd.f32 %v3104, %v5629
        %v5631 = vpop.f32.mrf.mxu0
        %v5632 = vadd.f32 %v3104, %v5631
        %5633 = vdwg.mxu0
        %5634 = vmatpush.bf16.msra.mxu0 %v3265
        %5635 = vmatpush.bf16.msra.mxu0 %v3264
        %5636 = vmatpush.bf16.msra.mxu0 %v3263
        %5637 = vmatpush.bf16.msra.mxu0 %v3262
        %5638 = vmatpush.bf16.msra.mxu0 %v3261
        %5639 = vmatpush.bf16.msra.mxu0 %v3260
        %5640 = vmatpush.bf16.msra.mxu0 %v3259
        %5641 = vmatpush.bf16.msra.mxu0 %v3258
        %5642 = vmatmul.bf16.gmra.mxu0 %v5307
        %v5643 = vpop.f32.mrf.mxu0
        %v5644 = vadd.f32 %v5555, %v5643
        %v5645 = vpop.f32.mrf.mxu0
        %v5646 = vadd.f32 %v5557, %v5645
        %5647 = vmatmul.bf16.gmra.mxu0 %v5311
        %v5648 = vpop.f32.mrf.mxu0
        %v5649 = vadd.f32 %v5560, %v5648
        %v5650 = vpop.f32.mrf.mxu0
        %v5651 = vadd.f32 %v5562, %v5650
        %5652 = vmatmul.bf16.gmra.mxu0 %v5315
        %v5653 = vpop.f32.mrf.mxu0
        %v5654 = vadd.f32 %v5565, %v5653
        %v5655 = vpop.f32.mrf.mxu0
        %v5656 = vadd.f32 %v5567, %v5655
        %5657 = vmatmul.bf16.gmra.mxu0 %v5319
        %v5658 = vpop.f32.mrf.mxu0
        %v5659 = vadd.f32 %v5570, %v5658
        %v5660 = vpop.f32.mrf.mxu0
        %v5661 = vadd.f32 %v5572, %v5660
        %5662 = vmatmul.bf16.gmra.mxu0 %v5323
        %v5663 = vpop.f32.mrf.mxu0
        %v5664 = vadd.f32 %v5575, %v5663
        %v5665 = vpop.f32.mrf.mxu0
        %v5666 = vadd.f32 %v5577, %v5665
        %5667 = vmatmul.bf16.gmra.mxu0 %v5327
        %v5668 = vpop.f32.mrf.mxu0
        %v5669 = vadd.f32 %v5580, %v5668
        %v5670 = vpop.f32.mrf.mxu0
        %v5671 = vadd.f32 %v5582, %v5670
        %5672 = vmatmul.bf16.gmra.mxu0 %v5331
        %v5673 = vpop.f32.mrf.mxu0
        %v5674 = vadd.f32 %v5585, %v5673
        %v5675 = vpop.f32.mrf.mxu0
        %v5676 = vadd.f32 %v5587, %v5675
        %5677 = vmatmul.bf16.gmra.mxu0 %v5335
        %v5678 = vpop.f32.mrf.mxu0
        %v5679 = vadd.f32 %v5590, %v5678
        %v5680 = vpop.f32.mrf.mxu0
        %v5681 = vadd.f32 %v5592, %v5680
        %5682 = vmatmul.bf16.gmra.mxu0 %v5339
        %v5683 = vpop.f32.mrf.mxu0
        %v5684 = vadd.f32 %v5595, %v5683
        %v5685 = vpop.f32.mrf.mxu0
        %v5686 = vadd.f32 %v5597, %v5685
        %5687 = vmatmul.bf16.gmra.mxu0 %v5343
        %v5688 = vpop.f32.mrf.mxu0
        %v5689 = vadd.f32 %v5600, %v5688
        %v5690 = vpop.f32.mrf.mxu0
        %v5691 = vadd.f32 %v5602, %v5690
        %5692 = vmatmul.bf16.gmra.mxu0 %v5347
        %v5693 = vpop.f32.mrf.mxu0
        %v5694 = vadd.f32 %v5605, %v5693
        %v5695 = vpop.f32.mrf.mxu0
        %v5696 = vadd.f32 %v5607, %v5695
        %5697 = vmatmul.bf16.gmra.mxu0 %v5351
        %v5698 = vpop.f32.mrf.mxu0
        %v5699 = vadd.f32 %v5610, %v5698
        %v5700 = vpop.f32.mrf.mxu0
        %v5701 = vadd.f32 %v5612, %v5700
        %5702 = vmatmul.bf16.gmra.mxu0 %v5355
        %v5703 = vpop.f32.mrf.mxu0
        %v5704 = vadd.f32 %v5615, %v5703
        %v5705 = vpop.f32.mrf.mxu0
        %v5706 = vadd.f32 %v5617, %v5705
        %5707 = vmatmul.bf16.gmra.mxu0 %v5359
        %v5708 = vpop.f32.mrf.mxu0
        %v5709 = vadd.f32 %v5620, %v5708
        %v5710 = vpop.f32.mrf.mxu0
        %v5711 = vadd.f32 %v5622, %v5710
        %5712 = vmatmul.bf16.gmra.mxu0 %v5363
        %v5713 = vpop.f32.mrf.mxu0
        %v5714 = vadd.f32 %v5625, %v5713
        %v5715 = vpop.f32.mrf.mxu0
        %v5716 = vadd.f32 %v5627, %v5715
        %5717 = vmatmul.bf16.gmra.mxu0 %v5367
        %v5718 = vpop.f32.mrf.mxu0
        %v5719 = vadd.f32 %v5630, %v5718
        %v5720 = vpop.f32.mrf.mxu0
        %v5721 = vadd.f32 %v5632, %v5720
        %5722 = vdwg.mxu0
        %5723 = vmatpush.bf16.msra.mxu0 %v3273
        %5724 = vmatpush.bf16.msra.mxu0 %v3272
        %5725 = vmatpush.bf16.msra.mxu0 %v3271
        %5726 = vmatpush.bf16.msra.mxu0 %v3270
        %5727 = vmatpush.bf16.msra.mxu0 %v3269
        %5728 = vmatpush.bf16.msra.mxu0 %v3268
        %5729 = vmatpush.bf16.msra.mxu0 %v3267
        %5730 = vmatpush.bf16.msra.mxu0 %v3266
        %5731 = vmatmul.bf16.gmra.mxu0 %v5371
        %v5732 = vpop.f32.mrf.mxu0
        %v5733 = vadd.f32 %v5644, %v5732
        %v5734 = vpop.f32.mrf.mxu0
        %v5735 = vadd.f32 %v5646, %v5734
        %5736 = vmatmul.bf16.gmra.mxu0 %v5375
        %v5737 = vpop.f32.mrf.mxu0
        %v5738 = vadd.f32 %v5649, %v5737
        %v5739 = vpop.f32.mrf.mxu0
        %v5740 = vadd.f32 %v5651, %v5739
        %5741 = vmatmul.bf16.gmra.mxu0 %v5379
        %v5742 = vpop.f32.mrf.mxu0
        %v5743 = vadd.f32 %v5654, %v5742
        %v5744 = vpop.f32.mrf.mxu0
        %v5745 = vadd.f32 %v5656, %v5744
        %5746 = vmatmul.bf16.gmra.mxu0 %v5383
        %v5747 = vpop.f32.mrf.mxu0
        %v5748 = vadd.f32 %v5659, %v5747
        %v5749 = vpop.f32.mrf.mxu0
        %v5750 = vadd.f32 %v5661, %v5749
        %5751 = vmatmul.bf16.gmra.mxu0 %v5387
        %v5752 = vpop.f32.mrf.mxu0
        %v5753 = vadd.f32 %v5664, %v5752
        %v5754 = vpop.f32.mrf.mxu0
        %v5755 = vadd.f32 %v5666, %v5754
        %5756 = vmatmul.bf16.gmra.mxu0 %v5391
        %v5757 = vpop.f32.mrf.mxu0
        %v5758 = vadd.f32 %v5669, %v5757
        %v5759 = vpop.f32.mrf.mxu0
        %v5760 = vadd.f32 %v5671, %v5759
        %5761 = vmatmul.bf16.gmra.mxu0 %v5395
        %v5762 = vpop.f32.mrf.mxu0
        %v5763 = vadd.f32 %v5674, %v5762
        %v5764 = vpop.f32.mrf.mxu0
        %v5765 = vadd.f32 %v5676, %v5764
        %5766 = vmatmul.bf16.gmra.mxu0 %v5399
        %v5767 = vpop.f32.mrf.mxu0
        %v5768 = vadd.f32 %v5679, %v5767
        %v5769 = vpop.f32.mrf.mxu0
        %v5770 = vadd.f32 %v5681, %v5769
        %5771 = vmatmul.bf16.gmra.mxu0 %v5403
        %v5772 = vpop.f32.mrf.mxu0
        %v5773 = vadd.f32 %v5684, %v5772
        %v5774 = vpop.f32.mrf.mxu0
        %v5775 = vadd.f32 %v5686, %v5774
        %5776 = vmatmul.bf16.gmra.mxu0 %v5407
        %v5777 = vpop.f32.mrf.mxu0
        %v5778 = vadd.f32 %v5689, %v5777
        %v5779 = vpop.f32.mrf.mxu0
        %v5780 = vadd.f32 %v5691, %v5779
        %5781 = vmatmul.bf16.gmra.mxu0 %v5411
        %v5782 = vpop.f32.mrf.mxu0
        %v5783 = vadd.f32 %v5694, %v5782
        %v5784 = vpop.f32.mrf.mxu0
        %v5785 = vadd.f32 %v5696, %v5784
        %5786 = vmatmul.bf16.gmra.mxu0 %v5415
        %v5787 = vpop.f32.mrf.mxu0
        %v5788 = vadd.f32 %v5699, %v5787
        %v5789 = vpop.f32.mrf.mxu0
        %v5790 = vadd.f32 %v5701, %v5789
        %5791 = vmatmul.bf16.gmra.mxu0 %v5419
        %v5792 = vpop.f32.mrf.mxu0
        %v5793 = vadd.f32 %v5704, %v5792
        %v5794 = vpop.f32.mrf.mxu0
        %v5795 = vadd.f32 %v5706, %v5794
        %5796 = vmatmul.bf16.gmra.mxu0 %v5423
        %v5797 = vpop.f32.mrf.mxu0
        %v5798 = vadd.f32 %v5709, %v5797
        %v5799 = vpop.f32.mrf.mxu0
        %v5800 = vadd.f32 %v5711, %v5799
        %5801 = vmatmul.bf16.gmra.mxu0 %v5427
        %v5802 = vpop.f32.mrf.mxu0
        %v5803 = vadd.f32 %v5714, %v5802
        %v5804 = vpop.f32.mrf.mxu0
        %v5805 = vadd.f32 %v5716, %v5804
        %5806 = vmatmul.bf16.gmra.mxu0 %v5431
        %v5807 = vpop.f32.mrf.mxu0
        %v5808 = vadd.f32 %v5719, %v5807
        %v5809 = vpop.f32.mrf.mxu0
        %v5810 = vadd.f32 %v5721, %v5809
        %5811 = vdwg.mxu0
        %5812 = vmatpush.bf16.msra.mxu0 %v3281
        %5813 = vmatpush.bf16.msra.mxu0 %v3280
        %5814 = vmatpush.bf16.msra.mxu0 %v3279
        %5815 = vmatpush.bf16.msra.mxu0 %v3278
        %5816 = vmatpush.bf16.msra.mxu0 %v3277
        %5817 = vmatpush.bf16.msra.mxu0 %v3276
        %5818 = vmatpush.bf16.msra.mxu0 %v3275
        %5819 = vmatpush.bf16.msra.mxu0 %v3274
        %5820 = vmatmul.bf16.gmra.mxu0 %v5435
        %v5821 = vpop.f32.mrf.mxu0
        %v5822 = vadd.f32 %v5733, %v5821
        %v5823 = vpop.f32.mrf.mxu0
        %v5824 = vadd.f32 %v5735, %v5823
        %5825 = vmatmul.bf16.gmra.mxu0 %v5439
        %v5826 = vpop.f32.mrf.mxu0
        %v5827 = vadd.f32 %v5738, %v5826
        %v5828 = vpop.f32.mrf.mxu0
        %v5829 = vadd.f32 %v5740, %v5828
        %5830 = vmatmul.bf16.gmra.mxu0 %v5443
        %v5831 = vpop.f32.mrf.mxu0
        %v5832 = vadd.f32 %v5743, %v5831
        %v5833 = vpop.f32.mrf.mxu0
        %v5834 = vadd.f32 %v5745, %v5833
        %5835 = vmatmul.bf16.gmra.mxu0 %v5447
        %v5836 = vpop.f32.mrf.mxu0
        %v5837 = vadd.f32 %v5748, %v5836
        %v5838 = vpop.f32.mrf.mxu0
        %v5839 = vadd.f32 %v5750, %v5838
        %5840 = vmatmul.bf16.gmra.mxu0 %v5451
        %v5841 = vpop.f32.mrf.mxu0
        %v5842 = vadd.f32 %v5753, %v5841
        %v5843 = vpop.f32.mrf.mxu0
        %v5844 = vadd.f32 %v5755, %v5843
        %5845 = vmatmul.bf16.gmra.mxu0 %v5455
        %v5846 = vpop.f32.mrf.mxu0
        %v5847 = vadd.f32 %v5758, %v5846
        %v5848 = vpop.f32.mrf.mxu0
        %v5849 = vadd.f32 %v5760, %v5848
        %5850 = vmatmul.bf16.gmra.mxu0 %v5459
        %v5851 = vpop.f32.mrf.mxu0
        %v5852 = vadd.f32 %v5763, %v5851
        %v5853 = vpop.f32.mrf.mxu0
        %v5854 = vadd.f32 %v5765, %v5853
        %5855 = vmatmul.bf16.gmra.mxu0 %v5463
        %v5856 = vpop.f32.mrf.mxu0
        %v5857 = vadd.f32 %v5768, %v5856
        %v5858 = vpop.f32.mrf.mxu0
        %v5859 = vadd.f32 %v5770, %v5858
        %5860 = vmatmul.bf16.gmra.mxu0 %v5467
        %v5861 = vpop.f32.mrf.mxu0
        %v5862 = vadd.f32 %v5773, %v5861
        %v5863 = vpop.f32.mrf.mxu0
        %v5864 = vadd.f32 %v5775, %v5863
        %5865 = vmatmul.bf16.gmra.mxu0 %v5471
        %v5866 = vpop.f32.mrf.mxu0
        %v5867 = vadd.f32 %v5778, %v5866
        %v5868 = vpop.f32.mrf.mxu0
        %v5869 = vadd.f32 %v5780, %v5868
        %5870 = vmatmul.bf16.gmra.mxu0 %v5475
        %v5871 = vpop.f32.mrf.mxu0
        %v5872 = vadd.f32 %v5783, %v5871
        %v5873 = vpop.f32.mrf.mxu0
        %v5874 = vadd.f32 %v5785, %v5873
        %5875 = vmatmul.bf16.gmra.mxu0 %v5479
        %v5876 = vpop.f32.mrf.mxu0
        %v5877 = vadd.f32 %v5788, %v5876
        %v5878 = vpop.f32.mrf.mxu0
        %v5879 = vadd.f32 %v5790, %v5878
        %5880 = vmatmul.bf16.gmra.mxu0 %v5483
        %v5881 = vpop.f32.mrf.mxu0
        %v5882 = vadd.f32 %v5793, %v5881
        %v5883 = vpop.f32.mrf.mxu0
        %v5884 = vadd.f32 %v5795, %v5883
        %5885 = vmatmul.bf16.gmra.mxu0 %v5487
        %v5886 = vpop.f32.mrf.mxu0
        %v5887 = vadd.f32 %v5798, %v5886
        %v5888 = vpop.f32.mrf.mxu0
        %v5889 = vadd.f32 %v5800, %v5888
        %5890 = vmatmul.bf16.gmra.mxu0 %v5491
        %v5891 = vpop.f32.mrf.mxu0
        %v5892 = vadd.f32 %v5803, %v5891
        %v5893 = vpop.f32.mrf.mxu0
        %v5894 = vadd.f32 %v5805, %v5893
        %5895 = vmatmul.bf16.gmra.mxu0 %v5495
        %v5896 = vpop.f32.mrf.mxu0
        %v5897 = vadd.f32 %v5808, %v5896
        %v5898 = vpop.f32.mrf.mxu0
        %v5899 = vadd.f32 %v5810, %v5898
        %5900 = vdwg.mxu0
        %5901 = vmatpush.bf16.msra.mxu0 0
        %5902 = vmatpush.bf16.msra.mxu0 0
        %5903 = vmatpush.bf16.msra.mxu0 0
        %5904 = vmatpush.bf16.msra.mxu0 0
        %5905 = vmatpush.bf16.msra.mxu0 %v3285
        %5906 = vmatpush.bf16.msra.mxu0 %v3284
        %5907 = vmatpush.bf16.msra.mxu0 %v3283
        %5908 = vmatpush.bf16.msra.mxu0 %v3282
        %5909 = vmatmul.bf16.gmra.mxu0 %v5498
        %v5910 = vpop.f32.mrf.mxu0
        %v5911 = vadd.f32 %v5822, %v5910
        %v5912 = vpop.f32.mrf.mxu0
        %v5913 = vadd.f32 %v5824, %v5912
        %5914 = vmatmul.bf16.gmra.mxu0 %v5501
        %v5915 = vpop.f32.mrf.mxu0
        %v5916 = vadd.f32 %v5827, %v5915
        %v5917 = vpop.f32.mrf.mxu0
        %v5918 = vadd.f32 %v5829, %v5917
        %5919 = vmatmul.bf16.gmra.mxu0 %v5504
        %v5920 = vpop.f32.mrf.mxu0
        %v5921 = vadd.f32 %v5832, %v5920
        %v5922 = vpop.f32.mrf.mxu0
        %v5923 = vadd.f32 %v5834, %v5922
        %5924 = vmatmul.bf16.gmra.mxu0 %v5507
        %v5925 = vpop.f32.mrf.mxu0
        %v5926 = vadd.f32 %v5837, %v5925
        %v5927 = vpop.f32.mrf.mxu0
        %v5928 = vadd.f32 %v5839, %v5927
        %5929 = vmatmul.bf16.gmra.mxu0 %v5510
        %v5930 = vpop.f32.mrf.mxu0
        %v5931 = vadd.f32 %v5842, %v5930
        %v5932 = vpop.f32.mrf.mxu0
        %v5933 = vadd.f32 %v5844, %v5932
        %5934 = vmatmul.bf16.gmra.mxu0 %v5513
        %v5935 = vpop.f32.mrf.mxu0
        %v5936 = vadd.f32 %v5847, %v5935
        %v5937 = vpop.f32.mrf.mxu0
        %v5938 = vadd.f32 %v5849, %v5937
        %5939 = vmatmul.bf16.gmra.mxu0 %v5516
        %v5940 = vpop.f32.mrf.mxu0
        %v5941 = vadd.f32 %v5852, %v5940
        %v5942 = vpop.f32.mrf.mxu0
        %v5943 = vadd.f32 %v5854, %v5942
        %5944 = vmatmul.bf16.gmra.mxu0 %v5519
        %v5945 = vpop.f32.mrf.mxu0
        %v5946 = vadd.f32 %v5857, %v5945
        %v5947 = vpop.f32.mrf.mxu0
        %v5948 = vadd.f32 %v5859, %v5947
        %5949 = vmatmul.bf16.gmra.mxu0 %v5522
        %v5950 = vpop.f32.mrf.mxu0
        %v5951 = vadd.f32 %v5862, %v5950
        %v5952 = vpop.f32.mrf.mxu0
        %v5953 = vadd.f32 %v5864, %v5952
        %5954 = vmatmul.bf16.gmra.mxu0 %v5525
        %v5955 = vpop.f32.mrf.mxu0
        %v5956 = vadd.f32 %v5867, %v5955
        %v5957 = vpop.f32.mrf.mxu0
        %v5958 = vadd.f32 %v5869, %v5957
        %5959 = vmatmul.bf16.gmra.mxu0 %v5528
        %v5960 = vpop.f32.mrf.mxu0
        %v5961 = vadd.f32 %v5872, %v5960
        %v5962 = vpop.f32.mrf.mxu0
        %v5963 = vadd.f32 %v5874, %v5962
        %5964 = vmatmul.bf16.gmra.mxu0 %v5531
        %v5965 = vpop.f32.mrf.mxu0
        %v5966 = vadd.f32 %v5877, %v5965
        %v5967 = vpop.f32.mrf.mxu0
        %v5968 = vadd.f32 %v5879, %v5967
        %5969 = vmatmul.bf16.gmra.mxu0 %v5534
        %v5970 = vpop.f32.mrf.mxu0
        %v5971 = vadd.f32 %v5882, %v5970
        %v5972 = vpop.f32.mrf.mxu0
        %v5973 = vadd.f32 %v5884, %v5972
        %5974 = vmatmul.bf16.gmra.mxu0 %v5537
        %v5975 = vpop.f32.mrf.mxu0
        %v5976 = vadd.f32 %v5887, %v5975
        %v5977 = vpop.f32.mrf.mxu0
        %v5978 = vadd.f32 %v5889, %v5977
        %5979 = vmatmul.bf16.gmra.mxu0 %v5540
        %v5980 = vpop.f32.mrf.mxu0
        %v5981 = vadd.f32 %v5892, %v5980
        %v5982 = vpop.f32.mrf.mxu0
        %v5983 = vadd.f32 %v5894, %v5982
        %5984 = vmatmul.bf16.gmra.mxu0 %v5543
        %v5985 = vpop.f32.mrf.mxu0
        %v5986 = vadd.f32 %v5897, %v5985
        %v5987 = vpop.f32.mrf.mxu0
        %v5988 = vadd.f32 %v5899, %v5987
        %5989 = vdwg.mxu0
        %v5990 = vmax.f32 %v3736, 0.0
        %v5991 = vmax.f32 %v3738, 0.0
        %v5992 = vmax.f32 %v3741, 0.0
        %v5993 = vmax.f32 %v3743, 0.0
        %v5994 = vmax.f32 %v3746, 0.0
        %v5995 = vmax.f32 %v3748, 0.0
        %v5996 = vmax.f32 %v3751, 0.0
        %v5997 = vmax.f32 %v3753, 0.0
        %v5998 = vmax.f32 %v3756, 0.0
        %v5999 = vmax.f32 %v3758, 0.0
        %v6000 = vmax.f32 %v3761, 0.0
        %v6001 = vmax.f32 %v3763, 0.0
        %v6002 = vmax.f32 %v3766, 0.0
        %v6003 = vmax.f32 %v3768, 0.0
        %v6004 = vmax.f32 %v3771, 0.0
        %v6005 = vmax.f32 %v3773, 0.0
        %v6006 = vmax.f32 %v3776, 0.0
        %v6007 = vmax.f32 %v3778, 0.0
        %v6008 = vmax.f32 %v3781, 0.0
        %v6009 = vmax.f32 %v3783, 0.0
        %v6010 = vmax.f32 %v3786, 0.0
        %v6011 = vmax.f32 %v3788, 0.0
        %v6012 = vmax.f32 %v3791, 0.0
        %v6013 = vmax.f32 %v3793, 0.0
        %v6014 = vmax.f32 %v3796, 0.0
        %v6015 = vmax.f32 %v3798, 0.0
        %v6016 = vmax.f32 %v3801, 0.0
        %v6017 = vmax.f32 %v3803, 0.0
        %v6018 = vmax.f32 %v3806, 0.0
        %v6019 = vmax.f32 %v3808, 0.0
        %v6020 = vmax.f32 %v3811, 0.0
        %v6021 = vmax.f32 %v3813, 0.0
        %v6022 = vmax.f32 %v5911, 0.0
        %v6023 = vmax.f32 %v5913, 0.0
        %v6024 = vmax.f32 %v5916, 0.0
        %v6025 = vmax.f32 %v5918, 0.0
        %v6026 = vmax.f32 %v5921, 0.0
        %v6027 = vmax.f32 %v5923, 0.0
        %v6028 = vmax.f32 %v5926, 0.0
        %v6029 = vmax.f32 %v5928, 0.0
        %v6030 = vmax.f32 %v5931, 0.0
        %v6031 = vmax.f32 %v5933, 0.0
        %v6032 = vmax.f32 %v5936, 0.0
        %v6033 = vmax.f32 %v5938, 0.0
        %v6034 = vmax.f32 %v5941, 0.0
        %v6035 = vmax.f32 %v5943, 0.0
        %v6036 = vmax.f32 %v5946, 0.0
        %v6037 = vmax.f32 %v5948, 0.0
        %v6038 = vmax.f32 %v5951, 0.0
        %v6039 = vmax.f32 %v5953, 0.0
        %v6040 = vmax.f32 %v5956, 0.0
        %v6041 = vmax.f32 %v5958, 0.0
        %v6042 = vmax.f32 %v5961, 0.0
        %v6043 = vmax.f32 %v5963, 0.0
        %v6044 = vmax.f32 %v5966, 0.0
        %v6045 = vmax.f32 %v5968, 0.0
        %v6046 = vmax.f32 %v5971, 0.0
        %v6047 = vmax.f32 %v5973, 0.0
        %v6048 = vmax.f32 %v5976, 0.0
        %v6049 = vmax.f32 %v5978, 0.0
        %v6050 = vmax.f32 %v5981, 0.0
        %v6051 = vmax.f32 %v5983, 0.0
        %v6052 = vmax.f32 %v5986, 0.0
        %v6053 = vmax.f32 %v5988, 0.0
        %v6054 = vsub.f32 %v5990, %v6022
        %v6055 = vsub.f32 %v5991, %v6023
        %v6056 = vsub.f32 %v5992, %v6024
        %v6057 = vsub.f32 %v5993, %v6025
        %v6058 = vsub.f32 %v5994, %v6026
        %v6059 = vsub.f32 %v5995, %v6027
        %v6060 = vsub.f32 %v5996, %v6028
        %v6061 = vsub.f32 %v5997, %v6029
        %v6062 = vsub.f32 %v5998, %v6030
        %v6063 = vsub.f32 %v5999, %v6031
        %v6064 = vsub.f32 %v6000, %v6032
        %v6065 = vsub.f32 %v6001, %v6033
        %v6066 = vsub.f32 %v6002, %v6034
        %v6067 = vsub.f32 %v6003, %v6035
        %v6068 = vsub.f32 %v6004, %v6036
        %v6069 = vsub.f32 %v6005, %v6037
        %v6070 = vsub.f32 %v6006, %v6038
        %v6071 = vsub.f32 %v6007, %v6039
        %v6072 = vsub.f32 %v6008, %v6040
        %v6073 = vsub.f32 %v6009, %v6041
        %v6074 = vsub.f32 %v6010, %v6042
        %v6075 = vsub.f32 %v6011, %v6043
        %v6076 = vsub.f32 %v6012, %v6044
        %v6077 = vsub.f32 %v6013, %v6045
        %v6078 = vsub.f32 %v6014, %v6046
        %v6079 = vsub.f32 %v6015, %v6047
        %v6080 = vsub.f32 %v6016, %v6048
        %v6081 = vsub.f32 %v6017, %v6049
        %v6082 = vsub.f32 %v6018, %v6050
        %v6083 = vsub.f32 %v6019, %v6051
        %v6084 = vsub.f32 %v6020, %v6052
        %v6085 = vsub.f32 %v6021, %v6053
        %v6086 = vmul.f32 %v6054, %v6054
        %v6087 = vmul.f32 %v6055, %v6055
        %v6088 = vmul.f32 %v6056, %v6056
        %v6089 = vmul.f32 %v6057, %v6057
        %v6090 = vmul.f32 %v6058, %v6058
        %v6091 = vmul.f32 %v6059, %v6059
        %v6092 = vmul.f32 %v6060, %v6060
        %v6093 = vmul.f32 %v6061, %v6061
        %v6094 = vmul.f32 %v6062, %v6062
        %v6095 = vmul.f32 %v6063, %v6063
        %v6096 = vmul.f32 %v6064, %v6064
        %v6097 = vmul.f32 %v6065, %v6065
        %v6098 = vmul.f32 %v6066, %v6066
        %v6099 = vmul.f32 %v6067, %v6067
        %v6100 = vmul.f32 %v6068, %v6068
        %v6101 = vmul.f32 %v6069, %v6069
        %v6102 = vmul.f32 %v6070, %v6070
        %v6103 = vmul.f32 %v6071, %v6071
        %v6104 = vmul.f32 %v6072, %v6072
        %v6105 = vmul.f32 %v6073, %v6073
        %v6106 = vmul.f32 %v6074, %v6074
        %v6107 = vmul.f32 %v6075, %v6075
        %v6108 = vmul.f32 %v6076, %v6076
        %v6109 = vmul.f32 %v6077, %v6077
        %v6110 = vmul.f32 %v6078, %v6078
        %v6111 = vmul.f32 %v6079, %v6079
        %v6112 = vmul.f32 %v6080, %v6080
        %v6113 = vmul.f32 %v6081, %v6081
        %v6114 = vmul.f32 %v6082, %v6082
        %v6115 = vmul.f32 %v6083, %v6083
        %v6116 = vmul.f32 %v6084, %v6084
        %v6117 = vmul.f32 %v6085, %v6085
        %v6118 = vsel %vm1036, %v6086, 0.0
        %v6119 = vsel %vm1036, %v6087, 0.0
        %v6120 = vadd.f32 %v6118, %v6119
        %v6121 = vsel %vm1036, %v6088, 0.0
        %v6122 = vadd.f32 %v6120, %v6121
        %v6123 = vsel %vm1036, %v6089, 0.0
        %v6124 = vadd.f32 %v6122, %v6123
        %v6125 = vsel %vm1036, %v6090, 0.0
        %v6126 = vadd.f32 %v6124, %v6125
        %v6127 = vsel %vm1036, %v6091, 0.0
        %v6128 = vadd.f32 %v6126, %v6127
        %v6129 = vsel %vm1036, %v6092, 0.0
        %v6130 = vadd.f32 %v6128, %v6129
        %v6131 = vsel %vm1036, %v6093, 0.0
        %v6132 = vadd.f32 %v6130, %v6131
        %v6133 = vsel %vm1036, %v6094, 0.0
        %v6134 = vadd.f32 %v6132, %v6133
        %v6135 = vsel %vm1036, %v6095, 0.0
        %v6136 = vadd.f32 %v6134, %v6135
        %v6137 = vsel %vm1036, %v6096, 0.0
        %v6138 = vadd.f32 %v6136, %v6137
        %v6139 = vsel %vm1036, %v6097, 0.0
        %v6140 = vadd.f32 %v6138, %v6139
        %v6141 = vsel %vm1036, %v6098, 0.0
        %v6142 = vadd.f32 %v6140, %v6141
        %v6143 = vsel %vm1036, %v6099, 0.0
        %v6144 = vadd.f32 %v6142, %v6143
        %v6145 = vsel %vm1036, %v6100, 0.0
        %v6146 = vadd.f32 %v6144, %v6145
        %v6147 = vsel %vm1036, %v6101, 0.0
        %v6148 = vadd.f32 %v6146, %v6147
        %v6149 = vsel %vm1036, %v6102, 0.0
        %v6150 = vadd.f32 %v6148, %v6149
        %v6151 = vsel %vm1036, %v6103, 0.0
        %v6152 = vadd.f32 %v6150, %v6151
        %v6153 = vsel %vm1036, %v6104, 0.0
        %v6154 = vadd.f32 %v6152, %v6153
        %v6155 = vsel %vm1036, %v6105, 0.0
        %v6156 = vadd.f32 %v6154, %v6155
        %v6157 = vsel %vm1036, %v6106, 0.0
        %v6158 = vadd.f32 %v6156, %v6157
        %v6159 = vsel %vm1036, %v6107, 0.0
        %v6160 = vadd.f32 %v6158, %v6159
        %v6161 = vsel %vm1036, %v6108, 0.0
        %v6162 = vadd.f32 %v6160, %v6161
        %v6163 = vsel %vm1036, %v6109, 0.0
        %v6164 = vadd.f32 %v6162, %v6163
        %v6165 = vsel %vm1036, %v6110, 0.0
        %v6166 = vadd.f32 %v6164, %v6165
        %v6167 = vsel %vm1036, %v6111, 0.0
        %v6168 = vadd.f32 %v6166, %v6167
        %v6169 = vsel %vm1036, %v6112, 0.0
        %v6170 = vadd.f32 %v6168, %v6169
        %v6171 = vsel %vm1036, %v6113, 0.0
        %v6172 = vadd.f32 %v6170, %v6171
        %v6173 = vsel %vm1036, %v6114, 0.0
        %v6174 = vadd.f32 %v6172, %v6173
        %v6175 = vsel %vm1036, %v6115, 0.0
        %v6176 = vadd.f32 %v6174, %v6175
        %v6177 = vsel %vm1036, %v6116, 0.0
        %v6178 = vadd.f32 %v6176, %v6177
        %v6179 = vsel %vm1036, %v6117, 0.0
        %v6180 = vadd.f32 %v6178, %v6179
        %6181 = vadd.xlane.f32.xlu0 %v6180
        %v6182 = vpop.xlane.xlu0 %6181
        %v6183 = vrot.slane %v6182, 4
        %v6184 = vadd.f32 %v6182, %v6183
        %v6185 = vrot.slane %v6184, 2
        %v6186 = vadd.f32 %v6184, %v6185
        %v6187 = vrot.slane %v6186, 1
        %v6188 = vadd.f32 %v6186, %v6187
        %s6189 = vtos %v6188
        %s6190 = smul.f32 %s6189, 3.0517578e-05
        %s6191 = sadd.f32 %s1110, %s6190
        %v6192 = vld [vmem:[%s301] sm:$0x1]
        %v6193 = vstv %s6191
        %v6194 = vadd.f32 %v6192, %v6193
        %vm6195 = vcmask 0
        %6196 = vst.msk [vmem:[%s301] sm:$0x1] %vm6195, %v6194
        %p6197 = scmp.lt.s32.totalorder %s24, 1
        %s6198 = scalar_select %p6197, %s24, 1
        %s6199 = scalar_lea.vmem %s6, %s6198
        // Predicated region
        $region57: #{tpu_custom_call.1} parent=43 // pred_check
          %p6200 = pneg %p186
        $region58: #{tpu_custom_call.1} parent=43 // pred_check_branch
          %6202 = sbr.rel (%p6200) target = $region60
        $region59: #{tpu_custom_call.1} parent=43 // pred_region
          _
        $region60: #{tpu_custom_call.1} parent=43 // pred_fallthru
          _
      $region44: #{tpu_custom_call.1} parent=5 // pred_fallthru
        _
      %p6203 = scmp.le.s32.totalorder 2, %s15
      // Predicated region
      $region61: #{tpu_custom_call.1} parent=5 // pred_check
        %p6204 = pneg %p6203
      $region62: #{tpu_custom_call.1} parent=5 // pred_check_branch
        %6206 = sbr.rel (%p6204) target = $region64
      $region63: #{tpu_custom_call.1} parent=5 // pred_region
        %s6207 = ssub.s32 %s15, 2
        // Predicated region
        $region65: #{tpu_custom_call.1} parent=63 // pred_check
          %p6208 = pneg %p192
        $region66: #{tpu_custom_call.1} parent=63 // pred_check_branch
          %6210 = sbr.rel (%p6208) target = $region68
        $region67: #{tpu_custom_call.1} parent=63 // pred_region
          %p6211 = scmp.lt.s32.totalorder %s26, 1
          %s6212 = scalar_select %p6211, %s26, 1
          %s6213 = scalar_lea.vmem %s6, %s6212
        $region68: #{tpu_custom_call.1} parent=63 // pred_fallthru
          _
      $region64: #{tpu_custom_call.1} parent=5 // pred_fallthru
        _
    $region6: #{tpu_custom_call.1} parent=1 // loop_footer
      %s19 = sadd.s32 1, %s15
    $region7: #{tpu_custom_call.1} parent=1 // loop_footer_branch
      %14 = sbr.rel target = $region3
    $region8: #{tpu_custom_call.1} parent=1 // loop_exit
      _
    %6214 = vsyncpa [#allocation5], 1
    %s6215 = scalar_lea.sflag [#allocation5], 1
    %6216 = vsyncpa %s6215, 1

</llo_original>
